<compile_context>
chip_gen: v7x
topology: tpu7x:2x2x1
jax: 0.10.0
libtpu: 0.0.40
codegen_flags: <defaults>
</compile_context>

<pallas_src>
import numpy as np
import jax
import jax.numpy as jnp
from jax.experimental import pallas as pl
from jax.experimental.pallas import tpu as pltpu


LANE = 128


def _round_up(x, m):
    return ((x + m - 1) // m) * m


# --------------------------------------------------------------------------
# Setup glue: express ConvTranspose2d (stride s, padding 0, output_padding op)
# as a dense matrix acting on NCHW-flattened vectors.  Exact, numpy only.
# --------------------------------------------------------------------------
def convtranspose_as_matrix(w, b, in_hw, stride, out_pad):
    """w: (C_in, C_out, KH, KW) PyTorch ConvTranspose2d weight, b: (C_out,)."""
    w_np = np.asarray(w, dtype=np.float32)
    b_np = np.asarray(b, dtype=np.float32)
    C_in, C_out, KH, KW = w_np.shape
    H_in, W_in = in_hw
    H_out = (H_in - 1) * stride + KH + out_pad
    W_out = (W_in - 1) * stride + KW + out_pad
    M = np.zeros((C_in, H_in, W_in, C_out, H_out, W_out), dtype=np.float32)
    for ih in range(H_in):
        for iw in range(W_in):
            for kh in range(KH):
                for kw in range(KW):
                    M[:, ih, iw, :, ih * stride + kh, iw * stride + kw] += w_np[:, :, kh, kw]
    M = M.reshape(C_in * H_in * W_in, C_out * H_out * W_out)
    b_flat = np.broadcast_to(b_np[:, None, None], (C_out, H_out, W_out)).reshape(1, -1)
    return M, np.ascontiguousarray(b_flat), (H_out, W_out)


# --------------------------------------------------------------------------
# Pallas kernel: fused 4-layer decoder (bf16 matmul + f32 bias/relu, sigmoid).
# --------------------------------------------------------------------------
def decoder_kernel(z_ref,
                   m1_ref, b1_ref, m2_ref, b2_ref,
                   m3_ref, b3_ref, m4_ref, b4_ref,
                   out_ref):
    def mm(h, w_ref):
        # bf16 MXU operands, f32 accumulation.
        return jnp.dot(h.astype(jnp.bfloat16), w_ref[...],
                       preferred_element_type=jnp.float32)

    h = z_ref[...]                                            # (TN, 16)  f32
    h = jnp.maximum(mm(h, m1_ref) + b1_ref[...], 0.0)         # (TN, 128)
    h = jnp.maximum(mm(h, m2_ref) + b2_ref[...], 0.0)         # (TN, 512)
    h = jnp.maximum(mm(h, m3_ref) + b3_ref[...], 0.0)         # (TN, 896)
    logits = mm(h, m4_ref) + b4_ref[...]                      # (TN, 896)
    # sigmoid: exp on the EUP; approx reciprocal also on the EUP (VPU stays free).
    out_ref[...] = pl.reciprocal(1.0 + jnp.exp(-logits), approx=True)


# --------------------------------------------------------------------------
# Wrapper: build padded dense weights, batch-tile, call the kernel.
# --------------------------------------------------------------------------
def decoder_forward(z, layer_params, hid_dim=16, row_block=256):
    """z: (N, hid_dim) float32.  layer_params: list of (w, b, stride, out_pad)."""
    N = z.shape[0]
    z = z.reshape(N, hid_dim).astype(jnp.float32)   # == z.view(-1, hid_dim, 1, 1) flattened

    # Exact dense lowering of each ConvTranspose2d.
    hw = (1, 1)
    raw = []
    for (w, b, stride, out_pad) in layer_params:
        M, bf, hw = convtranspose_as_matrix(w, b, hw, stride, out_pad)
        raw.append((M, bf))
    out_c = layer_params[-1][0].shape[1]
    out_flat = out_c * hw[0] * hw[1]

    # Zero-pad every layer width to a lane multiple; weights -> bf16, biases -> f32.
    mats, biases = [], []
    in_dim = hid_dim
    for (M, bf) in raw:
        k, n = M.shape
        n_pad = _round_up(n, LANE)
        M_pad = np.zeros((in_dim, n_pad), dtype=np.float32)
        M_pad[:k, :n] = M
        b_pad = np.zeros((1, n_pad), dtype=np.float32)
        b_pad[:, :n] = bf
        mats.append(jnp.asarray(M_pad, dtype=jnp.bfloat16))
        biases.append(jnp.asarray(b_pad, dtype=jnp.float32))
        in_dim = n_pad
    out_cols = in_dim                                  # padded width of final layer

    # Batch tiling: row-block activations; weights/biases stay VMEM-resident.
    tn = min(row_block, _round_up(N, 8))
    n_padded = _round_up(N, tn)
    if n_padded != N:
        z = jnp.pad(z, ((0, n_padded - N), (0, 0)))
    grid = (n_padded // tn,)

    z_spec = pl.BlockSpec((tn, hid_dim), lambda i: (i, 0))
    out_spec = pl.BlockSpec((tn, out_cols), lambda i: (i, 0))

    def resident(shape):                               # same block every grid step
        return pl.BlockSpec(shape, lambda i: (0, 0))

    in_specs = [z_spec]
    args = [z]
    for M, bf in zip(mats, biases):
        in_specs += [resident(M.shape), resident(bf.shape)]
        args += [M, bf]

    flops = 2 * n_padded * sum(int(M.shape[0]) * int(M.shape[1]) for M in mats)
    bytes_accessed = (sum(int(np.prod(M.shape)) * 2 for M in mats)
                      + sum(int(np.prod(b.shape)) * 4 for b in biases)
                      + n_padded * (hid_dim + out_cols) * 4)
    cost = pl.CostEstimate(flops=flops,
                           transcendentals=n_padded * out_cols,
                           bytes_accessed=bytes_accessed)

    out = pl.pallas_call(
        decoder_kernel,
        out_shape=jax.ShapeDtypeStruct((n_padded, out_cols), jnp.float32),
        grid=grid,
        in_specs=in_specs,
        out_specs=out_spec,
        compiler_params=pltpu.CompilerParams(dimension_semantics=("parallel",)),
        cost_estimate=cost,
    )(*args)

    return out[:N, :out_flat].reshape(N, out_c, hw[0], hw[1])


# --------------------------------------------------------------------------
# Pure-JAX reference (lax.conv_general_dilated with lhs_dilation == transposed conv)
# --------------------------------------------------------------------------
def convtranspose_ref(x, w, b, stride, out_pad):
    K = w.shape[2]
    w_conv = jnp.flip(w, (2, 3)).transpose(1, 0, 2, 3)  # (C_out, C_in, KH, KW)
    y = jax.lax.conv_general_dilated(
        x, w_conv, window_strides=(1, 1),
        padding=((K - 1, K - 1 + out_pad), (K - 1, K - 1 + out_pad)),
        lhs_dilation=(stride, stride),
        dimension_numbers=("NCHW", "OIHW", "NCHW"),
        precision=jax.lax.Precision.HIGHEST)
    return y + b[None, :, None, None]


def decoder_ref(z, layer_params, hid_dim=16):
    h = z.reshape(-1, hid_dim, 1, 1)
    n_layers = len(layer_params)
    for i, (w, b, stride, out_pad) in enumerate(layer_params):
        h = convtranspose_ref(h, w, b, stride, out_pad)
        h = jax.nn.relu(h) if i < n_layers - 1 else jax.nn.sigmoid(h)
    return h


# --------------------------------------------------------------------------
if __name__ == "__main__":
    hid_dim = 16
    N = 2
    key = jax.random.PRNGKey(0)
    ks = jax.random.split(key, 9)
    init = lambda k, shape: jax.random.normal(k, shape, jnp.float32) * 0.1

    # ConvTranspose2d weights: (C_in, C_out, KH, KW), as in nn.ConvTranspose2d
    w1, b1 = init(ks[0], (hid_dim, 2 * hid_dim, 2, 2)), init(ks[1], (2 * hid_dim,))
    w2, b2 = init(ks[2], (2 * hid_dim, 16, 3, 3)),      init(ks[3], (16,))
    w3, b3 = init(ks[4], (16, 6, 3, 3)),                init(ks[5], (6,))
    w4, b4 = init(ks[6], (6, 1, 5, 5)),                 init(ks[7], (1,))

    layer_params = [
        (w1, b1, 1, 0),   # ConvTranspose2d(16, 32, 2)                       1x1 -> 2x2
        (w2, b2, 2, 0),   # ConvTranspose2d(32, 16, 3, stride=2)             2x2 -> 5x5
        (w3, b3, 2, 1),   # ConvTranspose2d(16, 6, 3, stride=2, out_pad=1)   5x5 -> 12x12
        (w4, b4, 2, 1),   # ConvTranspose2d(6, 1, 5, stride=2, out_pad=1)    12x12 -> 28x28
    ]

    z = jax.random.normal(ks[8], (N, hid_dim), jnp.float32)

    out = decoder_forward(z, layer_params, hid_dim=hid_dim)
    out = jax.block_until_ready(out)
    assert out.shape == (N, 1, 28, 28), out.shape

    ref = jax.block_until_ready(decoder_ref(z, layer_params, hid_dim=hid_dim))
    # bf16-input / f32-accumulate matmuls vs. a HIGHEST-precision f32 reference.
    err = float(np.max(np.abs(np.asarray(out) - np.asarray(ref))))
    assert np.allclose(np.asarray(out), np.asarray(ref), atol=5e-3, rtol=5e-3), err

    print("KERNEL_OK")
</pallas_src>

<mosaic_0001>
module attributes {stable_mosaic.version = 11 : i64} {
  func.func @decoder_kernel(%arg0: i32, %arg1: memref<8x16xf32, #tpu.memory_space<vmem>>, %arg2: memref<16x128xbf16, #tpu.memory_space<vmem>>, %arg3: memref<1x128xf32, #tpu.memory_space<vmem>>, %arg4: memref<128x512xbf16, #tpu.memory_space<vmem>>, %arg5: memref<1x512xf32, #tpu.memory_space<vmem>>, %arg6: memref<512x896xbf16, #tpu.memory_space<vmem>>, %arg7: memref<1x896xf32, #tpu.memory_space<vmem>>, %arg8: memref<896x896xbf16, #tpu.memory_space<vmem>>, %arg9: memref<1x896xf32, #tpu.memory_space<vmem>>, %arg10: memref<8x896xf32, #tpu.memory_space<vmem>>) attributes {dimension_semantics = [#tpu.dimension_semantics<parallel>], iteration_bounds = array<i64: 1>, scalar_prefetch = 0 : i64, scratch_operands = 0 : i64, tpu.core_type = #tpu.core_type<tc>, window_params = [{transform_indices = @transform_0, window_bounds = array<i64: 8, 16>}, {pipeline_mode = #tpu.pipeline_mode<synchronous>, transform_indices = @transform_1, window_bounds = array<i64: 16, 128>}, {pipeline_mode = #tpu.pipeline_mode<synchronous>, transform_indices = @transform_2, window_bounds = array<i64: 1, 128>}, {pipeline_mode = #tpu.pipeline_mode<synchronous>, transform_indices = @transform_3, window_bounds = array<i64: 128, 512>}, {pipeline_mode = #tpu.pipeline_mode<synchronous>, transform_indices = @transform_4, window_bounds = array<i64: 1, 512>}, {pipeline_mode = #tpu.pipeline_mode<synchronous>, transform_indices = @transform_5, window_bounds = array<i64: 512, 896>}, {pipeline_mode = #tpu.pipeline_mode<synchronous>, transform_indices = @transform_6, window_bounds = array<i64: 1, 896>}, {pipeline_mode = #tpu.pipeline_mode<synchronous>, transform_indices = @transform_7, window_bounds = array<i64: 896, 896>}, {pipeline_mode = #tpu.pipeline_mode<synchronous>, transform_indices = @transform_8, window_bounds = array<i64: 1, 896>}, {transform_indices = @transform_9, window_bounds = array<i64: 8, 896>}]} {
    %c0 = arith.constant 0 : index
    %c0_0 = arith.constant 0 : index
    %0 = vector.load %arg1[%c0, %c0_0] : memref<8x16xf32, #tpu.memory_space<vmem>>, vector<8x16xf32>
    %1 = arith.truncf %0 : vector<8x16xf32> to vector<8x16xbf16>
    %c0_1 = arith.constant 0 : index
    %c0_2 = arith.constant 0 : index
    %2 = vector.load %arg2[%c0_1, %c0_2] : memref<16x128xbf16, #tpu.memory_space<vmem>>, vector<16x128xbf16>
    %cst = arith.constant dense<0.000000e+00> : vector<8x128xf32>
    %3 = tpu.matmul %1, %2, %cst {dimension_numbers = #tpu.dot_dimension_numbers<[1], [0], [0], [1], [0, 0, 1, 1], [], []>} : vector<8x16xbf16>, vector<16x128xbf16>, vector<8x128xf32> -> vector<8x128xf32>
    %c0_3 = arith.constant 0 : index
    %c0_4 = arith.constant 0 : index
    %4 = vector.load %arg3[%c0_3, %c0_4] : memref<1x128xf32, #tpu.memory_space<vmem>>, vector<1x128xf32>
    %5 = vector.broadcast %4 : vector<1x128xf32> to vector<8x128xf32>
    %6 = arith.addf %3, %5 : vector<8x128xf32>
    %cst_5 = arith.constant 0.000000e+00 : f32
    %7 = vector.broadcast %cst_5 : f32 to vector<8x128xf32>
    %8 = arith.maximumf %6, %7 : vector<8x128xf32>
    %9 = arith.truncf %8 : vector<8x128xf32> to vector<8x128xbf16>
    %c0_6 = arith.constant 0 : index
    %c0_7 = arith.constant 0 : index
    %10 = vector.load %arg4[%c0_6, %c0_7] : memref<128x512xbf16, #tpu.memory_space<vmem>>, vector<128x512xbf16>
    %cst_8 = arith.constant dense<0.000000e+00> : vector<8x512xf32>
    %11 = tpu.matmul %9, %10, %cst_8 {dimension_numbers = #tpu.dot_dimension_numbers<[1], [0], [0], [1], [0, 0, 1, 1], [], []>} : vector<8x128xbf16>, vector<128x512xbf16>, vector<8x512xf32> -> vector<8x512xf32>
    %c0_9 = arith.constant 0 : index
    %c0_10 = arith.constant 0 : index
    %12 = vector.load %arg5[%c0_9, %c0_10] : memref<1x512xf32, #tpu.memory_space<vmem>>, vector<1x512xf32>
    %13 = vector.broadcast %12 : vector<1x512xf32> to vector<8x512xf32>
    %14 = arith.addf %11, %13 : vector<8x512xf32>
    %cst_11 = arith.constant 0.000000e+00 : f32
    %15 = vector.broadcast %cst_11 : f32 to vector<8x512xf32>
    %16 = arith.maximumf %14, %15 : vector<8x512xf32>
    %17 = arith.truncf %16 : vector<8x512xf32> to vector<8x512xbf16>
    %c0_12 = arith.constant 0 : index
    %c0_13 = arith.constant 0 : index
    %18 = vector.load %arg6[%c0_12, %c0_13] : memref<512x896xbf16, #tpu.memory_space<vmem>>, vector<512x896xbf16>
    %cst_14 = arith.constant dense<0.000000e+00> : vector<8x896xf32>
    %19 = tpu.matmul %17, %18, %cst_14 {dimension_numbers = #tpu.dot_dimension_numbers<[1], [0], [0], [1], [0, 0, 1, 1], [], []>} : vector<8x512xbf16>, vector<512x896xbf16>, vector<8x896xf32> -> vector<8x896xf32>
    %c0_15 = arith.constant 0 : index
    %c0_16 = arith.constant 0 : index
    %20 = vector.load %arg7[%c0_15, %c0_16] : memref<1x896xf32, #tpu.memory_space<vmem>>, vector<1x896xf32>
    %21 = vector.broadcast %20 : vector<1x896xf32> to vector<8x896xf32>
    %22 = arith.addf %19, %21 : vector<8x896xf32>
    %cst_17 = arith.constant 0.000000e+00 : f32
    %23 = vector.broadcast %cst_17 : f32 to vector<8x896xf32>
    %24 = arith.maximumf %22, %23 : vector<8x896xf32>
    %25 = arith.truncf %24 : vector<8x896xf32> to vector<8x896xbf16>
    %c0_18 = arith.constant 0 : index
    %c0_19 = arith.constant 0 : index
    %26 = vector.load %arg8[%c0_18, %c0_19] : memref<896x896xbf16, #tpu.memory_space<vmem>>, vector<896x896xbf16>
    %cst_20 = arith.constant dense<0.000000e+00> : vector<8x896xf32>
    %27 = tpu.matmul %25, %26, %cst_20 {dimension_numbers = #tpu.dot_dimension_numbers<[1], [0], [0], [1], [0, 0, 1, 1], [], []>} : vector<8x896xbf16>, vector<896x896xbf16>, vector<8x896xf32> -> vector<8x896xf32>
    %c0_21 = arith.constant 0 : index
    %c0_22 = arith.constant 0 : index
    %28 = vector.load %arg9[%c0_21, %c0_22] : memref<1x896xf32, #tpu.memory_space<vmem>>, vector<1x896xf32>
    %29 = vector.broadcast %28 : vector<1x896xf32> to vector<8x896xf32>
    %30 = arith.addf %27, %29 : vector<8x896xf32>
    %cst_23 = arith.constant 0.000000e+00 : f32
    %31 = vector.broadcast %cst_23 : f32 to vector<8x896xf32>
    %32 = arith.subf %31, %30 : vector<8x896xf32>
    %33 = math.exp %32 : vector<8x896xf32>
    %cst_24 = arith.constant 1.000000e+00 : f32
    %34 = vector.broadcast %cst_24 : f32 to vector<8x896xf32>
    %35 = arith.addf %34, %33 : vector<8x896xf32>
    %36 = tpu.reciprocal %35 {approx = true} : vector<8x896xf32> -> vector<8x896xf32>
    %c0_25 = arith.constant 0 : index
    %c0_26 = arith.constant 0 : index
    %37 = vector.load %arg10[%c0_25, %c0_26] : memref<8x896xf32, #tpu.memory_space<vmem>>, vector<8x896xf32>
    tpu.vector_store %arg10[%c0_25, %c0_26], %36 {strides = array<i32>} : memref<8x896xf32, #tpu.memory_space<vmem>>, vector<8x896xf32>,
    return
  }
  func.func @transform_0(%arg0: i32) -> (i32, i32) {
    %c0_i32 = arith.constant 0 : i32
    %c0_i32_0 = arith.constant 0 : i32
    return %arg0, %c0_i32 : i32, i32
  }
  func.func @transform_1(%arg0: i32) -> (i32, i32) {
    %c0_i32 = arith.constant 0 : i32
    %c0_i32_0 = arith.constant 0 : i32
    %c0_i32_1 = arith.constant 0 : i32
    return %c0_i32, %c0_i32_0 : i32, i32
  }
  func.func @transform_2(%arg0: i32) -> (i32, i32) {
    %c0_i32 = arith.constant 0 : i32
    %c0_i32_0 = arith.constant 0 : i32
    %c0_i32_1 = arith.constant 0 : i32
    return %c0_i32, %c0_i32_0 : i32, i32
  }
  func.func @transform_3(%arg0: i32) -> (i32, i32) {
    %c0_i32 = arith.constant 0 : i32
    %c0_i32_0 = arith.constant 0 : i32
    %c0_i32_1 = arith.constant 0 : i32
    return %c0_i32, %c0_i32_0 : i32, i32
  }
  func.func @transform_4(%arg0: i32) -> (i32, i32) {
    %c0_i32 = arith.constant 0 : i32
    %c0_i32_0 = arith.constant 0 : i32
    %c0_i32_1 = arith.constant 0 : i32
    return %c0_i32, %c0_i32_0 : i32, i32
  }
  func.func @transform_5(%arg0: i32) -> (i32, i32) {
    %c0_i32 = arith.constant 0 : i32
    %c0_i32_0 = arith.constant 0 : i32
    %c0_i32_1 = arith.constant 0 : i32
    return %c0_i32, %c0_i32_0 : i32, i32
  }
  func.func @transform_6(%arg0: i32) -> (i32, i32) {
    %c0_i32 = arith.constant 0 : i32
    %c0_i32_0 = arith.constant 0 : i32
    %c0_i32_1 = arith.constant 0 : i32
    return %c0_i32, %c0_i32_0 : i32, i32
  }
  func.func @transform_7(%arg0: i32) -> (i32, i32) {
    %c0_i32 = arith.constant 0 : i32
    %c0_i32_0 = arith.constant 0 : i32
    %c0_i32_1 = arith.constant 0 : i32
    return %c0_i32, %c0_i32_0 : i32, i32
  }
  func.func @transform_8(%arg0: i32) -> (i32, i32) {
    %c0_i32 = arith.constant 0 : i32
    %c0_i32_0 = arith.constant 0 : i32
    %c0_i32_1 = arith.constant 0 : i32
    return %c0_i32, %c0_i32_0 : i32, i32
  }
  func.func @transform_9(%arg0: i32) -> (i32, i32) {
    %c0_i32 = arith.constant 0 : i32
    %c0_i32_0 = arith.constant 0 : i32
    return %arg0, %c0_i32 : i32, i32
  }
}

</mosaic_0001>

<llo_original>
// kernel: tpu_custom_call.1
$region0: #{tpu_custom_call.1}
  #allocation0 [shape = 'u32[]', space=smem, size = 0x4, offset = 0x4, fixed_abs, tag = 'smem constant byte address 0x4 - core index']
  #allocation1 [shape = 'u32[144,128]{1,0:T(1,128)}', space=vmem, size = 0x12000, scoped, tag = 'internal scratch']
  %s0 = inlined_call_operand.hbm [shape: f32[8,16], index: 0, kind: input, shape index: {}]
  %s1 = inlined_call_operand.hbm [shape: bf16[16,128], index: 1, kind: input, shape index: {}]
  %s2 = inlined_call_operand.hbm [shape: f32[1,128], index: 2, kind: input, shape index: {}]
  %s3 = inlined_call_operand.hbm [shape: bf16[128,512], index: 3, kind: input, shape index: {}]
  %s4 = inlined_call_operand.hbm [shape: f32[1,512], index: 4, kind: input, shape index: {}]
  %s5 = inlined_call_operand.hbm [shape: bf16[512,896], index: 5, kind: input, shape index: {}]
  %s6 = inlined_call_operand.hbm [shape: f32[1,896], index: 6, kind: input, shape index: {}]
  %s7 = inlined_call_operand.hbm [shape: bf16[896,896], index: 7, kind: input, shape index: {}]
  %s8 = inlined_call_operand.hbm [shape: f32[1,896], index: 8, kind: input, shape index: {}]
  %s9 = inlined_call_operand.hbm [shape: f32[8,896], index: 9, kind: output, shape index: {}]
  %s10 = sld [smem:[#allocation0]]
  $region82: #{tpu_custom_call.1} parent=0
    _
  %s12 = ssub.s32 1, %s10
  %s13 = scalar_select 0, %s12, %s10
  $region1: #{tpu_custom_call.1} parent=0
    #allocation2 [shape = 'u8[4096]{0}', space=vmem, size = 0x1000, scoped, tag = 'input window, operand 0, single buffered']
    #allocation3 [shape = 's32[1]{0}', space=sflag, size = 0x4, scoped, tag = 'scoped memory for tpu_custom_call.1']
    #allocation4 [shape = 's32[1]{0}', space=sflag, size = 0x4, scoped, tag = 'scoped memory for tpu_custom_call.1']
    #allocation5 [shape = 'u8[4096]{0}', space=vmem, size = 0x1000, scoped, tag = 'input window, operand 1, single buffered']
    #allocation6 [shape = 's32[1]{0}', space=sflag, size = 0x4, scoped, tag = 'scoped memory for tpu_custom_call.1']
    #allocation7 [shape = 'u8[512]{0}', space=vmem, size = 0x400, scoped, tag = 'input window, operand 2, single buffered']
    #allocation8 [shape = 'u8[131072]{0}', space=vmem, size = 0x20000, scoped, tag = 'input window, operand 3, single buffered']
    #allocation9 [shape = 's32[1]{0}', space=sflag, size = 0x4, scoped, tag = 'scoped memory for tpu_custom_call.1']
    #allocation10 [shape = 'u8[2048]{0}', space=vmem, size = 0x800, scoped, tag = 'input window, operand 4, single buffered']
    #allocation11 [shape = 'u8[917504]{0}', space=vmem, size = 0xe0000, scoped, tag = 'input window, operand 5, single buffered']
    #allocation12 [shape = 's32[1]{0}', space=sflag, size = 0x4, scoped, tag = 'scoped memory for tpu_custom_call.1']
    #allocation13 [shape = 'u8[3584]{0}', space=vmem, size = 0x1000, scoped, tag = 'input window, operand 6, single buffered']
    #allocation14 [shape = 'u8[1605632]{0}', space=vmem, size = 0x188000, scoped, tag = 'input window, operand 7, single buffered']
    #allocation15 [shape = 's32[1]{0}', space=sflag, size = 0x4, scoped, tag = 'scoped memory for tpu_custom_call.1']
    #allocation16 [shape = 'u8[3584]{0}', space=vmem, size = 0x1000, scoped, tag = 'input window, operand 8, single buffered']
    #allocation17 [shape = 'u8[28672]{0}', space=vmem, size = 0x7000, scoped, tag = 'output window, operand 0, single buffered']
    %14 = vsyncpa [#allocation3], 0
    %15 = vsyncpa [#allocation6], 0
    %16 = vsyncpa [#allocation9], 0
    %17 = vsyncpa [#allocation12], 0
    %18 = vsyncpa [#allocation15], 0
    %19 = vsyncpa [#allocation4], 0
    // Predicated region
    $region2: #{tpu_custom_call.1} parent=1 // pred_check
      _
    $region3: #{tpu_custom_call.1} parent=1 // pred_check_branch
      %21 = sbr.rel (0) target = $region5
    $region4: #{tpu_custom_call.1} parent=1 // pred_region
      %s23 = ssub.s32 128, 128
      %24 = vsyncadd [#allocation3], %s23
      %s26 = sshll.u32 [#allocation2], 4
      %s27 = int_to_ptr.vmem [resolvable:$true] %s26
      %29 = dma.hbm_to_vmem [thread:$0]  %s0, 128, %s27, [#allocation3]
    $region5: #{tpu_custom_call.1} parent=1 // pred_fallthru
      _
    // Predicated region
    $region6: #{tpu_custom_call.1} parent=1 // pred_check
      _
    $region7: #{tpu_custom_call.1} parent=1 // pred_check_branch
      %31 = sbr.rel (0) target = $region9
    $region8: #{tpu_custom_call.1} parent=1 // pred_region
      %s33 = ssub.s32 128, 128
      %34 = vsyncadd [#allocation6], %s33
      %s35 = sshll.u32 [#allocation5], 4
      %s36 = int_to_ptr.vmem [resolvable:$true] %s35
      %41 = dma.hbm_to_vmem [thread:$0]  %s1, 128, %s36, [#allocation6], 64, 64, 4
    $region9: #{tpu_custom_call.1} parent=1 // pred_fallthru
      _
    // Predicated region
    $region10: #{tpu_custom_call.1} parent=1 // pred_check
      _
    $region11: #{tpu_custom_call.1} parent=1 // pred_check_branch
      %43 = sbr.rel (0) target = $region13
    $region12: #{tpu_custom_call.1} parent=1 // pred_region
      %s45 = ssub.s32 16, 16
      %46 = vsyncadd [#allocation6], %s45
      %s48 = sshll.u32 [#allocation7], 4
      %s49 = int_to_ptr.vmem [resolvable:$true] %s48
      %51 = dma.hbm_to_vmem [thread:$0]  %s2, 16, %s49, [#allocation6]
    $region13: #{tpu_custom_call.1} parent=1 // pred_fallthru
      _
    // Predicated region
    $region14: #{tpu_custom_call.1} parent=1 // pred_check
      _
    $region15: #{tpu_custom_call.1} parent=1 // pred_check_branch
      %53 = sbr.rel (0) target = $region17
    $region16: #{tpu_custom_call.1} parent=1 // pred_region
      %s55 = ssub.s32 4096, 4096
      %56 = vsyncadd [#allocation9], %s55
      %s57 = sshll.u32 [#allocation8], 4
      %s58 = int_to_ptr.vmem [resolvable:$true] %s57
      %63 = dma.hbm_to_vmem [thread:$0]  %s3, 4096, %s58, [#allocation9], 256, 256, 16
    $region17: #{tpu_custom_call.1} parent=1 // pred_fallthru
      _
    // Predicated region
    $region18: #{tpu_custom_call.1} parent=1 // pred_check
      _
    $region19: #{tpu_custom_call.1} parent=1 // pred_check_branch
      %65 = sbr.rel (0) target = $region21
    $region20: #{tpu_custom_call.1} parent=1 // pred_region
      %s67 = ssub.s32 64, 64
      %68 = vsyncadd [#allocation9], %s67
      %s70 = sshll.u32 [#allocation10], 4
      %s71 = int_to_ptr.vmem [resolvable:$true] %s70
      %73 = dma.hbm_to_vmem [thread:$0]  %s4, 64, %s71, [#allocation9]
    $region21: #{tpu_custom_call.1} parent=1 // pred_fallthru
      _
    // Predicated region
    $region22: #{tpu_custom_call.1} parent=1 // pred_check
      _
    $region23: #{tpu_custom_call.1} parent=1 // pred_check_branch
      %75 = sbr.rel (0) target = $region25
    $region24: #{tpu_custom_call.1} parent=1 // pred_region
      %s77 = ssub.s32 28672, 28672
      %78 = vsyncadd [#allocation12], %s77
      %s79 = sshll.u32 [#allocation11], 4
      %s80 = int_to_ptr.vmem [resolvable:$true] %s79
      %85 = dma.hbm_to_vmem [thread:$0]  %s5, 28672, %s80, [#allocation12], 448, 448, 28
    $region25: #{tpu_custom_call.1} parent=1 // pred_fallthru
      _
    // Predicated region
    $region26: #{tpu_custom_call.1} parent=1 // pred_check
      _
    $region27: #{tpu_custom_call.1} parent=1 // pred_check_branch
      %87 = sbr.rel (0) target = $region29
    $region28: #{tpu_custom_call.1} parent=1 // pred_region
      %s89 = ssub.s32 112, 112
      %90 = vsyncadd [#allocation12], %s89
      %s92 = sshll.u32 [#allocation13], 4
      %s93 = int_to_ptr.vmem [resolvable:$true] %s92
      %95 = dma.hbm_to_vmem [thread:$0]  %s6, 112, %s93, [#allocation12]
    $region29: #{tpu_custom_call.1} parent=1 // pred_fallthru
      _
    // Predicated region
    $region30: #{tpu_custom_call.1} parent=1 // pred_check
      _
    $region31: #{tpu_custom_call.1} parent=1 // pred_check_branch
      %97 = sbr.rel (0) target = $region33
    $region32: #{tpu_custom_call.1} parent=1 // pred_region
      %s99 = ssub.s32 50176, 50176
      %100 = vsyncadd [#allocation15], %s99
      %s101 = sshll.u32 [#allocation14], 4
      %s102 = int_to_ptr.vmem [resolvable:$true] %s101
      %107 = dma.hbm_to_vmem [thread:$0]  %s7, 50176, %s102, [#allocation15], 448, 448, 28
    $region33: #{tpu_custom_call.1} parent=1 // pred_fallthru
      _
    // Predicated region
    $region34: #{tpu_custom_call.1} parent=1 // pred_check
      _
    $region35: #{tpu_custom_call.1} parent=1 // pred_check_branch
      %109 = sbr.rel (0) target = $region37
    $region36: #{tpu_custom_call.1} parent=1 // pred_region
      %s111 = ssub.s32 112, 112
      %112 = vsyncadd [#allocation15], %s111
      %s114 = sshll.u32 [#allocation16], 4
      %s115 = int_to_ptr.vmem [resolvable:$true] %s114
      %117 = dma.hbm_to_vmem [thread:$0]  %s8, 112, %s115, [#allocation15]
    $region37: #{tpu_custom_call.1} parent=1 // pred_fallthru
      _
    // Predicated region
    $region38: #{tpu_custom_call.1} parent=1 // pred_check
      _
    $region39: #{tpu_custom_call.1} parent=1 // pred_check_branch
      %119 = sbr.rel (0) target = $region41
    $region40: #{tpu_custom_call.1} parent=1 // pred_region
      %120 = dma.done [#allocation3], 128
    $region41: #{tpu_custom_call.1} parent=1 // pred_fallthru
      _
    // Predicated region
    $region42: #{tpu_custom_call.1} parent=1 // pred_check
      _
    $region43: #{tpu_custom_call.1} parent=1 // pred_check_branch
      %122 = sbr.rel (0) target = $region45
    $region44: #{tpu_custom_call.1} parent=1 // pred_region
      %123 = dma.done [#allocation6], 128
    $region45: #{tpu_custom_call.1} parent=1 // pred_fallthru
      _
    // Predicated region
    $region46: #{tpu_custom_call.1} parent=1 // pred_check
      _
    $region47: #{tpu_custom_call.1} parent=1 // pred_check_branch
      %125 = sbr.rel (0) target = $region49
    $region48: #{tpu_custom_call.1} parent=1 // pred_region
      %126 = dma.done [#allocation6], 16
    $region49: #{tpu_custom_call.1} parent=1 // pred_fallthru
      _
    // Predicated region
    $region50: #{tpu_custom_call.1} parent=1 // pred_check
      _
    $region51: #{tpu_custom_call.1} parent=1 // pred_check_branch
      %128 = sbr.rel (0) target = $region53
    $region52: #{tpu_custom_call.1} parent=1 // pred_region
      %129 = dma.done [#allocation9], 4096
    $region53: #{tpu_custom_call.1} parent=1 // pred_fallthru
      _
    // Predicated region
    $region54: #{tpu_custom_call.1} parent=1 // pred_check
      _
    $region55: #{tpu_custom_call.1} parent=1 // pred_check_branch
      %131 = sbr.rel (0) target = $region57
    $region56: #{tpu_custom_call.1} parent=1 // pred_region
      %132 = dma.done [#allocation9], 64
    $region57: #{tpu_custom_call.1} parent=1 // pred_fallthru
      _
    // Predicated region
    $region58: #{tpu_custom_call.1} parent=1 // pred_check
      _
    $region59: #{tpu_custom_call.1} parent=1 // pred_check_branch
      %134 = sbr.rel (0) target = $region61
    $region60: #{tpu_custom_call.1} parent=1 // pred_region
      %135 = dma.done [#allocation12], 28672
    $region61: #{tpu_custom_call.1} parent=1 // pred_fallthru
      _
    // Predicated region
    $region62: #{tpu_custom_call.1} parent=1 // pred_check
      _
    $region63: #{tpu_custom_call.1} parent=1 // pred_check_branch
      %137 = sbr.rel (0) target = $region65
    $region64: #{tpu_custom_call.1} parent=1 // pred_region
      %138 = dma.done [#allocation12], 112
    $region65: #{tpu_custom_call.1} parent=1 // pred_fallthru
      _
    // Predicated region
    $region66: #{tpu_custom_call.1} parent=1 // pred_check
      _
    $region67: #{tpu_custom_call.1} parent=1 // pred_check_branch
      %140 = sbr.rel (0) target = $region69
    $region68: #{tpu_custom_call.1} parent=1 // pred_region
      %141 = dma.done [#allocation15], 50176
    $region69: #{tpu_custom_call.1} parent=1 // pred_fallthru
      _
    // Predicated region
    $region70: #{tpu_custom_call.1} parent=1 // pred_check
      _
    $region71: #{tpu_custom_call.1} parent=1 // pred_check_branch
      %143 = sbr.rel (0) target = $region73
    $region72: #{tpu_custom_call.1} parent=1 // pred_region
      %144 = dma.done [#allocation15], 112
    $region73: #{tpu_custom_call.1} parent=1 // pred_fallthru
      _
    %v146 = vld [vmem:[#allocation2] sm:$0xff]
    %v147 = vpack.c.bf16 %v146, %v146
    %v148 = vld [vmem:[#allocation5] sm:$0xf]
    %v149 = vld [vmem:[#allocation5 + $0x4] sm:$0xf]
    %v150 = vld [vmem:[#allocation7] sm:$0x1]
    %v152 = vlaneseq
    %v153 = vshrl.u32 %v152, 7
    %v154 = vsub.s32 0, %v153
    %v155 = vrot.slane %v150, %v154
    %v159 = vunpack.c.l.b16 %v148
    %v160 = vunpack.c.l.b16 %v149
    %v161 = vpack.c.b16 %v160, %v159
    %vm163 = vcmask 130048
    %v165 = vsel %vm163, %v147, 0
    %167 = vmatprep.subr.bf16.mxu0 0
    %168 = vmatpush1.bf16.msra.mxu0 %v161
    %169 = vmatprep.subr.bf16.mxu0 0
    %170 = vmatpush1.bf16.msra.mxu0 0
    %171 = vmatprep.subr.bf16.mxu0 0
    %172 = vmatpush1.bf16.msra.mxu0 0
    %173 = vmatprep.subr.bf16.mxu0 0
    %174 = vmatpush1.bf16.msra.mxu0 0
    %175 = vmatprep.subr.bf16.mxu0 0
    %176 = vmatpush1.bf16.msra.mxu0 0
    %177 = vmatprep.subr.bf16.mxu0 0
    %178 = vmatpush1.bf16.msra.mxu0 0
    %179 = vmatprep.subr.bf16.mxu0 0
    %180 = vmatpush1.bf16.msra.mxu0 0
    %181 = vmatprep.subr.bf16.mxu0 0
    %182 = vmatpush1.bf16.msra.mxu0 0
    %183 = vmatprep.subr.bf16.mxu0 0
    %184 = vmatpush1.bf16.msra.mxu0 0
    %185 = vmatprep.subr.bf16.mxu0 0
    %186 = vmatpush1.bf16.msra.mxu0 0
    %187 = vmatprep.subr.bf16.mxu0 0
    %188 = vmatpush1.bf16.msra.mxu0 0
    %189 = vmatprep.subr.bf16.mxu0 0
    %190 = vmatpush1.bf16.msra.mxu0 0
    %191 = vmatprep.subr.bf16.mxu0 0
    %192 = vmatpush1.bf16.msra.mxu0 0
    %193 = vmatprep.subr.bf16.mxu0 0
    %194 = vmatpush1.bf16.msra.mxu0 0
    %195 = vmatprep.subr.bf16.mxu0 0
    %196 = vmatpush1.bf16.msra.mxu0 0
    %197 = vmatprep.subr.bf16.mxu0 0
    %198 = vmatpush1.bf16.msra.mxu0 0
    %199 = vmatprep.mubr.bf16.mxu0 0
    %200 = vmatmul.mubr.bf16.gmra.mrb[0].mxu0 %v165
    %v201 = vpop.f32.mrb[0].mxu0
    %v202 = vadd.f32 %v155, %v201
    %v203 = vpop.f32.mrb[0].mxu0
    %v204 = vpop.f32.mrb[0].mxu0
    %v205 = vpop.f32.mrb[0].mxu0
    %206 = vdwg.mxu0
    %v207 = vmax.f32 %v202, 0.0
    %v208 = vpack.c.bf16 %v207, %v207
    %v209 = vld [vmem:[#allocation8] sm:$0xff]
    %v210 = vld [vmem:[#allocation8 + $0x8] sm:$0xff]
    %v211 = vld [vmem:[#allocation8 + $0x10] sm:$0xff]
    %v212 = vld [vmem:[#allocation8 + $0x18] sm:$0xff]
    %v213 = vld [vmem:[#allocation8 + $0x20] sm:$0xff]
    %v214 = vld [vmem:[#allocation8 + $0x28] sm:$0xff]
    %v215 = vld [vmem:[#allocation8 + $0x30] sm:$0xff]
    %v216 = vld [vmem:[#allocation8 + $0x38] sm:$0xff]
    %v217 = vld [vmem:[#allocation8 + $0x40] sm:$0xff]
    %v218 = vld [vmem:[#allocation8 + $0x48] sm:$0xff]
    %v219 = vld [vmem:[#allocation8 + $0x50] sm:$0xff]
    %v220 = vld [vmem:[#allocation8 + $0x58] sm:$0xff]
    %v221 = vld [vmem:[#allocation8 + $0x60] sm:$0xff]
    %v222 = vld [vmem:[#allocation8 + $0x68] sm:$0xff]
    %v223 = vld [vmem:[#allocation8 + $0x70] sm:$0xff]
    %v224 = vld [vmem:[#allocation8 + $0x78] sm:$0xff]
    %v225 = vld [vmem:[#allocation8 + $0x80] sm:$0xff]
    %v226 = vld [vmem:[#allocation8 + $0x88] sm:$0xff]
    %v227 = vld [vmem:[#allocation8 + $0x90] sm:$0xff]
    %v228 = vld [vmem:[#allocation8 + $0x98] sm:$0xff]
    %v229 = vld [vmem:[#allocation8 + $0xa0] sm:$0xff]
    %v230 = vld [vmem:[#allocation8 + $0xa8] sm:$0xff]
    %v231 = vld [vmem:[#allocation8 + $0xb0] sm:$0xff]
    %v232 = vld [vmem:[#allocation8 + $0xb8] sm:$0xff]
    %v233 = vld [vmem:[#allocation8 + $0xc0] sm:$0xff]
    %v234 = vld [vmem:[#allocation8 + $0xc8] sm:$0xff]
    %v235 = vld [vmem:[#allocation8 + $0xd0] sm:$0xff]
    %v236 = vld [vmem:[#allocation8 + $0xd8] sm:$0xff]
    %v237 = vld [vmem:[#allocation8 + $0xe0] sm:$0xff]
    %v238 = vld [vmem:[#allocation8 + $0xe8] sm:$0xff]
    %v239 = vld [vmem:[#allocation8 + $0xf0] sm:$0xff]
    %v240 = vld [vmem:[#allocation8 + $0xf8] sm:$0xff]
    %v241 = vld [vmem:[#allocation10] sm:$0xf]
    %v243 = vlaneseq
    %v244 = vshrl.u32 %v243, 7
    %v245 = vsub.s32 0, %v244
    %v246 = vrot.slane %v241, %v245
    %v247 = vlaneseq
    %v248 = vshrl.u32 %v247, 7
    %v249 = vsub.s32 1, %v248
    %v250 = vrot.slane %v241, %v249
    %v251 = vlaneseq
    %v252 = vshrl.u32 %v251, 7
    %v253 = vsub.s32 2, %v252
    %v254 = vrot.slane %v241, %v253
    %v255 = vlaneseq
    %v256 = vshrl.u32 %v255, 7
    %v257 = vsub.s32 3, %v256
    %v258 = vrot.slane %v241, %v257
    %v295 = vunpack.c.l.b16 %v209
    %v296 = vunpack.c.h.b16 %v209
    %v297 = vunpack.c.l.b16 %v210
    %v298 = vunpack.c.h.b16 %v210
    %v299 = vunpack.c.l.b16 %v211
    %v300 = vunpack.c.h.b16 %v211
    %v301 = vunpack.c.l.b16 %v212
    %v302 = vunpack.c.h.b16 %v212
    %v303 = vunpack.c.l.b16 %v213
    %v304 = vunpack.c.h.b16 %v213
    %v305 = vunpack.c.l.b16 %v214
    %v306 = vunpack.c.h.b16 %v214
    %v307 = vunpack.c.l.b16 %v215
    %v308 = vunpack.c.h.b16 %v215
    %v309 = vunpack.c.l.b16 %v216
    %v310 = vunpack.c.h.b16 %v216
    %v311 = vunpack.c.l.b16 %v217
    %v312 = vunpack.c.h.b16 %v217
    %v313 = vunpack.c.l.b16 %v218
    %v314 = vunpack.c.h.b16 %v218
    %v315 = vunpack.c.l.b16 %v219
    %v316 = vunpack.c.h.b16 %v219
    %v317 = vunpack.c.l.b16 %v220
    %v318 = vunpack.c.h.b16 %v220
    %v319 = vunpack.c.l.b16 %v221
    %v320 = vunpack.c.h.b16 %v221
    %v321 = vunpack.c.l.b16 %v222
    %v322 = vunpack.c.h.b16 %v222
    %v323 = vunpack.c.l.b16 %v223
    %v324 = vunpack.c.h.b16 %v223
    %v325 = vunpack.c.l.b16 %v224
    %v326 = vunpack.c.h.b16 %v224
    %v327 = vunpack.c.l.b16 %v225
    %v328 = vunpack.c.h.b16 %v225
    %v329 = vunpack.c.l.b16 %v226
    %v330 = vunpack.c.h.b16 %v226
    %v331 = vunpack.c.l.b16 %v227
    %v332 = vunpack.c.h.b16 %v227
    %v333 = vunpack.c.l.b16 %v228
    %v334 = vunpack.c.h.b16 %v228
    %v335 = vunpack.c.l.b16 %v229
    %v336 = vunpack.c.h.b16 %v229
    %v337 = vunpack.c.l.b16 %v230
    %v338 = vunpack.c.h.b16 %v230
    %v339 = vunpack.c.l.b16 %v231
    %v340 = vunpack.c.h.b16 %v231
    %v341 = vunpack.c.l.b16 %v232
    %v342 = vunpack.c.h.b16 %v232
    %v343 = vunpack.c.l.b16 %v233
    %v344 = vunpack.c.h.b16 %v233
    %v345 = vunpack.c.l.b16 %v234
    %v346 = vunpack.c.h.b16 %v234
    %v347 = vunpack.c.l.b16 %v235
    %v348 = vunpack.c.h.b16 %v235
    %v349 = vunpack.c.l.b16 %v236
    %v350 = vunpack.c.h.b16 %v236
    %v351 = vunpack.c.l.b16 %v237
    %v352 = vunpack.c.h.b16 %v237
    %v353 = vunpack.c.l.b16 %v238
    %v354 = vunpack.c.h.b16 %v238
    %v355 = vunpack.c.l.b16 %v239
    %v356 = vunpack.c.h.b16 %v239
    %v357 = vunpack.c.l.b16 %v240
    %v358 = vunpack.c.h.b16 %v240
    %v359 = vpack.c.b16 %v299, %v295
    %v360 = vpack.c.b16 %v300, %v296
    %v361 = vpack.c.b16 %v301, %v297
    %v362 = vpack.c.b16 %v302, %v298
    %v363 = vpack.c.b16 %v307, %v303
    %v364 = vpack.c.b16 %v308, %v304
    %v365 = vpack.c.b16 %v309, %v305
    %v366 = vpack.c.b16 %v310, %v306
    %v367 = vpack.c.b16 %v315, %v311
    %v368 = vpack.c.b16 %v316, %v312
    %v369 = vpack.c.b16 %v317, %v313
    %v370 = vpack.c.b16 %v318, %v314
    %v371 = vpack.c.b16 %v323, %v319
    %v372 = vpack.c.b16 %v324, %v320
    %v373 = vpack.c.b16 %v325, %v321
    %v374 = vpack.c.b16 %v326, %v322
    %v375 = vpack.c.b16 %v331, %v327
    %v376 = vpack.c.b16 %v332, %v328
    %v377 = vpack.c.b16 %v333, %v329
    %v378 = vpack.c.b16 %v334, %v330
    %v379 = vpack.c.b16 %v339, %v335
    %v380 = vpack.c.b16 %v340, %v336
    %v381 = vpack.c.b16 %v341, %v337
    %v382 = vpack.c.b16 %v342, %v338
    %v383 = vpack.c.b16 %v347, %v343
    %v384 = vpack.c.b16 %v348, %v344
    %v385 = vpack.c.b16 %v349, %v345
    %v386 = vpack.c.b16 %v350, %v346
    %v387 = vpack.c.b16 %v355, %v351
    %v388 = vpack.c.b16 %v356, %v352
    %v389 = vpack.c.b16 %v357, %v353
    %v390 = vpack.c.b16 %v358, %v354
    %423 = vmatprep.subr.bf16.mxu0 %v360
    %424 = vmatpush1.bf16.msra.mxu0 %v359
    %425 = vmatprep.subr.bf16.mxu0 %v364
    %426 = vmatpush1.bf16.msra.mxu0 %v363
    %427 = vmatprep.subr.bf16.mxu0 %v368
    %428 = vmatpush1.bf16.msra.mxu0 %v367
    %429 = vmatprep.subr.bf16.mxu0 %v372
    %430 = vmatpush1.bf16.msra.mxu0 %v371
    %431 = vmatprep.subr.bf16.mxu0 %v376
    %432 = vmatpush1.bf16.msra.mxu0 %v375
    %433 = vmatprep.subr.bf16.mxu0 %v380
    %434 = vmatpush1.bf16.msra.mxu0 %v379
    %435 = vmatprep.subr.bf16.mxu0 %v384
    %436 = vmatpush1.bf16.msra.mxu0 %v383
    %437 = vmatprep.subr.bf16.mxu0 %v388
    %438 = vmatpush1.bf16.msra.mxu0 %v387
    %439 = vmatprep.subr.bf16.mxu0 0
    %440 = vmatpush1.bf16.msra.mxu0 0
    %441 = vmatprep.subr.bf16.mxu0 0
    %442 = vmatpush1.bf16.msra.mxu0 0
    %443 = vmatprep.subr.bf16.mxu0 0
    %444 = vmatpush1.bf16.msra.mxu0 0
    %445 = vmatprep.subr.bf16.mxu0 0
    %446 = vmatpush1.bf16.msra.mxu0 0
    %447 = vmatprep.subr.bf16.mxu0 0
    %448 = vmatpush1.bf16.msra.mxu0 0
    %449 = vmatprep.subr.bf16.mxu0 0
    %450 = vmatpush1.bf16.msra.mxu0 0
    %451 = vmatprep.subr.bf16.mxu0 0
    %452 = vmatpush1.bf16.msra.mxu0 0
    %453 = vmatprep.subr.bf16.mxu0 0
    %454 = vmatpush1.bf16.msra.mxu0 0
    %455 = vmatprep.mubr.bf16.mxu0 0
    %456 = vmatmul.mubr.bf16.gmra.mrb[0].mxu0 %v208
    %v457 = vpop.f32.mrb[0].mxu0
    %v458 = vadd.f32 %v246, %v457
    %v459 = vpop.f32.mrb[0].mxu0
    %v460 = vadd.f32 %v250, %v459
    %v461 = vpop.f32.mrb[0].mxu0
    %v462 = vpop.f32.mrb[0].mxu0
    %463 = vdwg.mxu0
    %464 = vmatprep.subr.bf16.mxu0 %v362
    %465 = vmatpush1.bf16.msra.mxu0 %v361
    %466 = vmatprep.subr.bf16.mxu0 %v366
    %467 = vmatpush1.bf16.msra.mxu0 %v365
    %468 = vmatprep.subr.bf16.mxu0 %v370
    %469 = vmatpush1.bf16.msra.mxu0 %v369
    %470 = vmatprep.subr.bf16.mxu0 %v374
    %471 = vmatpush1.bf16.msra.mxu0 %v373
    %472 = vmatprep.subr.bf16.mxu0 %v378
    %473 = vmatpush1.bf16.msra.mxu0 %v377
    %474 = vmatprep.subr.bf16.mxu0 %v382
    %475 = vmatpush1.bf16.msra.mxu0 %v381
    %476 = vmatprep.subr.bf16.mxu0 %v386
    %477 = vmatpush1.bf16.msra.mxu0 %v385
    %478 = vmatprep.subr.bf16.mxu0 %v390
    %479 = vmatpush1.bf16.msra.mxu0 %v389
    %480 = vmatprep.subr.bf16.mxu0 0
    %481 = vmatpush1.bf16.msra.mxu0 0
    %482 = vmatprep.subr.bf16.mxu0 0
    %483 = vmatpush1.bf16.msra.mxu0 0
    %484 = vmatprep.subr.bf16.mxu0 0
    %485 = vmatpush1.bf16.msra.mxu0 0
    %486 = vmatprep.subr.bf16.mxu0 0
    %487 = vmatpush1.bf16.msra.mxu0 0
    %488 = vmatprep.subr.bf16.mxu0 0
    %489 = vmatpush1.bf16.msra.mxu0 0
    %490 = vmatprep.subr.bf16.mxu0 0
    %491 = vmatpush1.bf16.msra.mxu0 0
    %492 = vmatprep.subr.bf16.mxu0 0
    %493 = vmatpush1.bf16.msra.mxu0 0
    %494 = vmatprep.subr.bf16.mxu0 0
    %495 = vmatpush1.bf16.msra.mxu0 0
    %496 = vmatprep.mubr.bf16.mxu0 0
    %497 = vmatmul.mubr.bf16.gmra.mrb[0].mxu0 %v208
    %v498 = vpop.f32.mrb[0].mxu0
    %v499 = vadd.f32 %v254, %v498
    %v500 = vpop.f32.mrb[0].mxu0
    %v501 = vadd.f32 %v258, %v500
    %v502 = vpop.f32.mrb[0].mxu0
    %v503 = vpop.f32.mrb[0].mxu0
    %504 = vdwg.mxu0
    %v505 = vmax.f32 %v458, 0.0
    %v506 = vmax.f32 %v460, 0.0
    %v507 = vmax.f32 %v499, 0.0
    %v508 = vmax.f32 %v501, 0.0
    %v509 = vpack.c.bf16 %v505, %v505
    %v510 = vpack.c.bf16 %v506, %v506
    %v511 = vpack.c.bf16 %v507, %v507
    %v512 = vpack.c.bf16 %v508, %v508
    %v513 = vld [vmem:[#allocation11] sm:$0xff]
    %v514 = vld [vmem:[#allocation11 + $0x8] sm:$0xff]
    %v515 = vld [vmem:[#allocation11 + $0x10] sm:$0xff]
    %v516 = vld [vmem:[#allocation11 + $0x18] sm:$0xf]
    %v517 = vld [vmem:[#allocation11 + $0x1c] sm:$0xff]
    %v518 = vld [vmem:[#allocation11 + $0x24] sm:$0xff]
    %v519 = vld [vmem:[#allocation11 + $0x2c] sm:$0xff]
    %v520 = vld [vmem:[#allocation11 + $0x34] sm:$0xf]
    %v521 = vld [vmem:[#allocation11 + $0x38] sm:$0xff]
    %v522 = vld [vmem:[#allocation11 + $0x40] sm:$0xff]
    %v523 = vld [vmem:[#allocation11 + $0x48] sm:$0xff]
    %v524 = vld [vmem:[#allocation11 + $0x50] sm:$0xf]
    %v525 = vld [vmem:[#allocation11 + $0x54] sm:$0xff]
    %v526 = vld [vmem:[#allocation11 + $0x5c] sm:$0xff]
    %v527 = vld [vmem:[#allocation11 + $0x64] sm:$0xff]
    %v528 = vld [vmem:[#allocation11 + $0x6c] sm:$0xf]
    %v529 = vld [vmem:[#allocation11 + $0x70] sm:$0xff]
    %v530 = vld [vmem:[#allocation11 + $0x78] sm:$0xff]
    %v531 = vld [vmem:[#allocation11 + $0x80] sm:$0xff]
    %v532 = vld [vmem:[#allocation11 + $0x88] sm:$0xf]
    %v533 = vld [vmem:[#allocation11 + $0x8c] sm:$0xff]
    %v534 = vld [vmem:[#allocation11 + $0x94] sm:$0xff]
    %v535 = vld [vmem:[#allocation11 + $0x9c] sm:$0xff]
    %v536 = vld [vmem:[#allocation11 + $0xa4] sm:$0xf]
    %v537 = vld [vmem:[#allocation11 + $0xa8] sm:$0xff]
    %v538 = vld [vmem:[#allocation11 + $0xb0] sm:$0xff]
    %v539 = vld [vmem:[#allocation11 + $0xb8] sm:$0xff]
    %v540 = vld [vmem:[#allocation11 + $0xc0] sm:$0xf]
    %v541 = vld [vmem:[#allocation11 + $0xc4] sm:$0xff]
    %v542 = vld [vmem:[#allocation11 + $0xcc] sm:$0xff]
    %v543 = vld [vmem:[#allocation11 + $0xd4] sm:$0xff]
    %v544 = vld [vmem:[#allocation11 + $0xdc] sm:$0xf]
    %v545 = vld [vmem:[#allocation11 + $0xe0] sm:$0xff]
    %v546 = vld [vmem:[#allocation11 + $0xe8] sm:$0xff]
    %v547 = vld [vmem:[#allocation11 + $0xf0] sm:$0xff]
    %v548 = vld [vmem:[#allocation11 + $0xf8] sm:$0xf]
    %v549 = vld [vmem:[#allocation11 + $0xfc] sm:$0xff]
    %v550 = vld [vmem:[#allocation11 + $0x104] sm:$0xff]
    %v551 = vld [vmem:[#allocation11 + $0x10c] sm:$0xff]
    %v552 = vld [vmem:[#allocation11 + $0x114] sm:$0xf]
    %v553 = vld [vmem:[#allocation11 + $0x118] sm:$0xff]
    %v554 = vld [vmem:[#allocation11 + $0x120] sm:$0xff]
    %v555 = vld [vmem:[#allocation11 + $0x128] sm:$0xff]
    %v556 = vld [vmem:[#allocation11 + $0x130] sm:$0xf]
    %v557 = vld [vmem:[#allocation11 + $0x134] sm:$0xff]
    %v558 = vld [vmem:[#allocation11 + $0x13c] sm:$0xff]
    %v559 = vld [vmem:[#allocation11 + $0x144] sm:$0xff]
    %v560 = vld [vmem:[#allocation11 + $0x14c] sm:$0xf]
    %v561 = vld [vmem:[#allocation11 + $0x150] sm:$0xff]
    %v562 = vld [vmem:[#allocation11 + $0x158] sm:$0xff]
    %v563 = vld [vmem:[#allocation11 + $0x160] sm:$0xff]
    %v564 = vld [vmem:[#allocation11 + $0x168] sm:$0xf]
    %v565 = vld [vmem:[#allocation11 + $0x16c] sm:$0xff]
    %v566 = vld [vmem:[#allocation11 + $0x174] sm:$0xff]
    %v567 = vld [vmem:[#allocation11 + $0x17c] sm:$0xff]
    %v568 = vld [vmem:[#allocation11 + $0x184] sm:$0xf]
    %v569 = vld [vmem:[#allocation11 + $0x188] sm:$0xff]
    %v570 = vld [vmem:[#allocation11 + $0x190] sm:$0xff]
    %v571 = vld [vmem:[#allocation11 + $0x198] sm:$0xff]
    %v572 = vld [vmem:[#allocation11 + $0x1a0] sm:$0xf]
    %v573 = vld [vmem:[#allocation11 + $0x1a4] sm:$0xff]
    %v574 = vld [vmem:[#allocation11 + $0x1ac] sm:$0xff]
    %v575 = vld [vmem:[#allocation11 + $0x1b4] sm:$0xff]
    %v576 = vld [vmem:[#allocation11 + $0x1bc] sm:$0xf]
    %v577 = vld [vmem:[#allocation11 + $0x1c0] sm:$0xff]
    %v578 = vld [vmem:[#allocation11 + $0x1c8] sm:$0xff]
    %v579 = vld [vmem:[#allocation11 + $0x1d0] sm:$0xff]
    %v580 = vld [vmem:[#allocation11 + $0x1d8] sm:$0xf]
    %v581 = vld [vmem:[#allocation11 + $0x1dc] sm:$0xff]
    %v582 = vld [vmem:[#allocation11 + $0x1e4] sm:$0xff]
    %v583 = vld [vmem:[#allocation11 + $0x1ec] sm:$0xff]
    %v584 = vld [vmem:[#allocation11 + $0x1f4] sm:$0xf]
    %v585 = vld [vmem:[#allocation11 + $0x1f8] sm:$0xff]
    %v586 = vld [vmem:[#allocation11 + $0x200] sm:$0xff]
    %v587 = vld [vmem:[#allocation11 + $0x208] sm:$0xff]
    %v588 = vld [vmem:[#allocation11 + $0x210] sm:$0xf]
    %v589 = vld [vmem:[#allocation11 + $0x214] sm:$0xff]
    %v590 = vld [vmem:[#allocation11 + $0x21c] sm:$0xff]
    %v591 = vld [vmem:[#allocation11 + $0x224] sm:$0xff]
    %v592 = vld [vmem:[#allocation11 + $0x22c] sm:$0xf]
    %v593 = vld [vmem:[#allocation11 + $0x230] sm:$0xff]
    %v594 = vld [vmem:[#allocation11 + $0x238] sm:$0xff]
    %v595 = vld [vmem:[#allocation11 + $0x240] sm:$0xff]
    %v596 = vld [vmem:[#allocation11 + $0x248] sm:$0xf]
    %v597 = vld [vmem:[#allocation11 + $0x24c] sm:$0xff]
    %v598 = vld [vmem:[#allocation11 + $0x254] sm:$0xff]
    %v599 = vld [vmem:[#allocation11 + $0x25c] sm:$0xff]
    %v600 = vld [vmem:[#allocation11 + $0x264] sm:$0xf]
    %v601 = vld [vmem:[#allocation11 + $0x268] sm:$0xff]
    %v602 = vld [vmem:[#allocation11 + $0x270] sm:$0xff]
    %v603 = vld [vmem:[#allocation11 + $0x278] sm:$0xff]
    %v604 = vld [vmem:[#allocation11 + $0x280] sm:$0xf]
    %v605 = vld [vmem:[#allocation11 + $0x284] sm:$0xff]
    %v606 = vld [vmem:[#allocation11 + $0x28c] sm:$0xff]
    %v607 = vld [vmem:[#allocation11 + $0x294] sm:$0xff]
    %v608 = vld [vmem:[#allocation11 + $0x29c] sm:$0xf]
    %v609 = vld [vmem:[#allocation11 + $0x2a0] sm:$0xff]
    %v610 = vld [vmem:[#allocation11 + $0x2a8] sm:$0xff]
    %v611 = vld [vmem:[#allocation11 + $0x2b0] sm:$0xff]
    %v612 = vld [vmem:[#allocation11 + $0x2b8] sm:$0xf]
    %v613 = vld [vmem:[#allocation11 + $0x2bc] sm:$0xff]
    %v614 = vld [vmem:[#allocation11 + $0x2c4] sm:$0xff]
    %v615 = vld [vmem:[#allocation11 + $0x2cc] sm:$0xff]
    %v616 = vld [vmem:[#allocation11 + $0x2d4] sm:$0xf]
    %v617 = vld [vmem:[#allocation11 + $0x2d8] sm:$0xff]
    %v618 = vld [vmem:[#allocation11 + $0x2e0] sm:$0xff]
    %v619 = vld [vmem:[#allocation11 + $0x2e8] sm:$0xff]
    %v620 = vld [vmem:[#allocation11 + $0x2f0] sm:$0xf]
    %v621 = vld [vmem:[#allocation11 + $0x2f4] sm:$0xff]
    %v622 = vld [vmem:[#allocation11 + $0x2fc] sm:$0xff]
    %v623 = vld [vmem:[#allocation11 + $0x304] sm:$0xff]
    %v624 = vld [vmem:[#allocation11 + $0x30c] sm:$0xf]
    %v625 = vld [vmem:[#allocation11 + $0x310] sm:$0xff]
    %v626 = vld [vmem:[#allocation11 + $0x318] sm:$0xff]
    %v627 = vld [vmem:[#allocation11 + $0x320] sm:$0xff]
    %v628 = vld [vmem:[#allocation11 + $0x328] sm:$0xf]
    %v629 = vld [vmem:[#allocation11 + $0x32c] sm:$0xff]
    %v630 = vld [vmem:[#allocation11 + $0x334] sm:$0xff]
    %v631 = vld [vmem:[#allocation11 + $0x33c] sm:$0xff]
    %v632 = vld [vmem:[#allocation11 + $0x344] sm:$0xf]
    %v633 = vld [vmem:[#allocation11 + $0x348] sm:$0xff]
    %v634 = vld [vmem:[#allocation11 + $0x350] sm:$0xff]
    %v635 = vld [vmem:[#allocation11 + $0x358] sm:$0xff]
    %v636 = vld [vmem:[#allocation11 + $0x360] sm:$0xf]
    %v637 = vld [vmem:[#allocation11 + $0x364] sm:$0xff]
    %v638 = vld [vmem:[#allocation11 + $0x36c] sm:$0xff]
    %v639 = vld [vmem:[#allocation11 + $0x374] sm:$0xff]
    %v640 = vld [vmem:[#allocation11 + $0x37c] sm:$0xf]
    %v641 = vld [vmem:[#allocation11 + $0x380] sm:$0xff]
    %v642 = vld [vmem:[#allocation11 + $0x388] sm:$0xff]
    %v643 = vld [vmem:[#allocation11 + $0x390] sm:$0xff]
    %v644 = vld [vmem:[#allocation11 + $0x398] sm:$0xf]
    %v645 = vld [vmem:[#allocation11 + $0x39c] sm:$0xff]
    %v646 = vld [vmem:[#allocation11 + $0x3a4] sm:$0xff]
    %v647 = vld [vmem:[#allocation11 + $0x3ac] sm:$0xff]
    %v648 = vld [vmem:[#allocation11 + $0x3b4] sm:$0xf]
    %v649 = vld [vmem:[#allocation11 + $0x3b8] sm:$0xff]
    %v650 = vld [vmem:[#allocation11 + $0x3c0] sm:$0xff]
    %v651 = vld [vmem:[#allocation11 + $0x3c8] sm:$0xff]
    %v652 = vld [vmem:[#allocation11 + $0x3d0] sm:$0xf]
    %v653 = vld [vmem:[#allocation11 + $0x3d4] sm:$0xff]
    %v654 = vld [vmem:[#allocation11 + $0x3dc] sm:$0xff]
    %v655 = vld [vmem:[#allocation11 + $0x3e4] sm:$0xff]
    %v656 = vld [vmem:[#allocation11 + $0x3ec] sm:$0xf]
    %v657 = vld [vmem:[#allocation11 + $0x3f0] sm:$0xff]
    %v658 = vld [vmem:[#allocation11 + $0x3f8] sm:$0xff]
    %v659 = vld [vmem:[#allocation11 + $0x400] sm:$0xff]
    %v660 = vld [vmem:[#allocation11 + $0x408] sm:$0xf]
    %v661 = vld [vmem:[#allocation11 + $0x40c] sm:$0xff]
    %v662 = vld [vmem:[#allocation11 + $0x414] sm:$0xff]
    %v663 = vld [vmem:[#allocation11 + $0x41c] sm:$0xff]
    %v664 = vld [vmem:[#allocation11 + $0x424] sm:$0xf]
    %v665 = vld [vmem:[#allocation11 + $0x428] sm:$0xff]
    %v666 = vld [vmem:[#allocation11 + $0x430] sm:$0xff]
    %v667 = vld [vmem:[#allocation11 + $0x438] sm:$0xff]
    %v668 = vld [vmem:[#allocation11 + $0x440] sm:$0xf]
    %v669 = vld [vmem:[#allocation11 + $0x444] sm:$0xff]
    %v670 = vld [vmem:[#allocation11 + $0x44c] sm:$0xff]
    %v671 = vld [vmem:[#allocation11 + $0x454] sm:$0xff]
    %v672 = vld [vmem:[#allocation11 + $0x45c] sm:$0xf]
    %v673 = vld [vmem:[#allocation11 + $0x460] sm:$0xff]
    %v674 = vld [vmem:[#allocation11 + $0x468] sm:$0xff]
    %v675 = vld [vmem:[#allocation11 + $0x470] sm:$0xff]
    %v676 = vld [vmem:[#allocation11 + $0x478] sm:$0xf]
    %v677 = vld [vmem:[#allocation11 + $0x47c] sm:$0xff]
    %v678 = vld [vmem:[#allocation11 + $0x484] sm:$0xff]
    %v679 = vld [vmem:[#allocation11 + $0x48c] sm:$0xff]
    %v680 = vld [vmem:[#allocation11 + $0x494] sm:$0xf]
    %v681 = vld [vmem:[#allocation11 + $0x498] sm:$0xff]
    %v682 = vld [vmem:[#allocation11 + $0x4a0] sm:$0xff]
    %v683 = vld [vmem:[#allocation11 + $0x4a8] sm:$0xff]
    %v684 = vld [vmem:[#allocation11 + $0x4b0] sm:$0xf]
    %v685 = vld [vmem:[#allocation11 + $0x4b4] sm:$0xff]
    %v686 = vld [vmem:[#allocation11 + $0x4bc] sm:$0xff]
    %v687 = vld [vmem:[#allocation11 + $0x4c4] sm:$0xff]
    %v688 = vld [vmem:[#allocation11 + $0x4cc] sm:$0xf]
    %v689 = vld [vmem:[#allocation11 + $0x4d0] sm:$0xff]
    %v690 = vld [vmem:[#allocation11 + $0x4d8] sm:$0xff]
    %v691 = vld [vmem:[#allocation11 + $0x4e0] sm:$0xff]
    %v692 = vld [vmem:[#allocation11 + $0x4e8] sm:$0xf]
    %v693 = vld [vmem:[#allocation11 + $0x4ec] sm:$0xff]
    %v694 = vld [vmem:[#allocation11 + $0x4f4] sm:$0xff]
    %v695 = vld [vmem:[#allocation11 + $0x4fc] sm:$0xff]
    %v696 = vld [vmem:[#allocation11 + $0x504] sm:$0xf]
    %v697 = vld [vmem:[#allocation11 + $0x508] sm:$0xff]
    %v698 = vld [vmem:[#allocation11 + $0x510] sm:$0xff]
    %v699 = vld [vmem:[#allocation11 + $0x518] sm:$0xff]
    %v700 = vld [vmem:[#allocation11 + $0x520] sm:$0xf]
    %v701 = vld [vmem:[#allocation11 + $0x524] sm:$0xff]
    %v702 = vld [vmem:[#allocation11 + $0x52c] sm:$0xff]
    %v703 = vld [vmem:[#allocation11 + $0x534] sm:$0xff]
    %v704 = vld [vmem:[#allocation11 + $0x53c] sm:$0xf]
    %v705 = vld [vmem:[#allocation11 + $0x540] sm:$0xff]
    %v706 = vld [vmem:[#allocation11 + $0x548] sm:$0xff]
    %v707 = vld [vmem:[#allocation11 + $0x550] sm:$0xff]
    %v708 = vld [vmem:[#allocation11 + $0x558] sm:$0xf]
    %v709 = vld [vmem:[#allocation11 + $0x55c] sm:$0xff]
    %v710 = vld [vmem:[#allocation11 + $0x564] sm:$0xff]
    %v711 = vld [vmem:[#allocation11 + $0x56c] sm:$0xff]
    %v712 = vld [vmem:[#allocation11 + $0x574] sm:$0xf]
    %v713 = vld [vmem:[#allocation11 + $0x578] sm:$0xff]
    %v714 = vld [vmem:[#allocation11 + $0x580] sm:$0xff]
    %v715 = vld [vmem:[#allocation11 + $0x588] sm:$0xff]
    %v716 = vld [vmem:[#allocation11 + $0x590] sm:$0xf]
    %v717 = vld [vmem:[#allocation11 + $0x594] sm:$0xff]
    %v718 = vld [vmem:[#allocation11 + $0x59c] sm:$0xff]
    %v719 = vld [vmem:[#allocation11 + $0x5a4] sm:$0xff]
    %v720 = vld [vmem:[#allocation11 + $0x5ac] sm:$0xf]
    %v721 = vld [vmem:[#allocation11 + $0x5b0] sm:$0xff]
    %v722 = vld [vmem:[#allocation11 + $0x5b8] sm:$0xff]
    %v723 = vld [vmem:[#allocation11 + $0x5c0] sm:$0xff]
    %v724 = vld [vmem:[#allocation11 + $0x5c8] sm:$0xf]
    %v725 = vld [vmem:[#allocation11 + $0x5cc] sm:$0xff]
    %v726 = vld [vmem:[#allocation11 + $0x5d4] sm:$0xff]
    %v727 = vld [vmem:[#allocation11 + $0x5dc] sm:$0xff]
    %v728 = vld [vmem:[#allocation11 + $0x5e4] sm:$0xf]
    %v729 = vld [vmem:[#allocation11 + $0x5e8] sm:$0xff]
    %v730 = vld [vmem:[#allocation11 + $0x5f0] sm:$0xff]
    %v731 = vld [vmem:[#allocation11 + $0x5f8] sm:$0xff]
    %v732 = vld [vmem:[#allocation11 + $0x600] sm:$0xf]
    %v733 = vld [vmem:[#allocation11 + $0x604] sm:$0xff]
    %v734 = vld [vmem:[#allocation11 + $0x60c] sm:$0xff]
    %v735 = vld [vmem:[#allocation11 + $0x614] sm:$0xff]
    %v736 = vld [vmem:[#allocation11 + $0x61c] sm:$0xf]
    %v737 = vld [vmem:[#allocation11 + $0x620] sm:$0xff]
    %v738 = vld [vmem:[#allocation11 + $0x628] sm:$0xff]
    %v739 = vld [vmem:[#allocation11 + $0x630] sm:$0xff]
    %v740 = vld [vmem:[#allocation11 + $0x638] sm:$0xf]
    %v741 = vld [vmem:[#allocation11 + $0x63c] sm:$0xff]
    %v742 = vld [vmem:[#allocation11 + $0x644] sm:$0xff]
    %v743 = vld [vmem:[#allocation11 + $0x64c] sm:$0xff]
    %v744 = vld [vmem:[#allocation11 + $0x654] sm:$0xf]
    %v745 = vld [vmem:[#allocation11 + $0x658] sm:$0xff]
    %v746 = vld [vmem:[#allocation11 + $0x660] sm:$0xff]
    %v747 = vld [vmem:[#allocation11 + $0x668] sm:$0xff]
    %v748 = vld [vmem:[#allocation11 + $0x670] sm:$0xf]
    %v749 = vld [vmem:[#allocation11 + $0x674] sm:$0xff]
    %v750 = vld [vmem:[#allocation11 + $0x67c] sm:$0xff]
    %v751 = vld [vmem:[#allocation11 + $0x684] sm:$0xff]
    %v752 = vld [vmem:[#allocation11 + $0x68c] sm:$0xf]
    %v753 = vld [vmem:[#allocation11 + $0x690] sm:$0xff]
    %v754 = vld [vmem:[#allocation11 + $0x698] sm:$0xff]
    %v755 = vld [vmem:[#allocation11 + $0x6a0] sm:$0xff]
    %v756 = vld [vmem:[#allocation11 + $0x6a8] sm:$0xf]
    %v757 = vld [vmem:[#allocation11 + $0x6ac] sm:$0xff]
    %v758 = vld [vmem:[#allocation11 + $0x6b4] sm:$0xff]
    %v759 = vld [vmem:[#allocation11 + $0x6bc] sm:$0xff]
    %v760 = vld [vmem:[#allocation11 + $0x6c4] sm:$0xf]
    %v761 = vld [vmem:[#allocation11 + $0x6c8] sm:$0xff]
    %v762 = vld [vmem:[#allocation11 + $0x6d0] sm:$0xff]
    %v763 = vld [vmem:[#allocation11 + $0x6d8] sm:$0xff]
    %v764 = vld [vmem:[#allocation11 + $0x6e0] sm:$0xf]
    %v765 = vld [vmem:[#allocation11 + $0x6e4] sm:$0xff]
    %v766 = vld [vmem:[#allocation11 + $0x6ec] sm:$0xff]
    %v767 = vld [vmem:[#allocation11 + $0x6f4] sm:$0xff]
    %v768 = vld [vmem:[#allocation11 + $0x6fc] sm:$0xf]
    %v769 = vld [vmem:[#allocation13] sm:$0xff]
    %v771 = vlaneseq
    %v772 = vshrl.u32 %v771, 7
    %v773 = vsub.s32 0, %v772
    %v774 = vrot.slane %v769, %v773
    %v775 = vlaneseq
    %v776 = vshrl.u32 %v775, 7
    %v777 = vsub.s32 1, %v776
    %v778 = vrot.slane %v769, %v777
    %v779 = vlaneseq
    %v780 = vshrl.u32 %v779, 7
    %v781 = vsub.s32 2, %v780
    %v782 = vrot.slane %v769, %v781
    %v783 = vlaneseq
    %v784 = vshrl.u32 %v783, 7
    %v785 = vsub.s32 3, %v784
    %v786 = vrot.slane %v769, %v785
    %v787 = vlaneseq
    %v788 = vshrl.u32 %v787, 7
    %v789 = vsub.s32 4, %v788
    %v790 = vrot.slane %v769, %v789
    %v791 = vlaneseq
    %v792 = vshrl.u32 %v791, 7
    %v793 = vsub.s32 5, %v792
    %v794 = vrot.slane %v769, %v793
    %v795 = vlaneseq
    %v796 = vshrl.u32 %v795, 7
    %v797 = vsub.s32 6, %v796
    %v798 = vrot.slane %v769, %v797
    %v1062 = vunpack.c.l.b16 %v513
    %v1063 = vunpack.c.h.b16 %v513
    %v1064 = vunpack.c.l.b16 %v514
    %v1065 = vunpack.c.h.b16 %v514
    %v1066 = vunpack.c.l.b16 %v515
    %v1067 = vunpack.c.h.b16 %v515
    %v1068 = vunpack.c.l.b16 %v516
    %v1069 = vunpack.c.l.b16 %v517
    %v1070 = vunpack.c.h.b16 %v517
    %v1071 = vunpack.c.l.b16 %v518
    %v1072 = vunpack.c.h.b16 %v518
    %v1073 = vunpack.c.l.b16 %v519
    %v1074 = vunpack.c.h.b16 %v519
    %v1075 = vunpack.c.l.b16 %v520
    %v1076 = vunpack.c.l.b16 %v521
    %v1077 = vunpack.c.h.b16 %v521
    %v1078 = vunpack.c.l.b16 %v522
    %v1079 = vunpack.c.h.b16 %v522
    %v1080 = vunpack.c.l.b16 %v523
    %v1081 = vunpack.c.h.b16 %v523
    %v1082 = vunpack.c.l.b16 %v524
    %v1083 = vunpack.c.l.b16 %v525
    %v1084 = vunpack.c.h.b16 %v525
    %v1085 = vunpack.c.l.b16 %v526
    %v1086 = vunpack.c.h.b16 %v526
    %v1087 = vunpack.c.l.b16 %v527
    %v1088 = vunpack.c.h.b16 %v527
    %v1089 = vunpack.c.l.b16 %v528
    %v1090 = vunpack.c.l.b16 %v529
    %v1091 = vunpack.c.h.b16 %v529
    %v1092 = vunpack.c.l.b16 %v530
    %v1093 = vunpack.c.h.b16 %v530
    %v1094 = vunpack.c.l.b16 %v531
    %v1095 = vunpack.c.h.b16 %v531
    %v1096 = vunpack.c.l.b16 %v532
    %v1097 = vunpack.c.l.b16 %v533
    %v1098 = vunpack.c.h.b16 %v533
    %v1099 = vunpack.c.l.b16 %v534
    %v1100 = vunpack.c.h.b16 %v534
    %v1101 = vunpack.c.l.b16 %v535
    %v1102 = vunpack.c.h.b16 %v535
    %v1103 = vunpack.c.l.b16 %v536
    %v1104 = vunpack.c.l.b16 %v537
    %v1105 = vunpack.c.h.b16 %v537
    %v1106 = vunpack.c.l.b16 %v538
    %v1107 = vunpack.c.h.b16 %v538
    %v1108 = vunpack.c.l.b16 %v539
    %v1109 = vunpack.c.h.b16 %v539
    %v1110 = vunpack.c.l.b16 %v540
    %v1111 = vunpack.c.l.b16 %v541
    %v1112 = vunpack.c.h.b16 %v541
    %v1113 = vunpack.c.l.b16 %v542
    %v1114 = vunpack.c.h.b16 %v542
    %v1115 = vunpack.c.l.b16 %v543
    %v1116 = vunpack.c.h.b16 %v543
    %v1117 = vunpack.c.l.b16 %v544
    %v1118 = vunpack.c.l.b16 %v545
    %v1119 = vunpack.c.h.b16 %v545
    %v1120 = vunpack.c.l.b16 %v546
    %v1121 = vunpack.c.h.b16 %v546
    %v1122 = vunpack.c.l.b16 %v547
    %v1123 = vunpack.c.h.b16 %v547
    %v1124 = vunpack.c.l.b16 %v548
    %v1125 = vunpack.c.l.b16 %v549
    %v1126 = vunpack.c.h.b16 %v549
    %v1127 = vunpack.c.l.b16 %v550
    %v1128 = vunpack.c.h.b16 %v550
    %v1129 = vunpack.c.l.b16 %v551
    %v1130 = vunpack.c.h.b16 %v551
    %v1131 = vunpack.c.l.b16 %v552
    %v1132 = vunpack.c.l.b16 %v553
    %v1133 = vunpack.c.h.b16 %v553
    %v1134 = vunpack.c.l.b16 %v554
    %v1135 = vunpack.c.h.b16 %v554
    %v1136 = vunpack.c.l.b16 %v555
    %v1137 = vunpack.c.h.b16 %v555
    %v1138 = vunpack.c.l.b16 %v556
    %v1139 = vunpack.c.l.b16 %v557
    %v1140 = vunpack.c.h.b16 %v557
    %v1141 = vunpack.c.l.b16 %v558
    %v1142 = vunpack.c.h.b16 %v558
    %v1143 = vunpack.c.l.b16 %v559
    %v1144 = vunpack.c.h.b16 %v559
    %v1145 = vunpack.c.l.b16 %v560
    %v1146 = vunpack.c.l.b16 %v561
    %v1147 = vunpack.c.h.b16 %v561
    %v1148 = vunpack.c.l.b16 %v562
    %v1149 = vunpack.c.h.b16 %v562
    %v1150 = vunpack.c.l.b16 %v563
    %v1151 = vunpack.c.h.b16 %v563
    %v1152 = vunpack.c.l.b16 %v564
    %v1153 = vunpack.c.l.b16 %v565
    %v1154 = vunpack.c.h.b16 %v565
    %v1155 = vunpack.c.l.b16 %v566
    %v1156 = vunpack.c.h.b16 %v566
    %v1157 = vunpack.c.l.b16 %v567
    %v1158 = vunpack.c.h.b16 %v567
    %v1159 = vunpack.c.l.b16 %v568
    %v1160 = vunpack.c.l.b16 %v569
    %v1161 = vunpack.c.h.b16 %v569
    %v1162 = vunpack.c.l.b16 %v570
    %v1163 = vunpack.c.h.b16 %v570
    %v1164 = vunpack.c.l.b16 %v571
    %v1165 = vunpack.c.h.b16 %v571
    %v1166 = vunpack.c.l.b16 %v572
    %v1167 = vunpack.c.l.b16 %v573
    %v1168 = vunpack.c.h.b16 %v573
    %v1169 = vunpack.c.l.b16 %v574
    %v1170 = vunpack.c.h.b16 %v574
    %v1171 = vunpack.c.l.b16 %v575
    %v1172 = vunpack.c.h.b16 %v575
    %v1173 = vunpack.c.l.b16 %v576
    %v1174 = vunpack.c.l.b16 %v577
    %v1175 = vunpack.c.h.b16 %v577
    %v1176 = vunpack.c.l.b16 %v578
    %v1177 = vunpack.c.h.b16 %v578
    %v1178 = vunpack.c.l.b16 %v579
    %v1179 = vunpack.c.h.b16 %v579
    %v1180 = vunpack.c.l.b16 %v580
    %v1181 = vunpack.c.l.b16 %v581
    %v1182 = vunpack.c.h.b16 %v581
    %v1183 = vunpack.c.l.b16 %v582
    %v1184 = vunpack.c.h.b16 %v582
    %v1185 = vunpack.c.l.b16 %v583
    %v1186 = vunpack.c.h.b16 %v583
    %v1187 = vunpack.c.l.b16 %v584
    %v1188 = vunpack.c.l.b16 %v585
    %v1189 = vunpack.c.h.b16 %v585
    %v1190 = vunpack.c.l.b16 %v586
    %v1191 = vunpack.c.h.b16 %v586
    %v1192 = vunpack.c.l.b16 %v587
    %v1193 = vunpack.c.h.b16 %v587
    %v1194 = vunpack.c.l.b16 %v588
    %v1195 = vunpack.c.l.b16 %v589
    %v1196 = vunpack.c.h.b16 %v589
    %v1197 = vunpack.c.l.b16 %v590
    %v1198 = vunpack.c.h.b16 %v590
    %v1199 = vunpack.c.l.b16 %v591
    %v1200 = vunpack.c.h.b16 %v591
    %v1201 = vunpack.c.l.b16 %v592
    %v1202 = vunpack.c.l.b16 %v593
    %v1203 = vunpack.c.h.b16 %v593
    %v1204 = vunpack.c.l.b16 %v594
    %v1205 = vunpack.c.h.b16 %v594
    %v1206 = vunpack.c.l.b16 %v595
    %v1207 = vunpack.c.h.b16 %v595
    %v1208 = vunpack.c.l.b16 %v596
    %v1209 = vunpack.c.l.b16 %v597
    %v1210 = vunpack.c.h.b16 %v597
    %v1211 = vunpack.c.l.b16 %v598
    %v1212 = vunpack.c.h.b16 %v598
    %v1213 = vunpack.c.l.b16 %v599
    %v1214 = vunpack.c.h.b16 %v599
    %v1215 = vunpack.c.l.b16 %v600
    %v1216 = vunpack.c.l.b16 %v601
    %v1217 = vunpack.c.h.b16 %v601
    %v1218 = vunpack.c.l.b16 %v602
    %v1219 = vunpack.c.h.b16 %v602
    %v1220 = vunpack.c.l.b16 %v603
    %v1221 = vunpack.c.h.b16 %v603
    %v1222 = vunpack.c.l.b16 %v604
    %v1223 = vunpack.c.l.b16 %v605
    %v1224 = vunpack.c.h.b16 %v605
    %v1225 = vunpack.c.l.b16 %v606
    %v1226 = vunpack.c.h.b16 %v606
    %v1227 = vunpack.c.l.b16 %v607
    %v1228 = vunpack.c.h.b16 %v607
    %v1229 = vunpack.c.l.b16 %v608
    %v1230 = vunpack.c.l.b16 %v609
    %v1231 = vunpack.c.h.b16 %v609
    %v1232 = vunpack.c.l.b16 %v610
    %v1233 = vunpack.c.h.b16 %v610
    %v1234 = vunpack.c.l.b16 %v611
    %v1235 = vunpack.c.h.b16 %v611
    %v1236 = vunpack.c.l.b16 %v612
    %v1237 = vunpack.c.l.b16 %v613
    %v1238 = vunpack.c.h.b16 %v613
    %v1239 = vunpack.c.l.b16 %v614
    %v1240 = vunpack.c.h.b16 %v614
    %v1241 = vunpack.c.l.b16 %v615
    %v1242 = vunpack.c.h.b16 %v615
    %v1243 = vunpack.c.l.b16 %v616
    %v1244 = vunpack.c.l.b16 %v617
    %v1245 = vunpack.c.h.b16 %v617
    %v1246 = vunpack.c.l.b16 %v618
    %v1247 = vunpack.c.h.b16 %v618
    %v1248 = vunpack.c.l.b16 %v619
    %v1249 = vunpack.c.h.b16 %v619
    %v1250 = vunpack.c.l.b16 %v620
    %v1251 = vunpack.c.l.b16 %v621
    %v1252 = vunpack.c.h.b16 %v621
    %v1253 = vunpack.c.l.b16 %v622
    %v1254 = vunpack.c.h.b16 %v622
    %v1255 = vunpack.c.l.b16 %v623
    %v1256 = vunpack.c.h.b16 %v623
    %v1257 = vunpack.c.l.b16 %v624
    %v1258 = vunpack.c.l.b16 %v625
    %v1259 = vunpack.c.h.b16 %v625
    %v1260 = vunpack.c.l.b16 %v626
    %v1261 = vunpack.c.h.b16 %v626
    %v1262 = vunpack.c.l.b16 %v627
    %v1263 = vunpack.c.h.b16 %v627
    %v1264 = vunpack.c.l.b16 %v628
    %v1265 = vunpack.c.l.b16 %v629
    %v1266 = vunpack.c.h.b16 %v629
    %v1267 = vunpack.c.l.b16 %v630
    %v1268 = vunpack.c.h.b16 %v630
    %v1269 = vunpack.c.l.b16 %v631
    %v1270 = vunpack.c.h.b16 %v631
    %v1271 = vunpack.c.l.b16 %v632
    %v1272 = vunpack.c.l.b16 %v633
    %v1273 = vunpack.c.h.b16 %v633
    %v1274 = vunpack.c.l.b16 %v634
    %v1275 = vunpack.c.h.b16 %v634
    %v1276 = vunpack.c.l.b16 %v635
    %v1277 = vunpack.c.h.b16 %v635
    %v1278 = vunpack.c.l.b16 %v636
    %v1279 = vunpack.c.l.b16 %v637
    %v1280 = vunpack.c.h.b16 %v637
    %v1281 = vunpack.c.l.b16 %v638
    %v1282 = vunpack.c.h.b16 %v638
    %v1283 = vunpack.c.l.b16 %v639
    %v1284 = vunpack.c.h.b16 %v639
    %v1285 = vunpack.c.l.b16 %v640
    %v1286 = vunpack.c.l.b16 %v641
    %v1287 = vunpack.c.h.b16 %v641
    %v1288 = vunpack.c.l.b16 %v642
    %v1289 = vunpack.c.h.b16 %v642
    %v1290 = vunpack.c.l.b16 %v643
    %v1291 = vunpack.c.h.b16 %v643
    %v1292 = vunpack.c.l.b16 %v644
    %v1293 = vunpack.c.l.b16 %v645
    %v1294 = vunpack.c.h.b16 %v645
    %v1295 = vunpack.c.l.b16 %v646
    %v1296 = vunpack.c.h.b16 %v646
    %v1297 = vunpack.c.l.b16 %v647
    %v1298 = vunpack.c.h.b16 %v647
    %v1299 = vunpack.c.l.b16 %v648
    %v1300 = vunpack.c.l.b16 %v649
    %v1301 = vunpack.c.h.b16 %v649
    %v1302 = vunpack.c.l.b16 %v650
    %v1303 = vunpack.c.h.b16 %v650
    %v1304 = vunpack.c.l.b16 %v651
    %v1305 = vunpack.c.h.b16 %v651
    %v1306 = vunpack.c.l.b16 %v652
    %v1307 = vunpack.c.l.b16 %v653
    %v1308 = vunpack.c.h.b16 %v653
    %v1309 = vunpack.c.l.b16 %v654
    %v1310 = vunpack.c.h.b16 %v654
    %v1311 = vunpack.c.l.b16 %v655
    %v1312 = vunpack.c.h.b16 %v655
    %v1313 = vunpack.c.l.b16 %v656
    %v1314 = vunpack.c.l.b16 %v657
    %v1315 = vunpack.c.h.b16 %v657
    %v1316 = vunpack.c.l.b16 %v658
    %v1317 = vunpack.c.h.b16 %v658
    %v1318 = vunpack.c.l.b16 %v659
    %v1319 = vunpack.c.h.b16 %v659
    %v1320 = vunpack.c.l.b16 %v660
    %v1321 = vunpack.c.l.b16 %v661
    %v1322 = vunpack.c.h.b16 %v661
    %v1323 = vunpack.c.l.b16 %v662
    %v1324 = vunpack.c.h.b16 %v662
    %v1325 = vunpack.c.l.b16 %v663
    %v1326 = vunpack.c.h.b16 %v663
    %v1327 = vunpack.c.l.b16 %v664
    %v1328 = vunpack.c.l.b16 %v665
    %v1329 = vunpack.c.h.b16 %v665
    %v1330 = vunpack.c.l.b16 %v666
    %v1331 = vunpack.c.h.b16 %v666
    %v1332 = vunpack.c.l.b16 %v667
    %v1333 = vunpack.c.h.b16 %v667
    %v1334 = vunpack.c.l.b16 %v668
    %v1335 = vunpack.c.l.b16 %v669
    %v1336 = vunpack.c.h.b16 %v669
    %v1337 = vunpack.c.l.b16 %v670
    %v1338 = vunpack.c.h.b16 %v670
    %v1339 = vunpack.c.l.b16 %v671
    %v1340 = vunpack.c.h.b16 %v671
    %v1341 = vunpack.c.l.b16 %v672
    %v1342 = vunpack.c.l.b16 %v673
    %v1343 = vunpack.c.h.b16 %v673
    %v1344 = vunpack.c.l.b16 %v674
    %v1345 = vunpack.c.h.b16 %v674
    %v1346 = vunpack.c.l.b16 %v675
    %v1347 = vunpack.c.h.b16 %v675
    %v1348 = vunpack.c.l.b16 %v676
    %v1349 = vunpack.c.l.b16 %v677
    %v1350 = vunpack.c.h.b16 %v677
    %v1351 = vunpack.c.l.b16 %v678
    %v1352 = vunpack.c.h.b16 %v678
    %v1353 = vunpack.c.l.b16 %v679
    %v1354 = vunpack.c.h.b16 %v679
    %v1355 = vunpack.c.l.b16 %v680
    %v1356 = vunpack.c.l.b16 %v681
    %v1357 = vunpack.c.h.b16 %v681
    %v1358 = vunpack.c.l.b16 %v682
    %v1359 = vunpack.c.h.b16 %v682
    %v1360 = vunpack.c.l.b16 %v683
    %v1361 = vunpack.c.h.b16 %v683
    %v1362 = vunpack.c.l.b16 %v684
    %v1363 = vunpack.c.l.b16 %v685
    %v1364 = vunpack.c.h.b16 %v685
    %v1365 = vunpack.c.l.b16 %v686
    %v1366 = vunpack.c.h.b16 %v686
    %v1367 = vunpack.c.l.b16 %v687
    %v1368 = vunpack.c.h.b16 %v687
    %v1369 = vunpack.c.l.b16 %v688
    %v1370 = vunpack.c.l.b16 %v689
    %v1371 = vunpack.c.h.b16 %v689
    %v1372 = vunpack.c.l.b16 %v690
    %v1373 = vunpack.c.h.b16 %v690
    %v1374 = vunpack.c.l.b16 %v691
    %v1375 = vunpack.c.h.b16 %v691
    %v1376 = vunpack.c.l.b16 %v692
    %v1377 = vunpack.c.l.b16 %v693
    %v1378 = vunpack.c.h.b16 %v693
    %v1379 = vunpack.c.l.b16 %v694
    %v1380 = vunpack.c.h.b16 %v694
    %v1381 = vunpack.c.l.b16 %v695
    %v1382 = vunpack.c.h.b16 %v695
    %v1383 = vunpack.c.l.b16 %v696
    %v1384 = vunpack.c.l.b16 %v697
    %v1385 = vunpack.c.h.b16 %v697
    %v1386 = vunpack.c.l.b16 %v698
    %v1387 = vunpack.c.h.b16 %v698
    %v1388 = vunpack.c.l.b16 %v699
    %v1389 = vunpack.c.h.b16 %v699
    %v1390 = vunpack.c.l.b16 %v700
    %v1391 = vunpack.c.l.b16 %v701
    %v1392 = vunpack.c.h.b16 %v701
    %v1393 = vunpack.c.l.b16 %v702
    %v1394 = vunpack.c.h.b16 %v702
    %v1395 = vunpack.c.l.b16 %v703
    %v1396 = vunpack.c.h.b16 %v703
    %v1397 = vunpack.c.l.b16 %v704
    %v1398 = vunpack.c.l.b16 %v705
    %v1399 = vunpack.c.h.b16 %v705
    %v1400 = vunpack.c.l.b16 %v706
    %v1401 = vunpack.c.h.b16 %v706
    %v1402 = vunpack.c.l.b16 %v707
    %v1403 = vunpack.c.h.b16 %v707
    %v1404 = vunpack.c.l.b16 %v708
    %v1405 = vunpack.c.l.b16 %v709
    %v1406 = vunpack.c.h.b16 %v709
    %v1407 = vunpack.c.l.b16 %v710
    %v1408 = vunpack.c.h.b16 %v710
    %v1409 = vunpack.c.l.b16 %v711
    %v1410 = vunpack.c.h.b16 %v711
    %v1411 = vunpack.c.l.b16 %v712
    %v1412 = vunpack.c.l.b16 %v713
    %v1413 = vunpack.c.h.b16 %v713
    %v1414 = vunpack.c.l.b16 %v714
    %v1415 = vunpack.c.h.b16 %v714
    %v1416 = vunpack.c.l.b16 %v715
    %v1417 = vunpack.c.h.b16 %v715
    %v1418 = vunpack.c.l.b16 %v716
    %v1419 = vunpack.c.l.b16 %v717
    %v1420 = vunpack.c.h.b16 %v717
    %v1421 = vunpack.c.l.b16 %v718
    %v1422 = vunpack.c.h.b16 %v718
    %v1423 = vunpack.c.l.b16 %v719
    %v1424 = vunpack.c.h.b16 %v719
    %v1425 = vunpack.c.l.b16 %v720
    %v1426 = vunpack.c.l.b16 %v721
    %v1427 = vunpack.c.h.b16 %v721
    %v1428 = vunpack.c.l.b16 %v722
    %v1429 = vunpack.c.h.b16 %v722
    %v1430 = vunpack.c.l.b16 %v723
    %v1431 = vunpack.c.h.b16 %v723
    %v1432 = vunpack.c.l.b16 %v724
    %v1433 = vunpack.c.l.b16 %v725
    %v1434 = vunpack.c.h.b16 %v725
    %v1435 = vunpack.c.l.b16 %v726
    %v1436 = vunpack.c.h.b16 %v726
    %v1437 = vunpack.c.l.b16 %v727
    %v1438 = vunpack.c.h.b16 %v727
    %v1439 = vunpack.c.l.b16 %v728
    %v1440 = vunpack.c.l.b16 %v729
    %v1441 = vunpack.c.h.b16 %v729
    %v1442 = vunpack.c.l.b16 %v730
    %v1443 = vunpack.c.h.b16 %v730
    %v1444 = vunpack.c.l.b16 %v731
    %v1445 = vunpack.c.h.b16 %v731
    %v1446 = vunpack.c.l.b16 %v732
    %v1447 = vunpack.c.l.b16 %v733
    %v1448 = vunpack.c.h.b16 %v733
    %v1449 = vunpack.c.l.b16 %v734
    %v1450 = vunpack.c.h.b16 %v734
    %v1451 = vunpack.c.l.b16 %v735
    %v1452 = vunpack.c.h.b16 %v735
    %v1453 = vunpack.c.l.b16 %v736
    %v1454 = vunpack.c.l.b16 %v737
    %v1455 = vunpack.c.h.b16 %v737
    %v1456 = vunpack.c.l.b16 %v738
    %v1457 = vunpack.c.h.b16 %v738
    %v1458 = vunpack.c.l.b16 %v739
    %v1459 = vunpack.c.h.b16 %v739
    %v1460 = vunpack.c.l.b16 %v740
    %v1461 = vunpack.c.l.b16 %v741
    %v1462 = vunpack.c.h.b16 %v741
    %v1463 = vunpack.c.l.b16 %v742
    %v1464 = vunpack.c.h.b16 %v742
    %v1465 = vunpack.c.l.b16 %v743
    %v1466 = vunpack.c.h.b16 %v743
    %v1467 = vunpack.c.l.b16 %v744
    %v1468 = vunpack.c.l.b16 %v745
    %v1469 = vunpack.c.h.b16 %v745
    %v1470 = vunpack.c.l.b16 %v746
    %v1471 = vunpack.c.h.b16 %v746
    %v1472 = vunpack.c.l.b16 %v747
    %v1473 = vunpack.c.h.b16 %v747
    %v1474 = vunpack.c.l.b16 %v748
    %v1475 = vunpack.c.l.b16 %v749
    %v1476 = vunpack.c.h.b16 %v749
    %v1477 = vunpack.c.l.b16 %v750
    %v1478 = vunpack.c.h.b16 %v750
    %v1479 = vunpack.c.l.b16 %v751
    %v1480 = vunpack.c.h.b16 %v751
    %v1481 = vunpack.c.l.b16 %v752
    %v1482 = vunpack.c.l.b16 %v753
    %v1483 = vunpack.c.h.b16 %v753
    %v1484 = vunpack.c.l.b16 %v754
    %v1485 = vunpack.c.h.b16 %v754
    %v1486 = vunpack.c.l.b16 %v755
    %v1487 = vunpack.c.h.b16 %v755
    %v1488 = vunpack.c.l.b16 %v756
    %v1489 = vunpack.c.l.b16 %v757
    %v1490 = vunpack.c.h.b16 %v757
    %v1491 = vunpack.c.l.b16 %v758
    %v1492 = vunpack.c.h.b16 %v758
    %v1493 = vunpack.c.l.b16 %v759
    %v1494 = vunpack.c.h.b16 %v759
    %v1495 = vunpack.c.l.b16 %v760
    %v1496 = vunpack.c.l.b16 %v761
    %v1497 = vunpack.c.h.b16 %v761
    %v1498 = vunpack.c.l.b16 %v762
    %v1499 = vunpack.c.h.b16 %v762
    %v1500 = vunpack.c.l.b16 %v763
    %v1501 = vunpack.c.h.b16 %v763
    %v1502 = vunpack.c.l.b16 %v764
    %v1503 = vunpack.c.l.b16 %v765
    %v1504 = vunpack.c.h.b16 %v765
    %v1505 = vunpack.c.l.b16 %v766
    %v1506 = vunpack.c.h.b16 %v766
    %v1507 = vunpack.c.l.b16 %v767
    %v1508 = vunpack.c.h.b16 %v767
    %v1509 = vunpack.c.l.b16 %v768
    %v1510 = vpack.c.b16 %v1069, %v1062
    %v1511 = vpack.c.b16 %v1070, %v1063
    %v1512 = vpack.c.b16 %v1071, %v1064
    %v1513 = vpack.c.b16 %v1072, %v1065
    %v1514 = vpack.c.b16 %v1073, %v1066
    %v1515 = vpack.c.b16 %v1074, %v1067
    %v1516 = vpack.c.b16 %v1075, %v1068
    %v1517 = vpack.c.b16 %v1083, %v1076
    %v1518 = vpack.c.b16 %v1084, %v1077
    %v1519 = vpack.c.b16 %v1085, %v1078
    %v1520 = vpack.c.b16 %v1086, %v1079
    %v1521 = vpack.c.b16 %v1087, %v1080
    %v1522 = vpack.c.b16 %v1088, %v1081
    %v1523 = vpack.c.b16 %v1089, %v1082
    %v1524 = vpack.c.b16 %v1097, %v1090
    %v1525 = vpack.c.b16 %v1098, %v1091
    %v1526 = vpack.c.b16 %v1099, %v1092
    %v1527 = vpack.c.b16 %v1100, %v1093
    %v1528 = vpack.c.b16 %v1101, %v1094
    %v1529 = vpack.c.b16 %v1102, %v1095
    %v1530 = vpack.c.b16 %v1103, %v1096
    %v1531 = vpack.c.b16 %v1111, %v1104
    %v1532 = vpack.c.b16 %v1112, %v1105
    %v1533 = vpack.c.b16 %v1113, %v1106
    %v1534 = vpack.c.b16 %v1114, %v1107
    %v1535 = vpack.c.b16 %v1115, %v1108
    %v1536 = vpack.c.b16 %v1116, %v1109
    %v1537 = vpack.c.b16 %v1117, %v1110
    %v1538 = vpack.c.b16 %v1125, %v1118
    %v1539 = vpack.c.b16 %v1126, %v1119
    %v1540 = vpack.c.b16 %v1127, %v1120
    %v1541 = vpack.c.b16 %v1128, %v1121
    %v1542 = vpack.c.b16 %v1129, %v1122
    %v1543 = vpack.c.b16 %v1130, %v1123
    %v1544 = vpack.c.b16 %v1131, %v1124
    %v1545 = vpack.c.b16 %v1139, %v1132
    %v1546 = vpack.c.b16 %v1140, %v1133
    %v1547 = vpack.c.b16 %v1141, %v1134
    %v1548 = vpack.c.b16 %v1142, %v1135
    %v1549 = vpack.c.b16 %v1143, %v1136
    %v1550 = vpack.c.b16 %v1144, %v1137
    %v1551 = vpack.c.b16 %v1145, %v1138
    %v1552 = vpack.c.b16 %v1153, %v1146
    %v1553 = vpack.c.b16 %v1154, %v1147
    %v1554 = vpack.c.b16 %v1155, %v1148
    %v1555 = vpack.c.b16 %v1156, %v1149
    %v1556 = vpack.c.b16 %v1157, %v1150
    %v1557 = vpack.c.b16 %v1158, %v1151
    %v1558 = vpack.c.b16 %v1159, %v1152
    %v1559 = vpack.c.b16 %v1167, %v1160
    %v1560 = vpack.c.b16 %v1168, %v1161
    %v1561 = vpack.c.b16 %v1169, %v1162
    %v1562 = vpack.c.b16 %v1170, %v1163
    %v1563 = vpack.c.b16 %v1171, %v1164
    %v1564 = vpack.c.b16 %v1172, %v1165
    %v1565 = vpack.c.b16 %v1173, %v1166
    %v1566 = vpack.c.b16 %v1181, %v1174
    %v1567 = vpack.c.b16 %v1182, %v1175
    %v1568 = vpack.c.b16 %v1183, %v1176
    %v1569 = vpack.c.b16 %v1184, %v1177
    %v1570 = vpack.c.b16 %v1185, %v1178
    %v1571 = vpack.c.b16 %v1186, %v1179
    %v1572 = vpack.c.b16 %v1187, %v1180
    %v1573 = vpack.c.b16 %v1195, %v1188
    %v1574 = vpack.c.b16 %v1196, %v1189
    %v1575 = vpack.c.b16 %v1197, %v1190
    %v1576 = vpack.c.b16 %v1198, %v1191
    %v1577 = vpack.c.b16 %v1199, %v1192
    %v1578 = vpack.c.b16 %v1200, %v1193
    %v1579 = vpack.c.b16 %v1201, %v1194
    %v1580 = vpack.c.b16 %v1209, %v1202
    %v1581 = vpack.c.b16 %v1210, %v1203
    %v1582 = vpack.c.b16 %v1211, %v1204
    %v1583 = vpack.c.b16 %v1212, %v1205
    %v1584 = vpack.c.b16 %v1213, %v1206
    %v1585 = vpack.c.b16 %v1214, %v1207
    %v1586 = vpack.c.b16 %v1215, %v1208
    %v1587 = vpack.c.b16 %v1223, %v1216
    %v1588 = vpack.c.b16 %v1224, %v1217
    %v1589 = vpack.c.b16 %v1225, %v1218
    %v1590 = vpack.c.b16 %v1226, %v1219
    %v1591 = vpack.c.b16 %v1227, %v1220
    %v1592 = vpack.c.b16 %v1228, %v1221
    %v1593 = vpack.c.b16 %v1229, %v1222
    %v1594 = vpack.c.b16 %v1237, %v1230
    %v1595 = vpack.c.b16 %v1238, %v1231
    %v1596 = vpack.c.b16 %v1239, %v1232
    %v1597 = vpack.c.b16 %v1240, %v1233
    %v1598 = vpack.c.b16 %v1241, %v1234
    %v1599 = vpack.c.b16 %v1242, %v1235
    %v1600 = vpack.c.b16 %v1243, %v1236
    %v1601 = vpack.c.b16 %v1251, %v1244
    %v1602 = vpack.c.b16 %v1252, %v1245
    %v1603 = vpack.c.b16 %v1253, %v1246
    %v1604 = vpack.c.b16 %v1254, %v1247
    %v1605 = vpack.c.b16 %v1255, %v1248
    %v1606 = vpack.c.b16 %v1256, %v1249
    %v1607 = vpack.c.b16 %v1257, %v1250
    %v1608 = vpack.c.b16 %v1265, %v1258
    %v1609 = vpack.c.b16 %v1266, %v1259
    %v1610 = vpack.c.b16 %v1267, %v1260
    %v1611 = vpack.c.b16 %v1268, %v1261
    %v1612 = vpack.c.b16 %v1269, %v1262
    %v1613 = vpack.c.b16 %v1270, %v1263
    %v1614 = vpack.c.b16 %v1271, %v1264
    %v1615 = vpack.c.b16 %v1279, %v1272
    %v1616 = vpack.c.b16 %v1280, %v1273
    %v1617 = vpack.c.b16 %v1281, %v1274
    %v1618 = vpack.c.b16 %v1282, %v1275
    %v1619 = vpack.c.b16 %v1283, %v1276
    %v1620 = vpack.c.b16 %v1284, %v1277
    %v1621 = vpack.c.b16 %v1285, %v1278
    %v1622 = vpack.c.b16 %v1293, %v1286
    %v1623 = vpack.c.b16 %v1294, %v1287
    %v1624 = vpack.c.b16 %v1295, %v1288
    %v1625 = vpack.c.b16 %v1296, %v1289
    %v1626 = vpack.c.b16 %v1297, %v1290
    %v1627 = vpack.c.b16 %v1298, %v1291
    %v1628 = vpack.c.b16 %v1299, %v1292
    %v1629 = vpack.c.b16 %v1307, %v1300
    %v1630 = vpack.c.b16 %v1308, %v1301
    %v1631 = vpack.c.b16 %v1309, %v1302
    %v1632 = vpack.c.b16 %v1310, %v1303
    %v1633 = vpack.c.b16 %v1311, %v1304
    %v1634 = vpack.c.b16 %v1312, %v1305
    %v1635 = vpack.c.b16 %v1313, %v1306
    %v1636 = vpack.c.b16 %v1321, %v1314
    %v1637 = vpack.c.b16 %v1322, %v1315
    %v1638 = vpack.c.b16 %v1323, %v1316
    %v1639 = vpack.c.b16 %v1324, %v1317
    %v1640 = vpack.c.b16 %v1325, %v1318
    %v1641 = vpack.c.b16 %v1326, %v1319
    %v1642 = vpack.c.b16 %v1327, %v1320
    %v1643 = vpack.c.b16 %v1335, %v1328
    %v1644 = vpack.c.b16 %v1336, %v1329
    %v1645 = vpack.c.b16 %v1337, %v1330
    %v1646 = vpack.c.b16 %v1338, %v1331
    %v1647 = vpack.c.b16 %v1339, %v1332
    %v1648 = vpack.c.b16 %v1340, %v1333
    %v1649 = vpack.c.b16 %v1341, %v1334
    %v1650 = vpack.c.b16 %v1349, %v1342
    %v1651 = vpack.c.b16 %v1350, %v1343
    %v1652 = vpack.c.b16 %v1351, %v1344
    %v1653 = vpack.c.b16 %v1352, %v1345
    %v1654 = vpack.c.b16 %v1353, %v1346
    %v1655 = vpack.c.b16 %v1354, %v1347
    %v1656 = vpack.c.b16 %v1355, %v1348
    %v1657 = vpack.c.b16 %v1363, %v1356
    %v1658 = vpack.c.b16 %v1364, %v1357
    %v1659 = vpack.c.b16 %v1365, %v1358
    %v1660 = vpack.c.b16 %v1366, %v1359
    %v1661 = vpack.c.b16 %v1367, %v1360
    %v1662 = vpack.c.b16 %v1368, %v1361
    %v1663 = vpack.c.b16 %v1369, %v1362
    %v1664 = vpack.c.b16 %v1377, %v1370
    %v1665 = vpack.c.b16 %v1378, %v1371
    %v1666 = vpack.c.b16 %v1379, %v1372
    %v1667 = vpack.c.b16 %v1380, %v1373
    %v1668 = vpack.c.b16 %v1381, %v1374
    %v1669 = vpack.c.b16 %v1382, %v1375
    %v1670 = vpack.c.b16 %v1383, %v1376
    %v1671 = vpack.c.b16 %v1391, %v1384
    %v1672 = vpack.c.b16 %v1392, %v1385
    %v1673 = vpack.c.b16 %v1393, %v1386
    %v1674 = vpack.c.b16 %v1394, %v1387
    %v1675 = vpack.c.b16 %v1395, %v1388
    %v1676 = vpack.c.b16 %v1396, %v1389
    %v1677 = vpack.c.b16 %v1397, %v1390
    %v1678 = vpack.c.b16 %v1405, %v1398
    %v1679 = vpack.c.b16 %v1406, %v1399
    %v1680 = vpack.c.b16 %v1407, %v1400
    %v1681 = vpack.c.b16 %v1408, %v1401
    %v1682 = vpack.c.b16 %v1409, %v1402
    %v1683 = vpack.c.b16 %v1410, %v1403
    %v1684 = vpack.c.b16 %v1411, %v1404
    %v1685 = vpack.c.b16 %v1419, %v1412
    %v1686 = vpack.c.b16 %v1420, %v1413
    %v1687 = vpack.c.b16 %v1421, %v1414
    %v1688 = vpack.c.b16 %v1422, %v1415
    %v1689 = vpack.c.b16 %v1423, %v1416
    %v1690 = vpack.c.b16 %v1424, %v1417
    %v1691 = vpack.c.b16 %v1425, %v1418
    %v1692 = vpack.c.b16 %v1433, %v1426
    %v1693 = vpack.c.b16 %v1434, %v1427
    %v1694 = vpack.c.b16 %v1435, %v1428
    %v1695 = vpack.c.b16 %v1436, %v1429
    %v1696 = vpack.c.b16 %v1437, %v1430
    %v1697 = vpack.c.b16 %v1438, %v1431
    %v1698 = vpack.c.b16 %v1439, %v1432
    %v1699 = vpack.c.b16 %v1447, %v1440
    %v1700 = vpack.c.b16 %v1448, %v1441
    %v1701 = vpack.c.b16 %v1449, %v1442
    %v1702 = vpack.c.b16 %v1450, %v1443
    %v1703 = vpack.c.b16 %v1451, %v1444
    %v1704 = vpack.c.b16 %v1452, %v1445
    %v1705 = vpack.c.b16 %v1453, %v1446
    %v1706 = vpack.c.b16 %v1461, %v1454
    %v1707 = vpack.c.b16 %v1462, %v1455
    %v1708 = vpack.c.b16 %v1463, %v1456
    %v1709 = vpack.c.b16 %v1464, %v1457
    %v1710 = vpack.c.b16 %v1465, %v1458
    %v1711 = vpack.c.b16 %v1466, %v1459
    %v1712 = vpack.c.b16 %v1467, %v1460
    %v1713 = vpack.c.b16 %v1475, %v1468
    %v1714 = vpack.c.b16 %v1476, %v1469
    %v1715 = vpack.c.b16 %v1477, %v1470
    %v1716 = vpack.c.b16 %v1478, %v1471
    %v1717 = vpack.c.b16 %v1479, %v1472
    %v1718 = vpack.c.b16 %v1480, %v1473
    %v1719 = vpack.c.b16 %v1481, %v1474
    %v1720 = vpack.c.b16 %v1489, %v1482
    %v1721 = vpack.c.b16 %v1490, %v1483
    %v1722 = vpack.c.b16 %v1491, %v1484
    %v1723 = vpack.c.b16 %v1492, %v1485
    %v1724 = vpack.c.b16 %v1493, %v1486
    %v1725 = vpack.c.b16 %v1494, %v1487
    %v1726 = vpack.c.b16 %v1495, %v1488
    %v1727 = vpack.c.b16 %v1503, %v1496
    %v1728 = vpack.c.b16 %v1504, %v1497
    %v1729 = vpack.c.b16 %v1505, %v1498
    %v1730 = vpack.c.b16 %v1506, %v1499
    %v1731 = vpack.c.b16 %v1507, %v1500
    %v1732 = vpack.c.b16 %v1508, %v1501
    %v1733 = vpack.c.b16 %v1509, %v1502
    %1958 = vmatprep.subr.bf16.mxu0 %v1511
    %1959 = vmatpush1.bf16.msra.mxu0 %v1510
    %1960 = vmatprep.subr.bf16.mxu0 %v1518
    %1961 = vmatpush1.bf16.msra.mxu0 %v1517
    %1962 = vmatprep.subr.bf16.mxu0 %v1525
    %1963 = vmatpush1.bf16.msra.mxu0 %v1524
    %1964 = vmatprep.subr.bf16.mxu0 %v1532
    %1965 = vmatpush1.bf16.msra.mxu0 %v1531
    %1966 = vmatprep.subr.bf16.mxu0 %v1539
    %1967 = vmatpush1.bf16.msra.mxu0 %v1538
    %1968 = vmatprep.subr.bf16.mxu0 %v1546
    %1969 = vmatpush1.bf16.msra.mxu0 %v1545
    %1970 = vmatprep.subr.bf16.mxu0 %v1553
    %1971 = vmatpush1.bf16.msra.mxu0 %v1552
    %1972 = vmatprep.subr.bf16.mxu0 %v1560
    %1973 = vmatpush1.bf16.msra.mxu0 %v1559
    %1974 = vmatprep.subr.bf16.mxu0 %v1567
    %1975 = vmatpush1.bf16.msra.mxu0 %v1566
    %1976 = vmatprep.subr.bf16.mxu0 %v1574
    %1977 = vmatpush1.bf16.msra.mxu0 %v1573
    %1978 = vmatprep.subr.bf16.mxu0 %v1581
    %1979 = vmatpush1.bf16.msra.mxu0 %v1580
    %1980 = vmatprep.subr.bf16.mxu0 %v1588
    %1981 = vmatpush1.bf16.msra.mxu0 %v1587
    %1982 = vmatprep.subr.bf16.mxu0 %v1595
    %1983 = vmatpush1.bf16.msra.mxu0 %v1594
    %1984 = vmatprep.subr.bf16.mxu0 %v1602
    %1985 = vmatpush1.bf16.msra.mxu0 %v1601
    %1986 = vmatprep.subr.bf16.mxu0 %v1609
    %1987 = vmatpush1.bf16.msra.mxu0 %v1608
    %1988 = vmatprep.subr.bf16.mxu0 %v1616
    %1989 = vmatpush1.bf16.msra.mxu0 %v1615
    %1990 = vmatprep.mubr.bf16.mxu0 %v510
    %1991 = vmatmul.mubr.bf16.gmra.mrb[0].mxu0 %v509
    %v1992 = vpop.f32.mrb[0].mxu0
    %v1993 = vadd.f32 %v774, %v1992
    %v1994 = vpop.f32.mrb[0].mxu0
    %v1995 = vadd.f32 %v778, %v1994
    %v1996 = vpop.f32.mrb[0].mxu0
    %v1997 = vpop.f32.mrb[0].mxu0
    %1998 = vdwg.mxu0
    %1999 = vmatprep.subr.bf16.mxu0 %v1623
    %2000 = vmatpush1.bf16.msra.mxu0 %v1622
    %2001 = vmatprep.subr.bf16.mxu0 %v1630
    %2002 = vmatpush1.bf16.msra.mxu0 %v1629
    %2003 = vmatprep.subr.bf16.mxu0 %v1637
    %2004 = vmatpush1.bf16.msra.mxu0 %v1636
    %2005 = vmatprep.subr.bf16.mxu0 %v1644
    %2006 = vmatpush1.bf16.msra.mxu0 %v1643
    %2007 = vmatprep.subr.bf16.mxu0 %v1651
    %2008 = vmatpush1.bf16.msra.mxu0 %v1650
    %2009 = vmatprep.subr.bf16.mxu0 %v1658
    %2010 = vmatpush1.bf16.msra.mxu0 %v1657
    %2011 = vmatprep.subr.bf16.mxu0 %v1665
    %2012 = vmatpush1.bf16.msra.mxu0 %v1664
    %2013 = vmatprep.subr.bf16.mxu0 %v1672
    %2014 = vmatpush1.bf16.msra.mxu0 %v1671
    %2015 = vmatprep.subr.bf16.mxu0 %v1679
    %2016 = vmatpush1.bf16.msra.mxu0 %v1678
    %2017 = vmatprep.subr.bf16.mxu0 %v1686
    %2018 = vmatpush1.bf16.msra.mxu0 %v1685
    %2019 = vmatprep.subr.bf16.mxu0 %v1693
    %2020 = vmatpush1.bf16.msra.mxu0 %v1692
    %2021 = vmatprep.subr.bf16.mxu0 %v1700
    %2022 = vmatpush1.bf16.msra.mxu0 %v1699
    %2023 = vmatprep.subr.bf16.mxu0 %v1707
    %2024 = vmatpush1.bf16.msra.mxu0 %v1706
    %2025 = vmatprep.subr.bf16.mxu0 %v1714
    %2026 = vmatpush1.bf16.msra.mxu0 %v1713
    %2027 = vmatprep.subr.bf16.mxu0 %v1721
    %2028 = vmatpush1.bf16.msra.mxu0 %v1720
    %2029 = vmatprep.subr.bf16.mxu0 %v1728
    %2030 = vmatpush1.bf16.msra.mxu0 %v1727
    %2031 = vmatprep.mubr.bf16.mxu0 %v512
    %2032 = vmatmul.mubr.bf16.gmra.mrb[0].mxu0 %v511
    %v2033 = vpop.f32.mrb[0].mxu0
    %v2034 = vadd.f32 %v1993, %v2033
    %v2035 = vpop.f32.mrb[0].mxu0
    %v2036 = vadd.f32 %v1995, %v2035
    %v2037 = vpop.f32.mrb[0].mxu0
    %v2038 = vpop.f32.mrb[0].mxu0
    %2039 = vdwg.mxu0
    %2040 = vmatprep.subr.bf16.mxu0 %v1513
    %2041 = vmatpush1.bf16.msra.mxu0 %v1512
    %2042 = vmatprep.subr.bf16.mxu0 %v1520
    %2043 = vmatpush1.bf16.msra.mxu0 %v1519
    %2044 = vmatprep.subr.bf16.mxu0 %v1527
    %2045 = vmatpush1.bf16.msra.mxu0 %v1526
    %2046 = vmatprep.subr.bf16.mxu0 %v1534
    %2047 = vmatpush1.bf16.msra.mxu0 %v1533
    %2048 = vmatprep.subr.bf16.mxu0 %v1541
    %2049 = vmatpush1.bf16.msra.mxu0 %v1540
    %2050 = vmatprep.subr.bf16.mxu0 %v1548
    %2051 = vmatpush1.bf16.msra.mxu0 %v1547
    %2052 = vmatprep.subr.bf16.mxu0 %v1555
    %2053 = vmatpush1.bf16.msra.mxu0 %v1554
    %2054 = vmatprep.subr.bf16.mxu0 %v1562
    %2055 = vmatpush1.bf16.msra.mxu0 %v1561
    %2056 = vmatprep.subr.bf16.mxu0 %v1569
    %2057 = vmatpush1.bf16.msra.mxu0 %v1568
    %2058 = vmatprep.subr.bf16.mxu0 %v1576
    %2059 = vmatpush1.bf16.msra.mxu0 %v1575
    %2060 = vmatprep.subr.bf16.mxu0 %v1583
    %2061 = vmatpush1.bf16.msra.mxu0 %v1582
    %2062 = vmatprep.subr.bf16.mxu0 %v1590
    %2063 = vmatpush1.bf16.msra.mxu0 %v1589
    %2064 = vmatprep.subr.bf16.mxu0 %v1597
    %2065 = vmatpush1.bf16.msra.mxu0 %v1596
    %2066 = vmatprep.subr.bf16.mxu0 %v1604
    %2067 = vmatpush1.bf16.msra.mxu0 %v1603
    %2068 = vmatprep.subr.bf16.mxu0 %v1611
    %2069 = vmatpush1.bf16.msra.mxu0 %v1610
    %2070 = vmatprep.subr.bf16.mxu0 %v1618
    %2071 = vmatpush1.bf16.msra.mxu0 %v1617
    %2072 = vmatprep.mubr.bf16.mxu0 %v510
    %2073 = vmatmul.mubr.bf16.gmra.mrb[0].mxu0 %v509
    %v2074 = vpop.f32.mrb[0].mxu0
    %v2075 = vadd.f32 %v782, %v2074
    %v2076 = vpop.f32.mrb[0].mxu0
    %v2077 = vadd.f32 %v786, %v2076
    %v2078 = vpop.f32.mrb[0].mxu0
    %v2079 = vpop.f32.mrb[0].mxu0
    %2080 = vdwg.mxu0
    %2081 = vmatprep.subr.bf16.mxu0 %v1625
    %2082 = vmatpush1.bf16.msra.mxu0 %v1624
    %2083 = vmatprep.subr.bf16.mxu0 %v1632
    %2084 = vmatpush1.bf16.msra.mxu0 %v1631
    %2085 = vmatprep.subr.bf16.mxu0 %v1639
    %2086 = vmatpush1.bf16.msra.mxu0 %v1638
    %2087 = vmatprep.subr.bf16.mxu0 %v1646
    %2088 = vmatpush1.bf16.msra.mxu0 %v1645
    %2089 = vmatprep.subr.bf16.mxu0 %v1653
    %2090 = vmatpush1.bf16.msra.mxu0 %v1652
    %2091 = vmatprep.subr.bf16.mxu0 %v1660
    %2092 = vmatpush1.bf16.msra.mxu0 %v1659
    %2093 = vmatprep.subr.bf16.mxu0 %v1667
    %2094 = vmatpush1.bf16.msra.mxu0 %v1666
    %2095 = vmatprep.subr.bf16.mxu0 %v1674
    %2096 = vmatpush1.bf16.msra.mxu0 %v1673
    %2097 = vmatprep.subr.bf16.mxu0 %v1681
    %2098 = vmatpush1.bf16.msra.mxu0 %v1680
    %2099 = vmatprep.subr.bf16.mxu0 %v1688
    %2100 = vmatpush1.bf16.msra.mxu0 %v1687
    %2101 = vmatprep.subr.bf16.mxu0 %v1695
    %2102 = vmatpush1.bf16.msra.mxu0 %v1694
    %2103 = vmatprep.subr.bf16.mxu0 %v1702
    %2104 = vmatpush1.bf16.msra.mxu0 %v1701
    %2105 = vmatprep.subr.bf16.mxu0 %v1709
    %2106 = vmatpush1.bf16.msra.mxu0 %v1708
    %2107 = vmatprep.subr.bf16.mxu0 %v1716
    %2108 = vmatpush1.bf16.msra.mxu0 %v1715
    %2109 = vmatprep.subr.bf16.mxu0 %v1723
    %2110 = vmatpush1.bf16.msra.mxu0 %v1722
    %2111 = vmatprep.subr.bf16.mxu0 %v1730
    %2112 = vmatpush1.bf16.msra.mxu0 %v1729
    %2113 = vmatprep.mubr.bf16.mxu0 %v512
    %2114 = vmatmul.mubr.bf16.gmra.mrb[0].mxu0 %v511
    %v2115 = vpop.f32.mrb[0].mxu0
    %v2116 = vadd.f32 %v2075, %v2115
    %v2117 = vpop.f32.mrb[0].mxu0
    %v2118 = vadd.f32 %v2077, %v2117
    %v2119 = vpop.f32.mrb[0].mxu0
    %v2120 = vpop.f32.mrb[0].mxu0
    %2121 = vdwg.mxu0
    %2122 = vmatprep.subr.bf16.mxu0 %v1515
    %2123 = vmatpush1.bf16.msra.mxu0 %v1514
    %2124 = vmatprep.subr.bf16.mxu0 %v1522
    %2125 = vmatpush1.bf16.msra.mxu0 %v1521
    %2126 = vmatprep.subr.bf16.mxu0 %v1529
    %2127 = vmatpush1.bf16.msra.mxu0 %v1528
    %2128 = vmatprep.subr.bf16.mxu0 %v1536
    %2129 = vmatpush1.bf16.msra.mxu0 %v1535
    %2130 = vmatprep.subr.bf16.mxu0 %v1543
    %2131 = vmatpush1.bf16.msra.mxu0 %v1542
    %2132 = vmatprep.subr.bf16.mxu0 %v1550
    %2133 = vmatpush1.bf16.msra.mxu0 %v1549
    %2134 = vmatprep.subr.bf16.mxu0 %v1557
    %2135 = vmatpush1.bf16.msra.mxu0 %v1556
    %2136 = vmatprep.subr.bf16.mxu0 %v1564
    %2137 = vmatpush1.bf16.msra.mxu0 %v1563
    %2138 = vmatprep.subr.bf16.mxu0 %v1571
    %2139 = vmatpush1.bf16.msra.mxu0 %v1570
    %2140 = vmatprep.subr.bf16.mxu0 %v1578
    %2141 = vmatpush1.bf16.msra.mxu0 %v1577
    %2142 = vmatprep.subr.bf16.mxu0 %v1585
    %2143 = vmatpush1.bf16.msra.mxu0 %v1584
    %2144 = vmatprep.subr.bf16.mxu0 %v1592
    %2145 = vmatpush1.bf16.msra.mxu0 %v1591
    %2146 = vmatprep.subr.bf16.mxu0 %v1599
    %2147 = vmatpush1.bf16.msra.mxu0 %v1598
    %2148 = vmatprep.subr.bf16.mxu0 %v1606
    %2149 = vmatpush1.bf16.msra.mxu0 %v1605
    %2150 = vmatprep.subr.bf16.mxu0 %v1613
    %2151 = vmatpush1.bf16.msra.mxu0 %v1612
    %2152 = vmatprep.subr.bf16.mxu0 %v1620
    %2153 = vmatpush1.bf16.msra.mxu0 %v1619
    %2154 = vmatprep.mubr.bf16.mxu0 %v510
    %2155 = vmatmul.mubr.bf16.gmra.mrb[0].mxu0 %v509
    %v2156 = vpop.f32.mrb[0].mxu0
    %v2157 = vadd.f32 %v790, %v2156
    %v2158 = vpop.f32.mrb[0].mxu0
    %v2159 = vadd.f32 %v794, %v2158
    %v2160 = vpop.f32.mrb[0].mxu0
    %v2161 = vpop.f32.mrb[0].mxu0
    %2162 = vdwg.mxu0
    %2163 = vmatprep.subr.bf16.mxu0 %v1627
    %2164 = vmatpush1.bf16.msra.mxu0 %v1626
    %2165 = vmatprep.subr.bf16.mxu0 %v1634
    %2166 = vmatpush1.bf16.msra.mxu0 %v1633
    %2167 = vmatprep.subr.bf16.mxu0 %v1641
    %2168 = vmatpush1.bf16.msra.mxu0 %v1640
    %2169 = vmatprep.subr.bf16.mxu0 %v1648
    %2170 = vmatpush1.bf16.msra.mxu0 %v1647
    %2171 = vmatprep.subr.bf16.mxu0 %v1655
    %2172 = vmatpush1.bf16.msra.mxu0 %v1654
    %2173 = vmatprep.subr.bf16.mxu0 %v1662
    %2174 = vmatpush1.bf16.msra.mxu0 %v1661
    %2175 = vmatprep.subr.bf16.mxu0 %v1669
    %2176 = vmatpush1.bf16.msra.mxu0 %v1668
    %2177 = vmatprep.subr.bf16.mxu0 %v1676
    %2178 = vmatpush1.bf16.msra.mxu0 %v1675
    %2179 = vmatprep.subr.bf16.mxu0 %v1683
    %2180 = vmatpush1.bf16.msra.mxu0 %v1682
    %2181 = vmatprep.subr.bf16.mxu0 %v1690
    %2182 = vmatpush1.bf16.msra.mxu0 %v1689
    %2183 = vmatprep.subr.bf16.mxu0 %v1697
    %2184 = vmatpush1.bf16.msra.mxu0 %v1696
    %2185 = vmatprep.subr.bf16.mxu0 %v1704
    %2186 = vmatpush1.bf16.msra.mxu0 %v1703
    %2187 = vmatprep.subr.bf16.mxu0 %v1711
    %2188 = vmatpush1.bf16.msra.mxu0 %v1710
    %2189 = vmatprep.subr.bf16.mxu0 %v1718
    %2190 = vmatpush1.bf16.msra.mxu0 %v1717
    %2191 = vmatprep.subr.bf16.mxu0 %v1725
    %2192 = vmatpush1.bf16.msra.mxu0 %v1724
    %2193 = vmatprep.subr.bf16.mxu0 %v1732
    %2194 = vmatpush1.bf16.msra.mxu0 %v1731
    %2195 = vmatprep.mubr.bf16.mxu0 %v512
    %2196 = vmatmul.mubr.bf16.gmra.mrb[0].mxu0 %v511
    %v2197 = vpop.f32.mrb[0].mxu0
    %v2198 = vadd.f32 %v2157, %v2197
    %v2199 = vpop.f32.mrb[0].mxu0
    %v2200 = vadd.f32 %v2159, %v2199
    %v2201 = vpop.f32.mrb[0].mxu0
    %v2202 = vpop.f32.mrb[0].mxu0
    %2203 = vdwg.mxu0
    %2204 = vmatprep.subr.bf16.mxu0 0
    %2205 = vmatpush1.bf16.msra.mxu0 %v1516
    %2206 = vmatprep.subr.bf16.mxu0 0
    %2207 = vmatpush1.bf16.msra.mxu0 %v1523
    %2208 = vmatprep.subr.bf16.mxu0 0
    %2209 = vmatpush1.bf16.msra.mxu0 %v1530
    %2210 = vmatprep.subr.bf16.mxu0 0
    %2211 = vmatpush1.bf16.msra.mxu0 %v1537
    %2212 = vmatprep.subr.bf16.mxu0 0
    %2213 = vmatpush1.bf16.msra.mxu0 %v1544
    %2214 = vmatprep.subr.bf16.mxu0 0
    %2215 = vmatpush1.bf16.msra.mxu0 %v1551
    %2216 = vmatprep.subr.bf16.mxu0 0
    %2217 = vmatpush1.bf16.msra.mxu0 %v1558
    %2218 = vmatprep.subr.bf16.mxu0 0
    %2219 = vmatpush1.bf16.msra.mxu0 %v1565
    %2220 = vmatprep.subr.bf16.mxu0 0
    %2221 = vmatpush1.bf16.msra.mxu0 %v1572
    %2222 = vmatprep.subr.bf16.mxu0 0
    %2223 = vmatpush1.bf16.msra.mxu0 %v1579
    %2224 = vmatprep.subr.bf16.mxu0 0
    %2225 = vmatpush1.bf16.msra.mxu0 %v1586
    %2226 = vmatprep.subr.bf16.mxu0 0
    %2227 = vmatpush1.bf16.msra.mxu0 %v1593
    %2228 = vmatprep.subr.bf16.mxu0 0
    %2229 = vmatpush1.bf16.msra.mxu0 %v1600
    %2230 = vmatprep.subr.bf16.mxu0 0
    %2231 = vmatpush1.bf16.msra.mxu0 %v1607
    %2232 = vmatprep.subr.bf16.mxu0 0
    %2233 = vmatpush1.bf16.msra.mxu0 %v1614
    %2234 = vmatprep.subr.bf16.mxu0 0
    %2235 = vmatpush1.bf16.msra.mxu0 %v1621
    %2236 = vmatprep.mubr.bf16.mxu0 %v510
    %2237 = vmatmul.mubr.bf16.gmra.mrb[0].mxu0 %v509
    %v2238 = vpop.f32.mrb[0].mxu0
    %v2239 = vadd.f32 %v798, %v2238
    %v2240 = vpop.f32.mrb[0].mxu0
    %v2241 = vpop.f32.mrb[0].mxu0
    %v2242 = vpop.f32.mrb[0].mxu0
    %2243 = vdwg.mxu0
    %2244 = vmatprep.subr.bf16.mxu0 0
    %2245 = vmatpush1.bf16.msra.mxu0 %v1628
    %2246 = vmatprep.subr.bf16.mxu0 0
    %2247 = vmatpush1.bf16.msra.mxu0 %v1635
    %2248 = vmatprep.subr.bf16.mxu0 0
    %2249 = vmatpush1.bf16.msra.mxu0 %v1642
    %2250 = vmatprep.subr.bf16.mxu0 0
    %2251 = vmatpush1.bf16.msra.mxu0 %v1649
    %2252 = vmatprep.subr.bf16.mxu0 0
    %2253 = vmatpush1.bf16.msra.mxu0 %v1656
    %2254 = vmatprep.subr.bf16.mxu0 0
    %2255 = vmatpush1.bf16.msra.mxu0 %v1663
    %2256 = vmatprep.subr.bf16.mxu0 0
    %2257 = vmatpush1.bf16.msra.mxu0 %v1670
    %2258 = vmatprep.subr.bf16.mxu0 0
    %2259 = vmatpush1.bf16.msra.mxu0 %v1677
    %2260 = vmatprep.subr.bf16.mxu0 0
    %2261 = vmatpush1.bf16.msra.mxu0 %v1684
    %2262 = vmatprep.subr.bf16.mxu0 0
    %2263 = vmatpush1.bf16.msra.mxu0 %v1691
    %2264 = vmatprep.subr.bf16.mxu0 0
    %2265 = vmatpush1.bf16.msra.mxu0 %v1698
    %2266 = vmatprep.subr.bf16.mxu0 0
    %2267 = vmatpush1.bf16.msra.mxu0 %v1705
    %2268 = vmatprep.subr.bf16.mxu0 0
    %2269 = vmatpush1.bf16.msra.mxu0 %v1712
    %2270 = vmatprep.subr.bf16.mxu0 0
    %2271 = vmatpush1.bf16.msra.mxu0 %v1719
    %2272 = vmatprep.subr.bf16.mxu0 0
    %2273 = vmatpush1.bf16.msra.mxu0 %v1726
    %2274 = vmatprep.subr.bf16.mxu0 0
    %2275 = vmatpush1.bf16.msra.mxu0 %v1733
    %2276 = vmatprep.mubr.bf16.mxu0 %v512
    %2277 = vmatmul.mubr.bf16.gmra.mrb[0].mxu0 %v511
    %v2278 = vpop.f32.mrb[0].mxu0
    %v2279 = vadd.f32 %v2239, %v2278
    %v2280 = vpop.f32.mrb[0].mxu0
    %v2281 = vpop.f32.mrb[0].mxu0
    %v2282 = vpop.f32.mrb[0].mxu0
    %2283 = vdwg.mxu0
    %v2284 = vmax.f32 %v2034, 0.0
    %v2285 = vmax.f32 %v2036, 0.0
    %v2286 = vmax.f32 %v2116, 0.0
    %v2287 = vmax.f32 %v2118, 0.0
    %v2288 = vmax.f32 %v2198, 0.0
    %v2289 = vmax.f32 %v2200, 0.0
    %v2290 = vmax.f32 %v2279, 0.0
    %v2291 = vpack.c.bf16 %v2284, %v2284
    %v2292 = vpack.c.bf16 %v2285, %v2285
    %v2293 = vpack.c.bf16 %v2286, %v2286
    %v2294 = vpack.c.bf16 %v2287, %v2287
    %v2295 = vpack.c.bf16 %v2288, %v2288
    %v2296 = vpack.c.bf16 %v2289, %v2289
    %v2297 = vpack.c.bf16 %v2290, %v2290
    %v2298 = vld [vmem:[#allocation14] sm:$0xff]
    %v2299 = vld [vmem:[#allocation14 + $0x8] sm:$0xff]
    %v2300 = vld [vmem:[#allocation14 + $0x10] sm:$0xff]
    %v2301 = vld [vmem:[#allocation14 + $0x18] sm:$0xf]
    %v2302 = vld [vmem:[#allocation14 + $0x1c] sm:$0xff]
    %v2303 = vld [vmem:[#allocation14 + $0x24] sm:$0xff]
    %v2304 = vld [vmem:[#allocation14 + $0x2c] sm:$0xff]
    %v2305 = vld [vmem:[#allocation14 + $0x34] sm:$0xf]
    %v2306 = vld [vmem:[#allocation14 + $0x38] sm:$0xff]
    %v2307 = vld [vmem:[#allocation14 + $0x40] sm:$0xff]
    %v2308 = vld [vmem:[#allocation14 + $0x48] sm:$0xff]
    %v2309 = vld [vmem:[#allocation14 + $0x50] sm:$0xf]
    %v2310 = vld [vmem:[#allocation14 + $0x54] sm:$0xff]
    %v2311 = vld [vmem:[#allocation14 + $0x5c] sm:$0xff]
    %v2312 = vld [vmem:[#allocation14 + $0x64] sm:$0xff]
    %v2313 = vld [vmem:[#allocation14 + $0x6c] sm:$0xf]
    %v2314 = vld [vmem:[#allocation14 + $0x70] sm:$0xff]
    %v2315 = vld [vmem:[#allocation14 + $0x78] sm:$0xff]
    %v2316 = vld [vmem:[#allocation14 + $0x80] sm:$0xff]
    %v2317 = vld [vmem:[#allocation14 + $0x88] sm:$0xf]
    %v2318 = vld [vmem:[#allocation14 + $0x8c] sm:$0xff]
    %v2319 = vld [vmem:[#allocation14 + $0x94] sm:$0xff]
    %v2320 = vld [vmem:[#allocation14 + $0x9c] sm:$0xff]
    %v2321 = vld [vmem:[#allocation14 + $0xa4] sm:$0xf]
    %v2322 = vld [vmem:[#allocation14 + $0xa8] sm:$0xff]
    %v2323 = vld [vmem:[#allocation14 + $0xb0] sm:$0xff]
    %v2324 = vld [vmem:[#allocation14 + $0xb8] sm:$0xff]
    %v2325 = vld [vmem:[#allocation14 + $0xc0] sm:$0xf]
    %v2326 = vld [vmem:[#allocation14 + $0xc4] sm:$0xff]
    %v2327 = vld [vmem:[#allocation14 + $0xcc] sm:$0xff]
    %v2328 = vld [vmem:[#allocation14 + $0xd4] sm:$0xff]
    %v2329 = vld [vmem:[#allocation14 + $0xdc] sm:$0xf]
    %v2330 = vld [vmem:[#allocation14 + $0xe0] sm:$0xff]
    %v2331 = vld [vmem:[#allocation14 + $0xe8] sm:$0xff]
    %v2332 = vld [vmem:[#allocation14 + $0xf0] sm:$0xff]
    %v2333 = vld [vmem:[#allocation14 + $0xf8] sm:$0xf]
    %v2334 = vld [vmem:[#allocation14 + $0xfc] sm:$0xff]
    %v2335 = vld [vmem:[#allocation14 + $0x104] sm:$0xff]
    %v2336 = vld [vmem:[#allocation14 + $0x10c] sm:$0xff]
    %v2337 = vld [vmem:[#allocation14 + $0x114] sm:$0xf]
    %v2338 = vld [vmem:[#allocation14 + $0x118] sm:$0xff]
    %v2339 = vld [vmem:[#allocation14 + $0x120] sm:$0xff]
    %v2340 = vld [vmem:[#allocation14 + $0x128] sm:$0xff]
    %v2341 = vld [vmem:[#allocation14 + $0x130] sm:$0xf]
    %v2342 = vld [vmem:[#allocation14 + $0x134] sm:$0xff]
    %v2343 = vld [vmem:[#allocation14 + $0x13c] sm:$0xff]
    %v2344 = vld [vmem:[#allocation14 + $0x144] sm:$0xff]
    %v2345 = vld [vmem:[#allocation14 + $0x14c] sm:$0xf]
    %v2346 = vld [vmem:[#allocation14 + $0x150] sm:$0xff]
    %v2347 = vld [vmem:[#allocation14 + $0x158] sm:$0xff]
    %v2348 = vld [vmem:[#allocation14 + $0x160] sm:$0xff]
    %v2349 = vld [vmem:[#allocation14 + $0x168] sm:$0xf]
    %v2350 = vld [vmem:[#allocation14 + $0x16c] sm:$0xff]
    %v2351 = vld [vmem:[#allocation14 + $0x174] sm:$0xff]
    %v2352 = vld [vmem:[#allocation14 + $0x17c] sm:$0xff]
    %v2353 = vld [vmem:[#allocation14 + $0x184] sm:$0xf]
    %v2354 = vld [vmem:[#allocation14 + $0x188] sm:$0xff]
    %v2355 = vld [vmem:[#allocation14 + $0x190] sm:$0xff]
    %v2356 = vld [vmem:[#allocation14 + $0x198] sm:$0xff]
    %v2357 = vld [vmem:[#allocation14 + $0x1a0] sm:$0xf]
    %v2358 = vld [vmem:[#allocation14 + $0x1a4] sm:$0xff]
    %v2359 = vld [vmem:[#allocation14 + $0x1ac] sm:$0xff]
    %v2360 = vld [vmem:[#allocation14 + $0x1b4] sm:$0xff]
    %v2361 = vld [vmem:[#allocation14 + $0x1bc] sm:$0xf]
    %v2362 = vld [vmem:[#allocation14 + $0x1c0] sm:$0xff]
    %v2363 = vld [vmem:[#allocation14 + $0x1c8] sm:$0xff]
    %v2364 = vld [vmem:[#allocation14 + $0x1d0] sm:$0xff]
    %v2365 = vld [vmem:[#allocation14 + $0x1d8] sm:$0xf]
    %v2366 = vld [vmem:[#allocation14 + $0x1dc] sm:$0xff]
    %v2367 = vld [vmem:[#allocation14 + $0x1e4] sm:$0xff]
    %v2368 = vld [vmem:[#allocation14 + $0x1ec] sm:$0xff]
    %v2369 = vld [vmem:[#allocation14 + $0x1f4] sm:$0xf]
    %v2370 = vld [vmem:[#allocation14 + $0x1f8] sm:$0xff]
    %v2371 = vld [vmem:[#allocation14 + $0x200] sm:$0xff]
    %v2372 = vld [vmem:[#allocation14 + $0x208] sm:$0xff]
    %v2373 = vld [vmem:[#allocation14 + $0x210] sm:$0xf]
    %v2374 = vld [vmem:[#allocation14 + $0x214] sm:$0xff]
    %v2375 = vld [vmem:[#allocation14 + $0x21c] sm:$0xff]
    %v2376 = vld [vmem:[#allocation14 + $0x224] sm:$0xff]
    %v2377 = vld [vmem:[#allocation14 + $0x22c] sm:$0xf]
    %v2378 = vld [vmem:[#allocation14 + $0x230] sm:$0xff]
    %v2379 = vld [vmem:[#allocation14 + $0x238] sm:$0xff]
    %v2380 = vld [vmem:[#allocation14 + $0x240] sm:$0xff]
    %v2381 = vld [vmem:[#allocation14 + $0x248] sm:$0xf]
    %v2382 = vld [vmem:[#allocation14 + $0x24c] sm:$0xff]
    %v2383 = vld [vmem:[#allocation14 + $0x254] sm:$0xff]
    %v2384 = vld [vmem:[#allocation14 + $0x25c] sm:$0xff]
    %v2385 = vld [vmem:[#allocation14 + $0x264] sm:$0xf]
    %v2386 = vld [vmem:[#allocation14 + $0x268] sm:$0xff]
    %v2387 = vld [vmem:[#allocation14 + $0x270] sm:$0xff]
    %v2388 = vld [vmem:[#allocation14 + $0x278] sm:$0xff]
    %v2389 = vld [vmem:[#allocation14 + $0x280] sm:$0xf]
    %v2390 = vld [vmem:[#allocation14 + $0x284] sm:$0xff]
    %v2391 = vld [vmem:[#allocation14 + $0x28c] sm:$0xff]
    %v2392 = vld [vmem:[#allocation14 + $0x294] sm:$0xff]
    %v2393 = vld [vmem:[#allocation14 + $0x29c] sm:$0xf]
    %v2394 = vld [vmem:[#allocation14 + $0x2a0] sm:$0xff]
    %v2395 = vld [vmem:[#allocation14 + $0x2a8] sm:$0xff]
    %v2396 = vld [vmem:[#allocation14 + $0x2b0] sm:$0xff]
    %v2397 = vld [vmem:[#allocation14 + $0x2b8] sm:$0xf]
    %v2398 = vld [vmem:[#allocation14 + $0x2bc] sm:$0xff]
    %v2399 = vld [vmem:[#allocation14 + $0x2c4] sm:$0xff]
    %v2400 = vld [vmem:[#allocation14 + $0x2cc] sm:$0xff]
    %v2401 = vld [vmem:[#allocation14 + $0x2d4] sm:$0xf]
    %v2402 = vld [vmem:[#allocation14 + $0x2d8] sm:$0xff]
    %v2403 = vld [vmem:[#allocation14 + $0x2e0] sm:$0xff]
    %v2404 = vld [vmem:[#allocation14 + $0x2e8] sm:$0xff]
    %v2405 = vld [vmem:[#allocation14 + $0x2f0] sm:$0xf]
    %v2406 = vld [vmem:[#allocation14 + $0x2f4] sm:$0xff]
    %v2407 = vld [vmem:[#allocation14 + $0x2fc] sm:$0xff]
    %v2408 = vld [vmem:[#allocation14 + $0x304] sm:$0xff]
    %v2409 = vld [vmem:[#allocation14 + $0x30c] sm:$0xf]
    %v2410 = vld [vmem:[#allocation14 + $0x310] sm:$0xff]
    %v2411 = vld [vmem:[#allocation14 + $0x318] sm:$0xff]
    %v2412 = vld [vmem:[#allocation14 + $0x320] sm:$0xff]
    %v2413 = vld [vmem:[#allocation14 + $0x328] sm:$0xf]
    %v2414 = vld [vmem:[#allocation14 + $0x32c] sm:$0xff]
    %v2415 = vld [vmem:[#allocation14 + $0x334] sm:$0xff]
    %v2416 = vld [vmem:[#allocation14 + $0x33c] sm:$0xff]
    %v2417 = vld [vmem:[#allocation14 + $0x344] sm:$0xf]
    %v2418 = vld [vmem:[#allocation14 + $0x348] sm:$0xff]
    %v2419 = vld [vmem:[#allocation14 + $0x350] sm:$0xff]
    %v2420 = vld [vmem:[#allocation14 + $0x358] sm:$0xff]
    %v2421 = vld [vmem:[#allocation14 + $0x360] sm:$0xf]
    %v2422 = vld [vmem:[#allocation14 + $0x364] sm:$0xff]
    %v2423 = vld [vmem:[#allocation14 + $0x36c] sm:$0xff]
    %v2424 = vld [vmem:[#allocation14 + $0x374] sm:$0xff]
    %v2425 = vld [vmem:[#allocation14 + $0x37c] sm:$0xf]
    %v2426 = vld [vmem:[#allocation14 + $0x380] sm:$0xff]
    %v2427 = vld [vmem:[#allocation14 + $0x388] sm:$0xff]
    %v2428 = vld [vmem:[#allocation14 + $0x390] sm:$0xff]
    %v2429 = vld [vmem:[#allocation14 + $0x398] sm:$0xf]
    %v2430 = vld [vmem:[#allocation14 + $0x39c] sm:$0xff]
    %v2431 = vld [vmem:[#allocation14 + $0x3a4] sm:$0xff]
    %v2432 = vld [vmem:[#allocation14 + $0x3ac] sm:$0xff]
    %v2433 = vld [vmem:[#allocation14 + $0x3b4] sm:$0xf]
    %v2434 = vld [vmem:[#allocation14 + $0x3b8] sm:$0xff]
    %v2435 = vld [vmem:[#allocation14 + $0x3c0] sm:$0xff]
    %v2436 = vld [vmem:[#allocation14 + $0x3c8] sm:$0xff]
    %v2437 = vld [vmem:[#allocation14 + $0x3d0] sm:$0xf]
    %v2438 = vld [vmem:[#allocation14 + $0x3d4] sm:$0xff]
    %v2439 = vld [vmem:[#allocation14 + $0x3dc] sm:$0xff]
    %v2440 = vld [vmem:[#allocation14 + $0x3e4] sm:$0xff]
    %v2441 = vld [vmem:[#allocation14 + $0x3ec] sm:$0xf]
    %v2442 = vld [vmem:[#allocation14 + $0x3f0] sm:$0xff]
    %v2443 = vld [vmem:[#allocation14 + $0x3f8] sm:$0xff]
    %v2444 = vld [vmem:[#allocation14 + $0x400] sm:$0xff]
    %v2445 = vld [vmem:[#allocation14 + $0x408] sm:$0xf]
    %v2446 = vld [vmem:[#allocation14 + $0x40c] sm:$0xff]
    %v2447 = vld [vmem:[#allocation14 + $0x414] sm:$0xff]
    %v2448 = vld [vmem:[#allocation14 + $0x41c] sm:$0xff]
    %v2449 = vld [vmem:[#allocation14 + $0x424] sm:$0xf]
    %v2450 = vld [vmem:[#allocation14 + $0x428] sm:$0xff]
    %v2451 = vld [vmem:[#allocation14 + $0x430] sm:$0xff]
    %v2452 = vld [vmem:[#allocation14 + $0x438] sm:$0xff]
    %v2453 = vld [vmem:[#allocation14 + $0x440] sm:$0xf]
    %v2454 = vld [vmem:[#allocation14 + $0x444] sm:$0xff]
    %v2455 = vld [vmem:[#allocation14 + $0x44c] sm:$0xff]
    %v2456 = vld [vmem:[#allocation14 + $0x454] sm:$0xff]
    %v2457 = vld [vmem:[#allocation14 + $0x45c] sm:$0xf]
    %v2458 = vld [vmem:[#allocation14 + $0x460] sm:$0xff]
    %v2459 = vld [vmem:[#allocation14 + $0x468] sm:$0xff]
    %v2460 = vld [vmem:[#allocation14 + $0x470] sm:$0xff]
    %v2461 = vld [vmem:[#allocation14 + $0x478] sm:$0xf]
    %v2462 = vld [vmem:[#allocation14 + $0x47c] sm:$0xff]
    %v2463 = vld [vmem:[#allocation14 + $0x484] sm:$0xff]
    %v2464 = vld [vmem:[#allocation14 + $0x48c] sm:$0xff]
    %v2465 = vld [vmem:[#allocation14 + $0x494] sm:$0xf]
    %v2466 = vld [vmem:[#allocation14 + $0x498] sm:$0xff]
    %v2467 = vld [vmem:[#allocation14 + $0x4a0] sm:$0xff]
    %v2468 = vld [vmem:[#allocation14 + $0x4a8] sm:$0xff]
    %v2469 = vld [vmem:[#allocation14 + $0x4b0] sm:$0xf]
    %v2470 = vld [vmem:[#allocation14 + $0x4b4] sm:$0xff]
    %v2471 = vld [vmem:[#allocation14 + $0x4bc] sm:$0xff]
    %v2472 = vld [vmem:[#allocation14 + $0x4c4] sm:$0xff]
    %v2473 = vld [vmem:[#allocation14 + $0x4cc] sm:$0xf]
    %v2474 = vld [vmem:[#allocation14 + $0x4d0] sm:$0xff]
    %v2475 = vld [vmem:[#allocation14 + $0x4d8] sm:$0xff]
    %v2476 = vld [vmem:[#allocation14 + $0x4e0] sm:$0xff]
    %v2477 = vld [vmem:[#allocation14 + $0x4e8] sm:$0xf]
    %v2478 = vld [vmem:[#allocation14 + $0x4ec] sm:$0xff]
    %v2479 = vld [vmem:[#allocation14 + $0x4f4] sm:$0xff]
    %v2480 = vld [vmem:[#allocation14 + $0x4fc] sm:$0xff]
    %v2481 = vld [vmem:[#allocation14 + $0x504] sm:$0xf]
    %v2482 = vld [vmem:[#allocation14 + $0x508] sm:$0xff]
    %v2483 = vld [vmem:[#allocation14 + $0x510] sm:$0xff]
    %v2484 = vld [vmem:[#allocation14 + $0x518] sm:$0xff]
    %v2485 = vld [vmem:[#allocation14 + $0x520] sm:$0xf]
    %v2486 = vld [vmem:[#allocation14 + $0x524] sm:$0xff]
    %v2487 = vld [vmem:[#allocation14 + $0x52c] sm:$0xff]
    %v2488 = vld [vmem:[#allocation14 + $0x534] sm:$0xff]
    %v2489 = vld [vmem:[#allocation14 + $0x53c] sm:$0xf]
    %v2490 = vld [vmem:[#allocation14 + $0x540] sm:$0xff]
    %v2491 = vld [vmem:[#allocation14 + $0x548] sm:$0xff]
    %v2492 = vld [vmem:[#allocation14 + $0x550] sm:$0xff]
    %v2493 = vld [vmem:[#allocation14 + $0x558] sm:$0xf]
    %v2494 = vld [vmem:[#allocation14 + $0x55c] sm:$0xff]
    %v2495 = vld [vmem:[#allocation14 + $0x564] sm:$0xff]
    %v2496 = vld [vmem:[#allocation14 + $0x56c] sm:$0xff]
    %v2497 = vld [vmem:[#allocation14 + $0x574] sm:$0xf]
    %v2498 = vld [vmem:[#allocation14 + $0x578] sm:$0xff]
    %v2499 = vld [vmem:[#allocation14 + $0x580] sm:$0xff]
    %v2500 = vld [vmem:[#allocation14 + $0x588] sm:$0xff]
    %v2501 = vld [vmem:[#allocation14 + $0x590] sm:$0xf]
    %v2502 = vld [vmem:[#allocation14 + $0x594] sm:$0xff]
    %v2503 = vld [vmem:[#allocation14 + $0x59c] sm:$0xff]
    %v2504 = vld [vmem:[#allocation14 + $0x5a4] sm:$0xff]
    %v2505 = vld [vmem:[#allocation14 + $0x5ac] sm:$0xf]
    %v2506 = vld [vmem:[#allocation14 + $0x5b0] sm:$0xff]
    %v2507 = vld [vmem:[#allocation14 + $0x5b8] sm:$0xff]
    %v2508 = vld [vmem:[#allocation14 + $0x5c0] sm:$0xff]
    %v2509 = vld [vmem:[#allocation14 + $0x5c8] sm:$0xf]
    %v2510 = vld [vmem:[#allocation14 + $0x5cc] sm:$0xff]
    %v2511 = vld [vmem:[#allocation14 + $0x5d4] sm:$0xff]
    %v2512 = vld [vmem:[#allocation14 + $0x5dc] sm:$0xff]
    %v2513 = vld [vmem:[#allocation14 + $0x5e4] sm:$0xf]
    %v2514 = vld [vmem:[#allocation14 + $0x5e8] sm:$0xff]
    %v2515 = vld [vmem:[#allocation14 + $0x5f0] sm:$0xff]
    %v2516 = vld [vmem:[#allocation14 + $0x5f8] sm:$0xff]
    %v2517 = vld [vmem:[#allocation14 + $0x600] sm:$0xf]
    %v2518 = vld [vmem:[#allocation14 + $0x604] sm:$0xff]
    %v2519 = vld [vmem:[#allocation14 + $0x60c] sm:$0xff]
    %v2520 = vld [vmem:[#allocation14 + $0x614] sm:$0xff]
    %v2521 = vld [vmem:[#allocation14 + $0x61c] sm:$0xf]
    %v2522 = vld [vmem:[#allocation14 + $0x620] sm:$0xff]
    %v2523 = vld [vmem:[#allocation14 + $0x628] sm:$0xff]
    %v2524 = vld [vmem:[#allocation14 + $0x630] sm:$0xff]
    %v2525 = vld [vmem:[#allocation14 + $0x638] sm:$0xf]
    %v2526 = vld [vmem:[#allocation14 + $0x63c] sm:$0xff]
    %v2527 = vld [vmem:[#allocation14 + $0x644] sm:$0xff]
    %v2528 = vld [vmem:[#allocation14 + $0x64c] sm:$0xff]
    %v2529 = vld [vmem:[#allocation14 + $0x654] sm:$0xf]
    %v2530 = vld [vmem:[#allocation14 + $0x658] sm:$0xff]
    %v2531 = vld [vmem:[#allocation14 + $0x660] sm:$0xff]
    %v2532 = vld [vmem:[#allocation14 + $0x668] sm:$0xff]
    %v2533 = vld [vmem:[#allocation14 + $0x670] sm:$0xf]
    %v2534 = vld [vmem:[#allocation14 + $0x674] sm:$0xff]
    %v2535 = vld [vmem:[#allocation14 + $0x67c] sm:$0xff]
    %v2536 = vld [vmem:[#allocation14 + $0x684] sm:$0xff]
    %v2537 = vld [vmem:[#allocation14 + $0x68c] sm:$0xf]
    %v2538 = vld [vmem:[#allocation14 + $0x690] sm:$0xff]
    %v2539 = vld [vmem:[#allocation14 + $0x698] sm:$0xff]
    %v2540 = vld [vmem:[#allocation14 + $0x6a0] sm:$0xff]
    %v2541 = vld [vmem:[#allocation14 + $0x6a8] sm:$0xf]
    %v2542 = vld [vmem:[#allocation14 + $0x6ac] sm:$0xff]
    %v2543 = vld [vmem:[#allocation14 + $0x6b4] sm:$0xff]
    %v2544 = vld [vmem:[#allocation14 + $0x6bc] sm:$0xff]
    %v2545 = vld [vmem:[#allocation14 + $0x6c4] sm:$0xf]
    %v2546 = vld [vmem:[#allocation14 + $0x6c8] sm:$0xff]
    %v2547 = vld [vmem:[#allocation14 + $0x6d0] sm:$0xff]
    %v2548 = vld [vmem:[#allocation14 + $0x6d8] sm:$0xff]
    %v2549 = vld [vmem:[#allocation14 + $0x6e0] sm:$0xf]
    %v2550 = vld [vmem:[#allocation14 + $0x6e4] sm:$0xff]
    %v2551 = vld [vmem:[#allocation14 + $0x6ec] sm:$0xff]
    %v2552 = vld [vmem:[#allocation14 + $0x6f4] sm:$0xff]
    %v2553 = vld [vmem:[#allocation14 + $0x6fc] sm:$0xf]
    %v2554 = vld [vmem:[#allocation14 + $0x700] sm:$0xff]
    %v2555 = vld [vmem:[#allocation14 + $0x708] sm:$0xff]
    %v2556 = vld [vmem:[#allocation14 + $0x710] sm:$0xff]
    %v2557 = vld [vmem:[#allocation14 + $0x718] sm:$0xf]
    %v2558 = vld [vmem:[#allocation14 + $0x71c] sm:$0xff]
    %v2559 = vld [vmem:[#allocation14 + $0x724] sm:$0xff]
    %v2560 = vld [vmem:[#allocation14 + $0x72c] sm:$0xff]
    %v2561 = vld [vmem:[#allocation14 + $0x734] sm:$0xf]
    %v2562 = vld [vmem:[#allocation14 + $0x738] sm:$0xff]
    %v2563 = vld [vmem:[#allocation14 + $0x740] sm:$0xff]
    %v2564 = vld [vmem:[#allocation14 + $0x748] sm:$0xff]
    %v2565 = vld [vmem:[#allocation14 + $0x750] sm:$0xf]
    %v2566 = vld [vmem:[#allocation14 + $0x754] sm:$0xff]
    %v2567 = vld [vmem:[#allocation14 + $0x75c] sm:$0xff]
    %v2568 = vld [vmem:[#allocation14 + $0x764] sm:$0xff]
    %v2569 = vld [vmem:[#allocation14 + $0x76c] sm:$0xf]
    %v2570 = vld [vmem:[#allocation14 + $0x770] sm:$0xff]
    %v2571 = vld [vmem:[#allocation14 + $0x778] sm:$0xff]
    %v2572 = vld [vmem:[#allocation14 + $0x780] sm:$0xff]
    %v2573 = vld [vmem:[#allocation14 + $0x788] sm:$0xf]
    %v2574 = vld [vmem:[#allocation14 + $0x78c] sm:$0xff]
    %v2575 = vld [vmem:[#allocation14 + $0x794] sm:$0xff]
    %v2576 = vld [vmem:[#allocation14 + $0x79c] sm:$0xff]
    %v2577 = vld [vmem:[#allocation14 + $0x7a4] sm:$0xf]
    %v2578 = vld [vmem:[#allocation14 + $0x7a8] sm:$0xff]
    %v2579 = vld [vmem:[#allocation14 + $0x7b0] sm:$0xff]
    %v2580 = vld [vmem:[#allocation14 + $0x7b8] sm:$0xff]
    %v2581 = vld [vmem:[#allocation14 + $0x7c0] sm:$0xf]
    %v2582 = vld [vmem:[#allocation14 + $0x7c4] sm:$0xff]
    %v2583 = vld [vmem:[#allocation14 + $0x7cc] sm:$0xff]
    %v2584 = vld [vmem:[#allocation14 + $0x7d4] sm:$0xff]
    %v2585 = vld [vmem:[#allocation14 + $0x7dc] sm:$0xf]
    %v2586 = vld [vmem:[#allocation14 + $0x7e0] sm:$0xff]
    %v2587 = vld [vmem:[#allocation14 + $0x7e8] sm:$0xff]
    %v2588 = vld [vmem:[#allocation14 + $0x7f0] sm:$0xff]
    %v2589 = vld [vmem:[#allocation14 + $0x7f8] sm:$0xf]
    %v2590 = vld [vmem:[#allocation14 + $0x7fc] sm:$0xff]
    %v2591 = vld [vmem:[#allocation14 + $0x804] sm:$0xff]
    %v2592 = vld [vmem:[#allocation14 + $0x80c] sm:$0xff]
    %v2593 = vld [vmem:[#allocation14 + $0x814] sm:$0xf]
    %v2594 = vld [vmem:[#allocation14 + $0x818] sm:$0xff]
    %v2595 = vld [vmem:[#allocation14 + $0x820] sm:$0xff]
    %v2596 = vld [vmem:[#allocation14 + $0x828] sm:$0xff]
    %v2597 = vld [vmem:[#allocation14 + $0x830] sm:$0xf]
    %v2598 = vld [vmem:[#allocation14 + $0x834] sm:$0xff]
    %v2599 = vld [vmem:[#allocation14 + $0x83c] sm:$0xff]
    %v2600 = vld [vmem:[#allocation14 + $0x844] sm:$0xff]
    %v2601 = vld [vmem:[#allocation14 + $0x84c] sm:$0xf]
    %v2602 = vld [vmem:[#allocation14 + $0x850] sm:$0xff]
    %v2603 = vld [vmem:[#allocation14 + $0x858] sm:$0xff]
    %v2604 = vld [vmem:[#allocation14 + $0x860] sm:$0xff]
    %v2605 = vld [vmem:[#allocation14 + $0x868] sm:$0xf]
    %v2606 = vld [vmem:[#allocation14 + $0x86c] sm:$0xff]
    %v2607 = vld [vmem:[#allocation14 + $0x874] sm:$0xff]
    %v2608 = vld [vmem:[#allocation14 + $0x87c] sm:$0xff]
    %v2609 = vld [vmem:[#allocation14 + $0x884] sm:$0xf]
    %v2610 = vld [vmem:[#allocation14 + $0x888] sm:$0xff]
    %v2611 = vld [vmem:[#allocation14 + $0x890] sm:$0xff]
    %v2612 = vld [vmem:[#allocation14 + $0x898] sm:$0xff]
    %v2613 = vld [vmem:[#allocation14 + $0x8a0] sm:$0xf]
    %v2614 = vld [vmem:[#allocation14 + $0x8a4] sm:$0xff]
    %v2615 = vld [vmem:[#allocation14 + $0x8ac] sm:$0xff]
    %v2616 = vld [vmem:[#allocation14 + $0x8b4] sm:$0xff]
    %v2617 = vld [vmem:[#allocation14 + $0x8bc] sm:$0xf]
    %v2618 = vld [vmem:[#allocation14 + $0x8c0] sm:$0xff]
    %v2619 = vld [vmem:[#allocation14 + $0x8c8] sm:$0xff]
    %v2620 = vld [vmem:[#allocation14 + $0x8d0] sm:$0xff]
    %v2621 = vld [vmem:[#allocation14 + $0x8d8] sm:$0xf]
    %v2622 = vld [vmem:[#allocation14 + $0x8dc] sm:$0xff]
    %v2623 = vld [vmem:[#allocation14 + $0x8e4] sm:$0xff]
    %v2624 = vld [vmem:[#allocation14 + $0x8ec] sm:$0xff]
    %v2625 = vld [vmem:[#allocation14 + $0x8f4] sm:$0xf]
    %v2626 = vld [vmem:[#allocation14 + $0x8f8] sm:$0xff]
    %v2627 = vld [vmem:[#allocation14 + $0x900] sm:$0xff]
    %v2628 = vld [vmem:[#allocation14 + $0x908] sm:$0xff]
    %v2629 = vld [vmem:[#allocation14 + $0x910] sm:$0xf]
    %v2630 = vld [vmem:[#allocation14 + $0x914] sm:$0xff]
    %v2631 = vld [vmem:[#allocation14 + $0x91c] sm:$0xff]
    %v2632 = vld [vmem:[#allocation14 + $0x924] sm:$0xff]
    %v2633 = vld [vmem:[#allocation14 + $0x92c] sm:$0xf]
    %v2634 = vld [vmem:[#allocation14 + $0x930] sm:$0xff]
    %v2635 = vld [vmem:[#allocation14 + $0x938] sm:$0xff]
    %v2636 = vld [vmem:[#allocation14 + $0x940] sm:$0xff]
    %v2637 = vld [vmem:[#allocation14 + $0x948] sm:$0xf]
    %v2638 = vld [vmem:[#allocation14 + $0x94c] sm:$0xff]
    %v2639 = vld [vmem:[#allocation14 + $0x954] sm:$0xff]
    %v2640 = vld [vmem:[#allocation14 + $0x95c] sm:$0xff]
    %v2641 = vld [vmem:[#allocation14 + $0x964] sm:$0xf]
    %v2642 = vld [vmem:[#allocation14 + $0x968] sm:$0xff]
    %v2643 = vld [vmem:[#allocation14 + $0x970] sm:$0xff]
    %v2644 = vld [vmem:[#allocation14 + $0x978] sm:$0xff]
    %v2645 = vld [vmem:[#allocation14 + $0x980] sm:$0xf]
    %v2646 = vld [vmem:[#allocation14 + $0x984] sm:$0xff]
    %v2647 = vld [vmem:[#allocation14 + $0x98c] sm:$0xff]
    %v2648 = vld [vmem:[#allocation14 + $0x994] sm:$0xff]
    %v2649 = vld [vmem:[#allocation14 + $0x99c] sm:$0xf]
    %v2650 = vld [vmem:[#allocation14 + $0x9a0] sm:$0xff]
    %v2651 = vld [vmem:[#allocation14 + $0x9a8] sm:$0xff]
    %v2652 = vld [vmem:[#allocation14 + $0x9b0] sm:$0xff]
    %v2653 = vld [vmem:[#allocation14 + $0x9b8] sm:$0xf]
    %v2654 = vld [vmem:[#allocation14 + $0x9bc] sm:$0xff]
    %v2655 = vld [vmem:[#allocation14 + $0x9c4] sm:$0xff]
    %v2656 = vld [vmem:[#allocation14 + $0x9cc] sm:$0xff]
    %v2657 = vld [vmem:[#allocation14 + $0x9d4] sm:$0xf]
    %v2658 = vld [vmem:[#allocation14 + $0x9d8] sm:$0xff]
    %v2659 = vld [vmem:[#allocation14 + $0x9e0] sm:$0xff]
    %v2660 = vld [vmem:[#allocation14 + $0x9e8] sm:$0xff]
    %v2661 = vld [vmem:[#allocation14 + $0x9f0] sm:$0xf]
    %v2662 = vld [vmem:[#allocation14 + $0x9f4] sm:$0xff]
    %v2663 = vld [vmem:[#allocation14 + $0x9fc] sm:$0xff]
    %v2664 = vld [vmem:[#allocation14 + $0xa04] sm:$0xff]
    %v2665 = vld [vmem:[#allocation14 + $0xa0c] sm:$0xf]
    %v2666 = vld [vmem:[#allocation14 + $0xa10] sm:$0xff]
    %v2667 = vld [vmem:[#allocation14 + $0xa18] sm:$0xff]
    %v2668 = vld [vmem:[#allocation14 + $0xa20] sm:$0xff]
    %v2669 = vld [vmem:[#allocation14 + $0xa28] sm:$0xf]
    %v2670 = vld [vmem:[#allocation14 + $0xa2c] sm:$0xff]
    %v2671 = vld [vmem:[#allocation14 + $0xa34] sm:$0xff]
    %v2672 = vld [vmem:[#allocation14 + $0xa3c] sm:$0xff]
    %v2673 = vld [vmem:[#allocation14 + $0xa44] sm:$0xf]
    %v2674 = vld [vmem:[#allocation14 + $0xa48] sm:$0xff]
    %v2675 = vld [vmem:[#allocation14 + $0xa50] sm:$0xff]
    %v2676 = vld [vmem:[#allocation14 + $0xa58] sm:$0xff]
    %v2677 = vld [vmem:[#allocation14 + $0xa60] sm:$0xf]
    %v2678 = vld [vmem:[#allocation14 + $0xa64] sm:$0xff]
    %v2679 = vld [vmem:[#allocation14 + $0xa6c] sm:$0xff]
    %v2680 = vld [vmem:[#allocation14 + $0xa74] sm:$0xff]
    %v2681 = vld [vmem:[#allocation14 + $0xa7c] sm:$0xf]
    %v2682 = vld [vmem:[#allocation14 + $0xa80] sm:$0xff]
    %v2683 = vld [vmem:[#allocation14 + $0xa88] sm:$0xff]
    %v2684 = vld [vmem:[#allocation14 + $0xa90] sm:$0xff]
    %v2685 = vld [vmem:[#allocation14 + $0xa98] sm:$0xf]
    %v2686 = vld [vmem:[#allocation14 + $0xa9c] sm:$0xff]
    %v2687 = vld [vmem:[#allocation14 + $0xaa4] sm:$0xff]
    %v2688 = vld [vmem:[#allocation14 + $0xaac] sm:$0xff]
    %v2689 = vld [vmem:[#allocation14 + $0xab4] sm:$0xf]
    %v2690 = vld [vmem:[#allocation14 + $0xab8] sm:$0xff]
    %v2691 = vld [vmem:[#allocation14 + $0xac0] sm:$0xff]
    %v2692 = vld [vmem:[#allocation14 + $0xac8] sm:$0xff]
    %v2693 = vld [vmem:[#allocation14 + $0xad0] sm:$0xf]
    %v2694 = vld [vmem:[#allocation14 + $0xad4] sm:$0xff]
    %v2695 = vld [vmem:[#allocation14 + $0xadc] sm:$0xff]
    %v2696 = vld [vmem:[#allocation14 + $0xae4] sm:$0xff]
    %v2697 = vld [vmem:[#allocation14 + $0xaec] sm:$0xf]
    %v2698 = vld [vmem:[#allocation14 + $0xaf0] sm:$0xff]
    %v2699 = vld [vmem:[#allocation14 + $0xaf8] sm:$0xff]
    %v2700 = vld [vmem:[#allocation14 + $0xb00] sm:$0xff]
    %v2701 = vld [vmem:[#allocation14 + $0xb08] sm:$0xf]
    %v2702 = vld [vmem:[#allocation14 + $0xb0c] sm:$0xff]
    %v2703 = vld [vmem:[#allocation14 + $0xb14] sm:$0xff]
    %v2704 = vld [vmem:[#allocation14 + $0xb1c] sm:$0xff]
    %v2705 = vld [vmem:[#allocation14 + $0xb24] sm:$0xf]
    %v2706 = vld [vmem:[#allocation14 + $0xb28] sm:$0xff]
    %v2707 = vld [vmem:[#allocation14 + $0xb30] sm:$0xff]
    %v2708 = vld [vmem:[#allocation14 + $0xb38] sm:$0xff]
    %v2709 = vld [vmem:[#allocation14 + $0xb40] sm:$0xf]
    %v2710 = vld [vmem:[#allocation14 + $0xb44] sm:$0xff]
    %v2711 = vld [vmem:[#allocation14 + $0xb4c] sm:$0xff]
    %v2712 = vld [vmem:[#allocation14 + $0xb54] sm:$0xff]
    %v2713 = vld [vmem:[#allocation14 + $0xb5c] sm:$0xf]
    %v2714 = vld [vmem:[#allocation14 + $0xb60] sm:$0xff]
    %v2715 = vld [vmem:[#allocation14 + $0xb68] sm:$0xff]
    %v2716 = vld [vmem:[#allocation14 + $0xb70] sm:$0xff]
    %v2717 = vld [vmem:[#allocation14 + $0xb78] sm:$0xf]
    %v2718 = vld [vmem:[#allocation14 + $0xb7c] sm:$0xff]
    %v2719 = vld [vmem:[#allocation14 + $0xb84] sm:$0xff]
    %v2720 = vld [vmem:[#allocation14 + $0xb8c] sm:$0xff]
    %v2721 = vld [vmem:[#allocation14 + $0xb94] sm:$0xf]
    %v2722 = vld [vmem:[#allocation14 + $0xb98] sm:$0xff]
    %v2723 = vld [vmem:[#allocation14 + $0xba0] sm:$0xff]
    %v2724 = vld [vmem:[#allocation14 + $0xba8] sm:$0xff]
    %v2725 = vld [vmem:[#allocation14 + $0xbb0] sm:$0xf]
    %v2726 = vld [vmem:[#allocation14 + $0xbb4] sm:$0xff]
    %v2727 = vld [vmem:[#allocation14 + $0xbbc] sm:$0xff]
    %v2728 = vld [vmem:[#allocation14 + $0xbc4] sm:$0xff]
    %v2729 = vld [vmem:[#allocation14 + $0xbcc] sm:$0xf]
    %v2730 = vld [vmem:[#allocation14 + $0xbd0] sm:$0xff]
    %v2731 = vld [vmem:[#allocation14 + $0xbd8] sm:$0xff]
    %v2732 = vld [vmem:[#allocation14 + $0xbe0] sm:$0xff]
    %v2733 = vld [vmem:[#allocation14 + $0xbe8] sm:$0xf]
    %v2734 = vld [vmem:[#allocation14 + $0xbec] sm:$0xff]
    %v2735 = vld [vmem:[#allocation14 + $0xbf4] sm:$0xff]
    %v2736 = vld [vmem:[#allocation14 + $0xbfc] sm:$0xff]
    %v2737 = vld [vmem:[#allocation14 + $0xc04] sm:$0xf]
    %v2738 = vld [vmem:[#allocation14 + $0xc08] sm:$0xff]
    %v2739 = vld [vmem:[#allocation14 + $0xc10] sm:$0xff]
    %v2740 = vld [vmem:[#allocation14 + $0xc18] sm:$0xff]
    %v2741 = vld [vmem:[#allocation14 + $0xc20] sm:$0xf]
    %v2742 = vld [vmem:[#allocation14 + $0xc24] sm:$0xff]
    %v2743 = vld [vmem:[#allocation14 + $0xc2c] sm:$0xff]
    %v2744 = vld [vmem:[#allocation14 + $0xc34] sm:$0xff]
    %v2745 = vld [vmem:[#allocation14 + $0xc3c] sm:$0xf]
    %v2746 = vld [vmem:[#allocation16] sm:$0xff]
    %v2748 = vlaneseq
    %v2749 = vshrl.u32 %v2748, 7
    %v2750 = vsub.s32 0, %v2749
    %v2751 = vrot.slane %v2746, %v2750
    %v2752 = vlaneseq
    %v2753 = vshrl.u32 %v2752, 7
    %v2754 = vsub.s32 1, %v2753
    %v2755 = vrot.slane %v2746, %v2754
    %v2756 = vlaneseq
    %v2757 = vshrl.u32 %v2756, 7
    %v2758 = vsub.s32 2, %v2757
    %v2759 = vrot.slane %v2746, %v2758
    %v2760 = vlaneseq
    %v2761 = vshrl.u32 %v2760, 7
    %v2762 = vsub.s32 3, %v2761
    %v2763 = vrot.slane %v2746, %v2762
    %v2764 = vlaneseq
    %v2765 = vshrl.u32 %v2764, 7
    %v2766 = vsub.s32 4, %v2765
    %v2767 = vrot.slane %v2746, %v2766
    %v2768 = vlaneseq
    %v2769 = vshrl.u32 %v2768, 7
    %v2770 = vsub.s32 5, %v2769
    %v2771 = vrot.slane %v2746, %v2770
    %v2772 = vlaneseq
    %v2773 = vshrl.u32 %v2772, 7
    %v2774 = vsub.s32 6, %v2773
    %v2775 = vrot.slane %v2746, %v2774
    %v3231 = vunpack.c.l.b16 %v2298
    %v3232 = vunpack.c.h.b16 %v2298
    %v3233 = vunpack.c.l.b16 %v2299
    %v3234 = vunpack.c.h.b16 %v2299
    %v3235 = vunpack.c.l.b16 %v2300
    %v3236 = vunpack.c.h.b16 %v2300
    %v3237 = vunpack.c.l.b16 %v2301
    %v3238 = vunpack.c.l.b16 %v2302
    %v3239 = vunpack.c.h.b16 %v2302
    %v3240 = vunpack.c.l.b16 %v2303
    %v3241 = vunpack.c.h.b16 %v2303
    %v3242 = vunpack.c.l.b16 %v2304
    %v3243 = vunpack.c.h.b16 %v2304
    %v3244 = vunpack.c.l.b16 %v2305
    %v3245 = vunpack.c.l.b16 %v2306
    %v3246 = vunpack.c.h.b16 %v2306
    %v3247 = vunpack.c.l.b16 %v2307
    %v3248 = vunpack.c.h.b16 %v2307
    %v3249 = vunpack.c.l.b16 %v2308
    %v3250 = vunpack.c.h.b16 %v2308
    %v3251 = vunpack.c.l.b16 %v2309
    %v3252 = vunpack.c.l.b16 %v2310
    %v3253 = vunpack.c.h.b16 %v2310
    %v3254 = vunpack.c.l.b16 %v2311
    %v3255 = vunpack.c.h.b16 %v2311
    %v3256 = vunpack.c.l.b16 %v2312
    %v3257 = vunpack.c.h.b16 %v2312
    %v3258 = vunpack.c.l.b16 %v2313
    %v3259 = vunpack.c.l.b16 %v2314
    %v3260 = vunpack.c.h.b16 %v2314
    %v3261 = vunpack.c.l.b16 %v2315
    %v3262 = vunpack.c.h.b16 %v2315
    %v3263 = vunpack.c.l.b16 %v2316
    %v3264 = vunpack.c.h.b16 %v2316
    %v3265 = vunpack.c.l.b16 %v2317
    %v3266 = vunpack.c.l.b16 %v2318
    %v3267 = vunpack.c.h.b16 %v2318
    %v3268 = vunpack.c.l.b16 %v2319
    %v3269 = vunpack.c.h.b16 %v2319
    %v3270 = vunpack.c.l.b16 %v2320
    %v3271 = vunpack.c.h.b16 %v2320
    %v3272 = vunpack.c.l.b16 %v2321
    %v3273 = vunpack.c.l.b16 %v2322
    %v3274 = vunpack.c.h.b16 %v2322
    %v3275 = vunpack.c.l.b16 %v2323
    %v3276 = vunpack.c.h.b16 %v2323
    %v3277 = vunpack.c.l.b16 %v2324
    %v3278 = vunpack.c.h.b16 %v2324
    %v3279 = vunpack.c.l.b16 %v2325
    %v3280 = vunpack.c.l.b16 %v2326
    %v3281 = vunpack.c.h.b16 %v2326
    %v3282 = vunpack.c.l.b16 %v2327
    %v3283 = vunpack.c.h.b16 %v2327
    %v3284 = vunpack.c.l.b16 %v2328
    %v3285 = vunpack.c.h.b16 %v2328
    %v3286 = vunpack.c.l.b16 %v2329
    %v3287 = vunpack.c.l.b16 %v2330
    %v3288 = vunpack.c.h.b16 %v2330
    %v3289 = vunpack.c.l.b16 %v2331
    %v3290 = vunpack.c.h.b16 %v2331
    %v3291 = vunpack.c.l.b16 %v2332
    %v3292 = vunpack.c.h.b16 %v2332
    %v3293 = vunpack.c.l.b16 %v2333
    %v3294 = vunpack.c.l.b16 %v2334
    %v3295 = vunpack.c.h.b16 %v2334
    %v3296 = vunpack.c.l.b16 %v2335
    %v3297 = vunpack.c.h.b16 %v2335
    %v3298 = vunpack.c.l.b16 %v2336
    %v3299 = vunpack.c.h.b16 %v2336
    %v3300 = vunpack.c.l.b16 %v2337
    %v3301 = vunpack.c.l.b16 %v2338
    %v3302 = vunpack.c.h.b16 %v2338
    %v3303 = vunpack.c.l.b16 %v2339
    %v3304 = vunpack.c.h.b16 %v2339
    %v3305 = vunpack.c.l.b16 %v2340
    %v3306 = vunpack.c.h.b16 %v2340
    %v3307 = vunpack.c.l.b16 %v2341
    %v3308 = vunpack.c.l.b16 %v2342
    %v3309 = vunpack.c.h.b16 %v2342
    %v3310 = vunpack.c.l.b16 %v2343
    %v3311 = vunpack.c.h.b16 %v2343
    %v3312 = vunpack.c.l.b16 %v2344
    %v3313 = vunpack.c.h.b16 %v2344
    %v3314 = vunpack.c.l.b16 %v2345
    %v3315 = vunpack.c.l.b16 %v2346
    %v3316 = vunpack.c.h.b16 %v2346
    %v3317 = vunpack.c.l.b16 %v2347
    %v3318 = vunpack.c.h.b16 %v2347
    %v3319 = vunpack.c.l.b16 %v2348
    %v3320 = vunpack.c.h.b16 %v2348
    %v3321 = vunpack.c.l.b16 %v2349
    %v3322 = vunpack.c.l.b16 %v2350
    %v3323 = vunpack.c.h.b16 %v2350
    %v3324 = vunpack.c.l.b16 %v2351
    %v3325 = vunpack.c.h.b16 %v2351
    %v3326 = vunpack.c.l.b16 %v2352
    %v3327 = vunpack.c.h.b16 %v2352
    %v3328 = vunpack.c.l.b16 %v2353
    %v3329 = vunpack.c.l.b16 %v2354
    %v3330 = vunpack.c.h.b16 %v2354
    %v3331 = vunpack.c.l.b16 %v2355
    %v3332 = vunpack.c.h.b16 %v2355
    %v3333 = vunpack.c.l.b16 %v2356
    %v3334 = vunpack.c.h.b16 %v2356
    %v3335 = vunpack.c.l.b16 %v2357
    %v3336 = vunpack.c.l.b16 %v2358
    %v3337 = vunpack.c.h.b16 %v2358
    %v3338 = vunpack.c.l.b16 %v2359
    %v3339 = vunpack.c.h.b16 %v2359
    %v3340 = vunpack.c.l.b16 %v2360
    %v3341 = vunpack.c.h.b16 %v2360
    %v3342 = vunpack.c.l.b16 %v2361
    %v3343 = vunpack.c.l.b16 %v2362
    %v3344 = vunpack.c.h.b16 %v2362
    %v3345 = vunpack.c.l.b16 %v2363
    %v3346 = vunpack.c.h.b16 %v2363
    %v3347 = vunpack.c.l.b16 %v2364
    %v3348 = vunpack.c.h.b16 %v2364
    %v3349 = vunpack.c.l.b16 %v2365
    %v3350 = vunpack.c.l.b16 %v2366
    %v3351 = vunpack.c.h.b16 %v2366
    %v3352 = vunpack.c.l.b16 %v2367
    %v3353 = vunpack.c.h.b16 %v2367
    %v3354 = vunpack.c.l.b16 %v2368
    %v3355 = vunpack.c.h.b16 %v2368
    %v3356 = vunpack.c.l.b16 %v2369
    %v3357 = vunpack.c.l.b16 %v2370
    %v3358 = vunpack.c.h.b16 %v2370
    %v3359 = vunpack.c.l.b16 %v2371
    %v3360 = vunpack.c.h.b16 %v2371
    %v3361 = vunpack.c.l.b16 %v2372
    %v3362 = vunpack.c.h.b16 %v2372
    %v3363 = vunpack.c.l.b16 %v2373
    %v3364 = vunpack.c.l.b16 %v2374
    %v3365 = vunpack.c.h.b16 %v2374
    %v3366 = vunpack.c.l.b16 %v2375
    %v3367 = vunpack.c.h.b16 %v2375
    %v3368 = vunpack.c.l.b16 %v2376
    %v3369 = vunpack.c.h.b16 %v2376
    %v3370 = vunpack.c.l.b16 %v2377
    %v3371 = vunpack.c.l.b16 %v2378
    %v3372 = vunpack.c.h.b16 %v2378
    %v3373 = vunpack.c.l.b16 %v2379
    %v3374 = vunpack.c.h.b16 %v2379
    %v3375 = vunpack.c.l.b16 %v2380
    %v3376 = vunpack.c.h.b16 %v2380
    %v3377 = vunpack.c.l.b16 %v2381
    %v3378 = vunpack.c.l.b16 %v2382
    %v3379 = vunpack.c.h.b16 %v2382
    %v3380 = vunpack.c.l.b16 %v2383
    %v3381 = vunpack.c.h.b16 %v2383
    %v3382 = vunpack.c.l.b16 %v2384
    %v3383 = vunpack.c.h.b16 %v2384
    %v3384 = vunpack.c.l.b16 %v2385
    %v3385 = vunpack.c.l.b16 %v2386
    %v3386 = vunpack.c.h.b16 %v2386
    %v3387 = vunpack.c.l.b16 %v2387
    %v3388 = vunpack.c.h.b16 %v2387
    %v3389 = vunpack.c.l.b16 %v2388
    %v3390 = vunpack.c.h.b16 %v2388
    %v3391 = vunpack.c.l.b16 %v2389
    %v3392 = vunpack.c.l.b16 %v2390
    %v3393 = vunpack.c.h.b16 %v2390
    %v3394 = vunpack.c.l.b16 %v2391
    %v3395 = vunpack.c.h.b16 %v2391
    %v3396 = vunpack.c.l.b16 %v2392
    %v3397 = vunpack.c.h.b16 %v2392
    %v3398 = vunpack.c.l.b16 %v2393
    %v3399 = vunpack.c.l.b16 %v2394
    %v3400 = vunpack.c.h.b16 %v2394
    %v3401 = vunpack.c.l.b16 %v2395
    %v3402 = vunpack.c.h.b16 %v2395
    %v3403 = vunpack.c.l.b16 %v2396
    %v3404 = vunpack.c.h.b16 %v2396
    %v3405 = vunpack.c.l.b16 %v2397
    %v3406 = vunpack.c.l.b16 %v2398
    %v3407 = vunpack.c.h.b16 %v2398
    %v3408 = vunpack.c.l.b16 %v2399
    %v3409 = vunpack.c.h.b16 %v2399
    %v3410 = vunpack.c.l.b16 %v2400
    %v3411 = vunpack.c.h.b16 %v2400
    %v3412 = vunpack.c.l.b16 %v2401
    %v3413 = vunpack.c.l.b16 %v2402
    %v3414 = vunpack.c.h.b16 %v2402
    %v3415 = vunpack.c.l.b16 %v2403
    %v3416 = vunpack.c.h.b16 %v2403
    %v3417 = vunpack.c.l.b16 %v2404
    %v3418 = vunpack.c.h.b16 %v2404
    %v3419 = vunpack.c.l.b16 %v2405
    %v3420 = vunpack.c.l.b16 %v2406
    %v3421 = vunpack.c.h.b16 %v2406
    %v3422 = vunpack.c.l.b16 %v2407
    %v3423 = vunpack.c.h.b16 %v2407
    %v3424 = vunpack.c.l.b16 %v2408
    %v3425 = vunpack.c.h.b16 %v2408
    %v3426 = vunpack.c.l.b16 %v2409
    %v3427 = vunpack.c.l.b16 %v2410
    %v3428 = vunpack.c.h.b16 %v2410
    %v3429 = vunpack.c.l.b16 %v2411
    %v3430 = vunpack.c.h.b16 %v2411
    %v3431 = vunpack.c.l.b16 %v2412
    %v3432 = vunpack.c.h.b16 %v2412
    %v3433 = vunpack.c.l.b16 %v2413
    %v3434 = vunpack.c.l.b16 %v2414
    %v3435 = vunpack.c.h.b16 %v2414
    %v3436 = vunpack.c.l.b16 %v2415
    %v3437 = vunpack.c.h.b16 %v2415
    %v3438 = vunpack.c.l.b16 %v2416
    %v3439 = vunpack.c.h.b16 %v2416
    %v3440 = vunpack.c.l.b16 %v2417
    %v3441 = vunpack.c.l.b16 %v2418
    %v3442 = vunpack.c.h.b16 %v2418
    %v3443 = vunpack.c.l.b16 %v2419
    %v3444 = vunpack.c.h.b16 %v2419
    %v3445 = vunpack.c.l.b16 %v2420
    %v3446 = vunpack.c.h.b16 %v2420
    %v3447 = vunpack.c.l.b16 %v2421
    %v3448 = vunpack.c.l.b16 %v2422
    %v3449 = vunpack.c.h.b16 %v2422
    %v3450 = vunpack.c.l.b16 %v2423
    %v3451 = vunpack.c.h.b16 %v2423
    %v3452 = vunpack.c.l.b16 %v2424
    %v3453 = vunpack.c.h.b16 %v2424
    %v3454 = vunpack.c.l.b16 %v2425
    %v3455 = vunpack.c.l.b16 %v2426
    %v3456 = vunpack.c.h.b16 %v2426
    %v3457 = vunpack.c.l.b16 %v2427
    %v3458 = vunpack.c.h.b16 %v2427
    %v3459 = vunpack.c.l.b16 %v2428
    %v3460 = vunpack.c.h.b16 %v2428
    %v3461 = vunpack.c.l.b16 %v2429
    %v3462 = vunpack.c.l.b16 %v2430
    %v3463 = vunpack.c.h.b16 %v2430
    %v3464 = vunpack.c.l.b16 %v2431
    %v3465 = vunpack.c.h.b16 %v2431
    %v3466 = vunpack.c.l.b16 %v2432
    %v3467 = vunpack.c.h.b16 %v2432
    %v3468 = vunpack.c.l.b16 %v2433
    %v3469 = vunpack.c.l.b16 %v2434
    %v3470 = vunpack.c.h.b16 %v2434
    %v3471 = vunpack.c.l.b16 %v2435
    %v3472 = vunpack.c.h.b16 %v2435
    %v3473 = vunpack.c.l.b16 %v2436
    %v3474 = vunpack.c.h.b16 %v2436
    %v3475 = vunpack.c.l.b16 %v2437
    %v3476 = vunpack.c.l.b16 %v2438
    %v3477 = vunpack.c.h.b16 %v2438
    %v3478 = vunpack.c.l.b16 %v2439
    %v3479 = vunpack.c.h.b16 %v2439
    %v3480 = vunpack.c.l.b16 %v2440
    %v3481 = vunpack.c.h.b16 %v2440
    %v3482 = vunpack.c.l.b16 %v2441
    %v3483 = vunpack.c.l.b16 %v2442
    %v3484 = vunpack.c.h.b16 %v2442
    %v3485 = vunpack.c.l.b16 %v2443
    %v3486 = vunpack.c.h.b16 %v2443
    %v3487 = vunpack.c.l.b16 %v2444
    %v3488 = vunpack.c.h.b16 %v2444
    %v3489 = vunpack.c.l.b16 %v2445
    %v3490 = vunpack.c.l.b16 %v2446
    %v3491 = vunpack.c.h.b16 %v2446
    %v3492 = vunpack.c.l.b16 %v2447
    %v3493 = vunpack.c.h.b16 %v2447
    %v3494 = vunpack.c.l.b16 %v2448
    %v3495 = vunpack.c.h.b16 %v2448
    %v3496 = vunpack.c.l.b16 %v2449
    %v3497 = vunpack.c.l.b16 %v2450
    %v3498 = vunpack.c.h.b16 %v2450
    %v3499 = vunpack.c.l.b16 %v2451
    %v3500 = vunpack.c.h.b16 %v2451
    %v3501 = vunpack.c.l.b16 %v2452
    %v3502 = vunpack.c.h.b16 %v2452
    %v3503 = vunpack.c.l.b16 %v2453
    %v3504 = vunpack.c.l.b16 %v2454
    %v3505 = vunpack.c.h.b16 %v2454
    %v3506 = vunpack.c.l.b16 %v2455
    %v3507 = vunpack.c.h.b16 %v2455
    %v3508 = vunpack.c.l.b16 %v2456
    %v3509 = vunpack.c.h.b16 %v2456
    %v3510 = vunpack.c.l.b16 %v2457
    %v3511 = vunpack.c.l.b16 %v2458
    %v3512 = vunpack.c.h.b16 %v2458
    %v3513 = vunpack.c.l.b16 %v2459
    %v3514 = vunpack.c.h.b16 %v2459
    %v3515 = vunpack.c.l.b16 %v2460
    %v3516 = vunpack.c.h.b16 %v2460
    %v3517 = vunpack.c.l.b16 %v2461
    %v3518 = vunpack.c.l.b16 %v2462
    %v3519 = vunpack.c.h.b16 %v2462
    %v3520 = vunpack.c.l.b16 %v2463
    %v3521 = vunpack.c.h.b16 %v2463
    %v3522 = vunpack.c.l.b16 %v2464
    %v3523 = vunpack.c.h.b16 %v2464
    %v3524 = vunpack.c.l.b16 %v2465
    %v3525 = vunpack.c.l.b16 %v2466
    %v3526 = vunpack.c.h.b16 %v2466
    %v3527 = vunpack.c.l.b16 %v2467
    %v3528 = vunpack.c.h.b16 %v2467
    %v3529 = vunpack.c.l.b16 %v2468
    %v3530 = vunpack.c.h.b16 %v2468
    %v3531 = vunpack.c.l.b16 %v2469
    %v3532 = vunpack.c.l.b16 %v2470
    %v3533 = vunpack.c.h.b16 %v2470
    %v3534 = vunpack.c.l.b16 %v2471
    %v3535 = vunpack.c.h.b16 %v2471
    %v3536 = vunpack.c.l.b16 %v2472
    %v3537 = vunpack.c.h.b16 %v2472
    %v3538 = vunpack.c.l.b16 %v2473
    %v3539 = vunpack.c.l.b16 %v2474
    %v3540 = vunpack.c.h.b16 %v2474
    %v3541 = vunpack.c.l.b16 %v2475
    %v3542 = vunpack.c.h.b16 %v2475
    %v3543 = vunpack.c.l.b16 %v2476
    %v3544 = vunpack.c.h.b16 %v2476
    %v3545 = vunpack.c.l.b16 %v2477
    %v3546 = vunpack.c.l.b16 %v2478
    %v3547 = vunpack.c.h.b16 %v2478
    %v3548 = vunpack.c.l.b16 %v2479
    %v3549 = vunpack.c.h.b16 %v2479
    %v3550 = vunpack.c.l.b16 %v2480
    %v3551 = vunpack.c.h.b16 %v2480
    %v3552 = vunpack.c.l.b16 %v2481
    %v3553 = vunpack.c.l.b16 %v2482
    %v3554 = vunpack.c.h.b16 %v2482
    %v3555 = vunpack.c.l.b16 %v2483
    %v3556 = vunpack.c.h.b16 %v2483
    %v3557 = vunpack.c.l.b16 %v2484
    %v3558 = vunpack.c.h.b16 %v2484
    %v3559 = vunpack.c.l.b16 %v2485
    %v3560 = vunpack.c.l.b16 %v2486
    %v3561 = vunpack.c.h.b16 %v2486
    %v3562 = vunpack.c.l.b16 %v2487
    %v3563 = vunpack.c.h.b16 %v2487
    %v3564 = vunpack.c.l.b16 %v2488
    %v3565 = vunpack.c.h.b16 %v2488
    %v3566 = vunpack.c.l.b16 %v2489
    %v3567 = vunpack.c.l.b16 %v2490
    %v3568 = vunpack.c.h.b16 %v2490
    %v3569 = vunpack.c.l.b16 %v2491
    %v3570 = vunpack.c.h.b16 %v2491
    %v3571 = vunpack.c.l.b16 %v2492
    %v3572 = vunpack.c.h.b16 %v2492
    %v3573 = vunpack.c.l.b16 %v2493
    %v3574 = vunpack.c.l.b16 %v2494
    %v3575 = vunpack.c.h.b16 %v2494
    %v3576 = vunpack.c.l.b16 %v2495
    %v3577 = vunpack.c.h.b16 %v2495
    %v3578 = vunpack.c.l.b16 %v2496
    %v3579 = vunpack.c.h.b16 %v2496
    %v3580 = vunpack.c.l.b16 %v2497
    %v3581 = vunpack.c.l.b16 %v2498
    %v3582 = vunpack.c.h.b16 %v2498
    %v3583 = vunpack.c.l.b16 %v2499
    %v3584 = vunpack.c.h.b16 %v2499
    %v3585 = vunpack.c.l.b16 %v2500
    %v3586 = vunpack.c.h.b16 %v2500
    %v3587 = vunpack.c.l.b16 %v2501
    %v3588 = vunpack.c.l.b16 %v2502
    %v3589 = vunpack.c.h.b16 %v2502
    %v3590 = vunpack.c.l.b16 %v2503
    %v3591 = vunpack.c.h.b16 %v2503
    %v3592 = vunpack.c.l.b16 %v2504
    %v3593 = vunpack.c.h.b16 %v2504
    %v3594 = vunpack.c.l.b16 %v2505
    %v3595 = vunpack.c.l.b16 %v2506
    %v3596 = vunpack.c.h.b16 %v2506
    %v3597 = vunpack.c.l.b16 %v2507
    %v3598 = vunpack.c.h.b16 %v2507
    %v3599 = vunpack.c.l.b16 %v2508
    %v3600 = vunpack.c.h.b16 %v2508
    %v3601 = vunpack.c.l.b16 %v2509
    %v3602 = vunpack.c.l.b16 %v2510
    %v3603 = vunpack.c.h.b16 %v2510
    %v3604 = vunpack.c.l.b16 %v2511
    %v3605 = vunpack.c.h.b16 %v2511
    %v3606 = vunpack.c.l.b16 %v2512
    %v3607 = vunpack.c.h.b16 %v2512
    %v3608 = vunpack.c.l.b16 %v2513
    %v3609 = vunpack.c.l.b16 %v2514
    %v3610 = vunpack.c.h.b16 %v2514
    %v3611 = vunpack.c.l.b16 %v2515
    %v3612 = vunpack.c.h.b16 %v2515
    %v3613 = vunpack.c.l.b16 %v2516
    %v3614 = vunpack.c.h.b16 %v2516
    %v3615 = vunpack.c.l.b16 %v2517
    %v3616 = vunpack.c.l.b16 %v2518
    %v3617 = vunpack.c.h.b16 %v2518
    %v3618 = vunpack.c.l.b16 %v2519
    %v3619 = vunpack.c.h.b16 %v2519
    %v3620 = vunpack.c.l.b16 %v2520
    %v3621 = vunpack.c.h.b16 %v2520
    %v3622 = vunpack.c.l.b16 %v2521
    %v3623 = vunpack.c.l.b16 %v2522
    %v3624 = vunpack.c.h.b16 %v2522
    %v3625 = vunpack.c.l.b16 %v2523
    %v3626 = vunpack.c.h.b16 %v2523
    %v3627 = vunpack.c.l.b16 %v2524
    %v3628 = vunpack.c.h.b16 %v2524
    %v3629 = vunpack.c.l.b16 %v2525
    %v3630 = vunpack.c.l.b16 %v2526
    %v3631 = vunpack.c.h.b16 %v2526
    %v3632 = vunpack.c.l.b16 %v2527
    %v3633 = vunpack.c.h.b16 %v2527
    %v3634 = vunpack.c.l.b16 %v2528
    %v3635 = vunpack.c.h.b16 %v2528
    %v3636 = vunpack.c.l.b16 %v2529
    %v3637 = vunpack.c.l.b16 %v2530
    %v3638 = vunpack.c.h.b16 %v2530
    %v3639 = vunpack.c.l.b16 %v2531
    %v3640 = vunpack.c.h.b16 %v2531
    %v3641 = vunpack.c.l.b16 %v2532
    %v3642 = vunpack.c.h.b16 %v2532
    %v3643 = vunpack.c.l.b16 %v2533
    %v3644 = vunpack.c.l.b16 %v2534
    %v3645 = vunpack.c.h.b16 %v2534
    %v3646 = vunpack.c.l.b16 %v2535
    %v3647 = vunpack.c.h.b16 %v2535
    %v3648 = vunpack.c.l.b16 %v2536
    %v3649 = vunpack.c.h.b16 %v2536
    %v3650 = vunpack.c.l.b16 %v2537
    %v3651 = vunpack.c.l.b16 %v2538
    %v3652 = vunpack.c.h.b16 %v2538
    %v3653 = vunpack.c.l.b16 %v2539
    %v3654 = vunpack.c.h.b16 %v2539
    %v3655 = vunpack.c.l.b16 %v2540
    %v3656 = vunpack.c.h.b16 %v2540
    %v3657 = vunpack.c.l.b16 %v2541
    %v3658 = vunpack.c.l.b16 %v2542
    %v3659 = vunpack.c.h.b16 %v2542
    %v3660 = vunpack.c.l.b16 %v2543
    %v3661 = vunpack.c.h.b16 %v2543
    %v3662 = vunpack.c.l.b16 %v2544
    %v3663 = vunpack.c.h.b16 %v2544
    %v3664 = vunpack.c.l.b16 %v2545
    %v3665 = vunpack.c.l.b16 %v2546
    %v3666 = vunpack.c.h.b16 %v2546
    %v3667 = vunpack.c.l.b16 %v2547
    %v3668 = vunpack.c.h.b16 %v2547
    %v3669 = vunpack.c.l.b16 %v2548
    %v3670 = vunpack.c.h.b16 %v2548
    %v3671 = vunpack.c.l.b16 %v2549
    %v3672 = vunpack.c.l.b16 %v2550
    %v3673 = vunpack.c.h.b16 %v2550
    %v3674 = vunpack.c.l.b16 %v2551
    %v3675 = vunpack.c.h.b16 %v2551
    %v3676 = vunpack.c.l.b16 %v2552
    %v3677 = vunpack.c.h.b16 %v2552
    %v3678 = vunpack.c.l.b16 %v2553
    %v3679 = vunpack.c.l.b16 %v2554
    %v3680 = vunpack.c.h.b16 %v2554
    %v3681 = vunpack.c.l.b16 %v2555
    %v3682 = vunpack.c.h.b16 %v2555
    %v3683 = vunpack.c.l.b16 %v2556
    %v3684 = vunpack.c.h.b16 %v2556
    %v3685 = vunpack.c.l.b16 %v2557
    %v3686 = vunpack.c.l.b16 %v2558
    %v3687 = vunpack.c.h.b16 %v2558
    %v3688 = vunpack.c.l.b16 %v2559
    %v3689 = vunpack.c.h.b16 %v2559
    %v3690 = vunpack.c.l.b16 %v2560
    %v3691 = vunpack.c.h.b16 %v2560
    %v3692 = vunpack.c.l.b16 %v2561
    %v3693 = vunpack.c.l.b16 %v2562
    %v3694 = vunpack.c.h.b16 %v2562
    %v3695 = vunpack.c.l.b16 %v2563
    %v3696 = vunpack.c.h.b16 %v2563
    %v3697 = vunpack.c.l.b16 %v2564
    %v3698 = vunpack.c.h.b16 %v2564
    %v3699 = vunpack.c.l.b16 %v2565
    %v3700 = vunpack.c.l.b16 %v2566
    %v3701 = vunpack.c.h.b16 %v2566
    %v3702 = vunpack.c.l.b16 %v2567
    %v3703 = vunpack.c.h.b16 %v2567
    %v3704 = vunpack.c.l.b16 %v2568
    %v3705 = vunpack.c.h.b16 %v2568
    %v3706 = vunpack.c.l.b16 %v2569
    %v3707 = vunpack.c.l.b16 %v2570
    %v3708 = vunpack.c.h.b16 %v2570
    %v3709 = vunpack.c.l.b16 %v2571
    %v3710 = vunpack.c.h.b16 %v2571
    %v3711 = vunpack.c.l.b16 %v2572
    %v3712 = vunpack.c.h.b16 %v2572
    %v3713 = vunpack.c.l.b16 %v2573
    %v3714 = vunpack.c.l.b16 %v2574
    %v3715 = vunpack.c.h.b16 %v2574
    %v3716 = vunpack.c.l.b16 %v2575
    %v3717 = vunpack.c.h.b16 %v2575
    %v3718 = vunpack.c.l.b16 %v2576
    %v3719 = vunpack.c.h.b16 %v2576
    %v3720 = vunpack.c.l.b16 %v2577
    %v3721 = vunpack.c.l.b16 %v2578
    %v3722 = vunpack.c.h.b16 %v2578
    %v3723 = vunpack.c.l.b16 %v2579
    %v3724 = vunpack.c.h.b16 %v2579
    %v3725 = vunpack.c.l.b16 %v2580
    %v3726 = vunpack.c.h.b16 %v2580
    %v3727 = vunpack.c.l.b16 %v2581
    %v3728 = vunpack.c.l.b16 %v2582
    %v3729 = vunpack.c.h.b16 %v2582
    %v3730 = vunpack.c.l.b16 %v2583
    %v3731 = vunpack.c.h.b16 %v2583
    %v3732 = vunpack.c.l.b16 %v2584
    %v3733 = vunpack.c.h.b16 %v2584
    %v3734 = vunpack.c.l.b16 %v2585
    %v3735 = vunpack.c.l.b16 %v2586
    %v3736 = vunpack.c.h.b16 %v2586
    %v3737 = vunpack.c.l.b16 %v2587
    %v3738 = vunpack.c.h.b16 %v2587
    %v3739 = vunpack.c.l.b16 %v2588
    %v3740 = vunpack.c.h.b16 %v2588
    %v3741 = vunpack.c.l.b16 %v2589
    %v3742 = vunpack.c.l.b16 %v2590
    %v3743 = vunpack.c.h.b16 %v2590
    %v3744 = vunpack.c.l.b16 %v2591
    %v3745 = vunpack.c.h.b16 %v2591
    %v3746 = vunpack.c.l.b16 %v2592
    %v3747 = vunpack.c.h.b16 %v2592
    %v3748 = vunpack.c.l.b16 %v2593
    %v3749 = vunpack.c.l.b16 %v2594
    %v3750 = vunpack.c.h.b16 %v2594
    %v3751 = vunpack.c.l.b16 %v2595
    %v3752 = vunpack.c.h.b16 %v2595
    %v3753 = vunpack.c.l.b16 %v2596
    %v3754 = vunpack.c.h.b16 %v2596
    %v3755 = vunpack.c.l.b16 %v2597
    %v3756 = vunpack.c.l.b16 %v2598
    %v3757 = vunpack.c.h.b16 %v2598
    %v3758 = vunpack.c.l.b16 %v2599
    %v3759 = vunpack.c.h.b16 %v2599
    %v3760 = vunpack.c.l.b16 %v2600
    %v3761 = vunpack.c.h.b16 %v2600
    %v3762 = vunpack.c.l.b16 %v2601
    %v3763 = vunpack.c.l.b16 %v2602
    %v3764 = vunpack.c.h.b16 %v2602
    %v3765 = vunpack.c.l.b16 %v2603
    %v3766 = vunpack.c.h.b16 %v2603
    %v3767 = vunpack.c.l.b16 %v2604
    %v3768 = vunpack.c.h.b16 %v2604
    %v3769 = vunpack.c.l.b16 %v2605
    %v3770 = vunpack.c.l.b16 %v2606
    %v3771 = vunpack.c.h.b16 %v2606
    %v3772 = vunpack.c.l.b16 %v2607
    %v3773 = vunpack.c.h.b16 %v2607
    %v3774 = vunpack.c.l.b16 %v2608
    %v3775 = vunpack.c.h.b16 %v2608
    %v3776 = vunpack.c.l.b16 %v2609
    %v3777 = vunpack.c.l.b16 %v2610
    %v3778 = vunpack.c.h.b16 %v2610
    %v3779 = vunpack.c.l.b16 %v2611
    %v3780 = vunpack.c.h.b16 %v2611
    %v3781 = vunpack.c.l.b16 %v2612
    %v3782 = vunpack.c.h.b16 %v2612
    %v3783 = vunpack.c.l.b16 %v2613
    %v3784 = vunpack.c.l.b16 %v2614
    %v3785 = vunpack.c.h.b16 %v2614
    %v3786 = vunpack.c.l.b16 %v2615
    %v3787 = vunpack.c.h.b16 %v2615
    %v3788 = vunpack.c.l.b16 %v2616
    %v3789 = vunpack.c.h.b16 %v2616
    %v3790 = vunpack.c.l.b16 %v2617
    %v3791 = vunpack.c.l.b16 %v2618
    %v3792 = vunpack.c.h.b16 %v2618
    %v3793 = vunpack.c.l.b16 %v2619
    %v3794 = vunpack.c.h.b16 %v2619
    %v3795 = vunpack.c.l.b16 %v2620
    %v3796 = vunpack.c.h.b16 %v2620
    %v3797 = vunpack.c.l.b16 %v2621
    %v3798 = vunpack.c.l.b16 %v2622
    %v3799 = vunpack.c.h.b16 %v2622
    %v3800 = vunpack.c.l.b16 %v2623
    %v3801 = vunpack.c.h.b16 %v2623
    %v3802 = vunpack.c.l.b16 %v2624
    %v3803 = vunpack.c.h.b16 %v2624
    %v3804 = vunpack.c.l.b16 %v2625
    %v3805 = vunpack.c.l.b16 %v2626
    %v3806 = vunpack.c.h.b16 %v2626
    %v3807 = vunpack.c.l.b16 %v2627
    %v3808 = vunpack.c.h.b16 %v2627
    %v3809 = vunpack.c.l.b16 %v2628
    %v3810 = vunpack.c.h.b16 %v2628
    %v3811 = vunpack.c.l.b16 %v2629
    %v3812 = vunpack.c.l.b16 %v2630
    %v3813 = vunpack.c.h.b16 %v2630
    %v3814 = vunpack.c.l.b16 %v2631
    %v3815 = vunpack.c.h.b16 %v2631
    %v3816 = vunpack.c.l.b16 %v2632
    %v3817 = vunpack.c.h.b16 %v2632
    %v3818 = vunpack.c.l.b16 %v2633
    %v3819 = vunpack.c.l.b16 %v2634
    %v3820 = vunpack.c.h.b16 %v2634
    %v3821 = vunpack.c.l.b16 %v2635
    %v3822 = vunpack.c.h.b16 %v2635
    %v3823 = vunpack.c.l.b16 %v2636
    %v3824 = vunpack.c.h.b16 %v2636
    %v3825 = vunpack.c.l.b16 %v2637
    %v3826 = vunpack.c.l.b16 %v2638
    %v3827 = vunpack.c.h.b16 %v2638
    %v3828 = vunpack.c.l.b16 %v2639
    %v3829 = vunpack.c.h.b16 %v2639
    %v3830 = vunpack.c.l.b16 %v2640
    %v3831 = vunpack.c.h.b16 %v2640
    %v3832 = vunpack.c.l.b16 %v2641
    %v3833 = vunpack.c.l.b16 %v2642
    %v3834 = vunpack.c.h.b16 %v2642
    %v3835 = vunpack.c.l.b16 %v2643
    %v3836 = vunpack.c.h.b16 %v2643
    %v3837 = vunpack.c.l.b16 %v2644
    %v3838 = vunpack.c.h.b16 %v2644
    %v3839 = vunpack.c.l.b16 %v2645
    %v3840 = vunpack.c.l.b16 %v2646
    %v3841 = vunpack.c.h.b16 %v2646
    %v3842 = vunpack.c.l.b16 %v2647
    %v3843 = vunpack.c.h.b16 %v2647
    %v3844 = vunpack.c.l.b16 %v2648
    %v3845 = vunpack.c.h.b16 %v2648
    %v3846 = vunpack.c.l.b16 %v2649
    %v3847 = vunpack.c.l.b16 %v2650
    %v3848 = vunpack.c.h.b16 %v2650
    %v3849 = vunpack.c.l.b16 %v2651
    %v3850 = vunpack.c.h.b16 %v2651
    %v3851 = vunpack.c.l.b16 %v2652
    %v3852 = vunpack.c.h.b16 %v2652
    %v3853 = vunpack.c.l.b16 %v2653
    %v3854 = vunpack.c.l.b16 %v2654
    %v3855 = vunpack.c.h.b16 %v2654
    %v3856 = vunpack.c.l.b16 %v2655
    %v3857 = vunpack.c.h.b16 %v2655
    %v3858 = vunpack.c.l.b16 %v2656
    %v3859 = vunpack.c.h.b16 %v2656
    %v3860 = vunpack.c.l.b16 %v2657
    %v3861 = vunpack.c.l.b16 %v2658
    %v3862 = vunpack.c.h.b16 %v2658
    %v3863 = vunpack.c.l.b16 %v2659
    %v3864 = vunpack.c.h.b16 %v2659
    %v3865 = vunpack.c.l.b16 %v2660
    %v3866 = vunpack.c.h.b16 %v2660
    %v3867 = vunpack.c.l.b16 %v2661
    %v3868 = vunpack.c.l.b16 %v2662
    %v3869 = vunpack.c.h.b16 %v2662
    %v3870 = vunpack.c.l.b16 %v2663
    %v3871 = vunpack.c.h.b16 %v2663
    %v3872 = vunpack.c.l.b16 %v2664
    %v3873 = vunpack.c.h.b16 %v2664
    %v3874 = vunpack.c.l.b16 %v2665
    %v3875 = vunpack.c.l.b16 %v2666
    %v3876 = vunpack.c.h.b16 %v2666
    %v3877 = vunpack.c.l.b16 %v2667
    %v3878 = vunpack.c.h.b16 %v2667
    %v3879 = vunpack.c.l.b16 %v2668
    %v3880 = vunpack.c.h.b16 %v2668
    %v3881 = vunpack.c.l.b16 %v2669
    %v3882 = vunpack.c.l.b16 %v2670
    %v3883 = vunpack.c.h.b16 %v2670
    %v3884 = vunpack.c.l.b16 %v2671
    %v3885 = vunpack.c.h.b16 %v2671
    %v3886 = vunpack.c.l.b16 %v2672
    %v3887 = vunpack.c.h.b16 %v2672
    %v3888 = vunpack.c.l.b16 %v2673
    %v3889 = vunpack.c.l.b16 %v2674
    %v3890 = vunpack.c.h.b16 %v2674
    %v3891 = vunpack.c.l.b16 %v2675
    %v3892 = vunpack.c.h.b16 %v2675
    %v3893 = vunpack.c.l.b16 %v2676
    %v3894 = vunpack.c.h.b16 %v2676
    %v3895 = vunpack.c.l.b16 %v2677
    %v3896 = vunpack.c.l.b16 %v2678
    %v3897 = vunpack.c.h.b16 %v2678
    %v3898 = vunpack.c.l.b16 %v2679
    %v3899 = vunpack.c.h.b16 %v2679
    %v3900 = vunpack.c.l.b16 %v2680
    %v3901 = vunpack.c.h.b16 %v2680
    %v3902 = vunpack.c.l.b16 %v2681
    %v3903 = vunpack.c.l.b16 %v2682
    %v3904 = vunpack.c.h.b16 %v2682
    %v3905 = vunpack.c.l.b16 %v2683
    %v3906 = vunpack.c.h.b16 %v2683
    %v3907 = vunpack.c.l.b16 %v2684
    %v3908 = vunpack.c.h.b16 %v2684
    %v3909 = vunpack.c.l.b16 %v2685
    %v3910 = vunpack.c.l.b16 %v2686
    %v3911 = vunpack.c.h.b16 %v2686
    %v3912 = vunpack.c.l.b16 %v2687
    %v3913 = vunpack.c.h.b16 %v2687
    %v3914 = vunpack.c.l.b16 %v2688
    %v3915 = vunpack.c.h.b16 %v2688
    %v3916 = vunpack.c.l.b16 %v2689
    %v3917 = vunpack.c.l.b16 %v2690
    %v3918 = vunpack.c.h.b16 %v2690
    %v3919 = vunpack.c.l.b16 %v2691
    %v3920 = vunpack.c.h.b16 %v2691
    %v3921 = vunpack.c.l.b16 %v2692
    %v3922 = vunpack.c.h.b16 %v2692
    %v3923 = vunpack.c.l.b16 %v2693
    %v3924 = vunpack.c.l.b16 %v2694
    %v3925 = vunpack.c.h.b16 %v2694
    %v3926 = vunpack.c.l.b16 %v2695
    %v3927 = vunpack.c.h.b16 %v2695
    %v3928 = vunpack.c.l.b16 %v2696
    %v3929 = vunpack.c.h.b16 %v2696
    %v3930 = vunpack.c.l.b16 %v2697
    %v3931 = vunpack.c.l.b16 %v2698
    %v3932 = vunpack.c.h.b16 %v2698
    %v3933 = vunpack.c.l.b16 %v2699
    %v3934 = vunpack.c.h.b16 %v2699
    %v3935 = vunpack.c.l.b16 %v2700
    %v3936 = vunpack.c.h.b16 %v2700
    %v3937 = vunpack.c.l.b16 %v2701
    %v3938 = vunpack.c.l.b16 %v2702
    %v3939 = vunpack.c.h.b16 %v2702
    %v3940 = vunpack.c.l.b16 %v2703
    %v3941 = vunpack.c.h.b16 %v2703
    %v3942 = vunpack.c.l.b16 %v2704
    %v3943 = vunpack.c.h.b16 %v2704
    %v3944 = vunpack.c.l.b16 %v2705
    %v3945 = vunpack.c.l.b16 %v2706
    %v3946 = vunpack.c.h.b16 %v2706
    %v3947 = vunpack.c.l.b16 %v2707
    %v3948 = vunpack.c.h.b16 %v2707
    %v3949 = vunpack.c.l.b16 %v2708
    %v3950 = vunpack.c.h.b16 %v2708
    %v3951 = vunpack.c.l.b16 %v2709
    %v3952 = vunpack.c.l.b16 %v2710
    %v3953 = vunpack.c.h.b16 %v2710
    %v3954 = vunpack.c.l.b16 %v2711
    %v3955 = vunpack.c.h.b16 %v2711
    %v3956 = vunpack.c.l.b16 %v2712
    %v3957 = vunpack.c.h.b16 %v2712
    %v3958 = vunpack.c.l.b16 %v2713
    %v3959 = vunpack.c.l.b16 %v2714
    %v3960 = vunpack.c.h.b16 %v2714
    %v3961 = vunpack.c.l.b16 %v2715
    %v3962 = vunpack.c.h.b16 %v2715
    %v3963 = vunpack.c.l.b16 %v2716
    %v3964 = vunpack.c.h.b16 %v2716
    %v3965 = vunpack.c.l.b16 %v2717
    %v3966 = vunpack.c.l.b16 %v2718
    %v3967 = vunpack.c.h.b16 %v2718
    %v3968 = vunpack.c.l.b16 %v2719
    %v3969 = vunpack.c.h.b16 %v2719
    %v3970 = vunpack.c.l.b16 %v2720
    %v3971 = vunpack.c.h.b16 %v2720
    %v3972 = vunpack.c.l.b16 %v2721
    %v3973 = vunpack.c.l.b16 %v2722
    %v3974 = vunpack.c.h.b16 %v2722
    %v3975 = vunpack.c.l.b16 %v2723
    %v3976 = vunpack.c.h.b16 %v2723
    %v3977 = vunpack.c.l.b16 %v2724
    %v3978 = vunpack.c.h.b16 %v2724
    %v3979 = vunpack.c.l.b16 %v2725
    %v3980 = vunpack.c.l.b16 %v2726
    %v3981 = vunpack.c.h.b16 %v2726
    %v3982 = vunpack.c.l.b16 %v2727
    %v3983 = vunpack.c.h.b16 %v2727
    %v3984 = vunpack.c.l.b16 %v2728
    %v3985 = vunpack.c.h.b16 %v2728
    %v3986 = vunpack.c.l.b16 %v2729
    %v3987 = vunpack.c.l.b16 %v2730
    %v3988 = vunpack.c.h.b16 %v2730
    %v3989 = vunpack.c.l.b16 %v2731
    %v3990 = vunpack.c.h.b16 %v2731
    %v3991 = vunpack.c.l.b16 %v2732
    %v3992 = vunpack.c.h.b16 %v2732
    %v3993 = vunpack.c.l.b16 %v2733
    %v3994 = vunpack.c.l.b16 %v2734
    %v3995 = vunpack.c.h.b16 %v2734
    %v3996 = vunpack.c.l.b16 %v2735
    %v3997 = vunpack.c.h.b16 %v2735
    %v3998 = vunpack.c.l.b16 %v2736
    %v3999 = vunpack.c.h.b16 %v2736
    %v4000 = vunpack.c.l.b16 %v2737
    %v4001 = vunpack.c.l.b16 %v2738
    %v4002 = vunpack.c.h.b16 %v2738
    %v4003 = vunpack.c.l.b16 %v2739
    %v4004 = vunpack.c.h.b16 %v2739
    %v4005 = vunpack.c.l.b16 %v2740
    %v4006 = vunpack.c.h.b16 %v2740
    %v4007 = vunpack.c.l.b16 %v2741
    %v4008 = vunpack.c.l.b16 %v2742
    %v4009 = vunpack.c.h.b16 %v2742
    %v4010 = vunpack.c.l.b16 %v2743
    %v4011 = vunpack.c.h.b16 %v2743
    %v4012 = vunpack.c.l.b16 %v2744
    %v4013 = vunpack.c.h.b16 %v2744
    %v4014 = vunpack.c.l.b16 %v2745
    %v4015 = vpack.c.b16 %v3238, %v3231
    %v4016 = vpack.c.b16 %v3239, %v3232
    %v4017 = vpack.c.b16 %v3240, %v3233
    %v4018 = vpack.c.b16 %v3241, %v3234
    %v4019 = vpack.c.b16 %v3242, %v3235
    %v4020 = vpack.c.b16 %v3243, %v3236
    %v4021 = vpack.c.b16 %v3244, %v3237
    %v4022 = vpack.c.b16 %v3252, %v3245
    %v4023 = vpack.c.b16 %v3253, %v3246
    %v4024 = vpack.c.b16 %v3254, %v3247
    %v4025 = vpack.c.b16 %v3255, %v3248
    %v4026 = vpack.c.b16 %v3256, %v3249
    %v4027 = vpack.c.b16 %v3257, %v3250
    %v4028 = vpack.c.b16 %v3258, %v3251
    %v4029 = vpack.c.b16 %v3266, %v3259
    %v4030 = vpack.c.b16 %v3267, %v3260
    %v4031 = vpack.c.b16 %v3268, %v3261
    %v4032 = vpack.c.b16 %v3269, %v3262
    %v4033 = vpack.c.b16 %v3270, %v3263
    %v4034 = vpack.c.b16 %v3271, %v3264
    %v4035 = vpack.c.b16 %v3272, %v3265
    %v4036 = vpack.c.b16 %v3280, %v3273
    %v4037 = vpack.c.b16 %v3281, %v3274
    %v4038 = vpack.c.b16 %v3282, %v3275
    %v4039 = vpack.c.b16 %v3283, %v3276
    %v4040 = vpack.c.b16 %v3284, %v3277
    %v4041 = vpack.c.b16 %v3285, %v3278
    %v4042 = vpack.c.b16 %v3286, %v3279
    %v4043 = vpack.c.b16 %v3294, %v3287
    %v4044 = vpack.c.b16 %v3295, %v3288
    %v4045 = vpack.c.b16 %v3296, %v3289
    %v4046 = vpack.c.b16 %v3297, %v3290
    %v4047 = vpack.c.b16 %v3298, %v3291
    %v4048 = vpack.c.b16 %v3299, %v3292
    %v4049 = vpack.c.b16 %v3300, %v3293
    %v4050 = vpack.c.b16 %v3308, %v3301
    %v4051 = vpack.c.b16 %v3309, %v3302
    %v4052 = vpack.c.b16 %v3310, %v3303
    %v4053 = vpack.c.b16 %v3311, %v3304
    %v4054 = vpack.c.b16 %v3312, %v3305
    %v4055 = vpack.c.b16 %v3313, %v3306
    %v4056 = vpack.c.b16 %v3314, %v3307
    %v4057 = vpack.c.b16 %v3322, %v3315
    %v4058 = vpack.c.b16 %v3323, %v3316
    %v4059 = vpack.c.b16 %v3324, %v3317
    %v4060 = vpack.c.b16 %v3325, %v3318
    %v4061 = vpack.c.b16 %v3326, %v3319
    %v4062 = vpack.c.b16 %v3327, %v3320
    %v4063 = vpack.c.b16 %v3328, %v3321
    %v4064 = vpack.c.b16 %v3336, %v3329
    %v4065 = vpack.c.b16 %v3337, %v3330
    %v4066 = vpack.c.b16 %v3338, %v3331
    %v4067 = vpack.c.b16 %v3339, %v3332
    %v4068 = vpack.c.b16 %v3340, %v3333
    %v4069 = vpack.c.b16 %v3341, %v3334
    %v4070 = vpack.c.b16 %v3342, %v3335
    %v4071 = vpack.c.b16 %v3350, %v3343
    %v4072 = vpack.c.b16 %v3351, %v3344
    %v4073 = vpack.c.b16 %v3352, %v3345
    %v4074 = vpack.c.b16 %v3353, %v3346
    %v4075 = vpack.c.b16 %v3354, %v3347
    %v4076 = vpack.c.b16 %v3355, %v3348
    %v4077 = vpack.c.b16 %v3356, %v3349
    %v4078 = vpack.c.b16 %v3364, %v3357
    %v4079 = vpack.c.b16 %v3365, %v3358
    %v4080 = vpack.c.b16 %v3366, %v3359
    %v4081 = vpack.c.b16 %v3367, %v3360
    %v4082 = vpack.c.b16 %v3368, %v3361
    %v4083 = vpack.c.b16 %v3369, %v3362
    %v4084 = vpack.c.b16 %v3370, %v3363
    %v4085 = vpack.c.b16 %v3378, %v3371
    %v4086 = vpack.c.b16 %v3379, %v3372
    %v4087 = vpack.c.b16 %v3380, %v3373
    %v4088 = vpack.c.b16 %v3381, %v3374
    %v4089 = vpack.c.b16 %v3382, %v3375
    %v4090 = vpack.c.b16 %v3383, %v3376
    %v4091 = vpack.c.b16 %v3384, %v3377
    %v4092 = vpack.c.b16 %v3392, %v3385
    %v4093 = vpack.c.b16 %v3393, %v3386
    %v4094 = vpack.c.b16 %v3394, %v3387
    %v4095 = vpack.c.b16 %v3395, %v3388
    %v4096 = vpack.c.b16 %v3396, %v3389
    %v4097 = vpack.c.b16 %v3397, %v3390
    %v4098 = vpack.c.b16 %v3398, %v3391
    %v4099 = vpack.c.b16 %v3406, %v3399
    %v4100 = vpack.c.b16 %v3407, %v3400
    %v4101 = vpack.c.b16 %v3408, %v3401
    %v4102 = vpack.c.b16 %v3409, %v3402
    %v4103 = vpack.c.b16 %v3410, %v3403
    %v4104 = vpack.c.b16 %v3411, %v3404
    %v4105 = vpack.c.b16 %v3412, %v3405
    %v4106 = vpack.c.b16 %v3420, %v3413
    %v4107 = vpack.c.b16 %v3421, %v3414
    %v4108 = vpack.c.b16 %v3422, %v3415
    %v4109 = vpack.c.b16 %v3423, %v3416
    %v4110 = vpack.c.b16 %v3424, %v3417
    %v4111 = vpack.c.b16 %v3425, %v3418
    %v4112 = vpack.c.b16 %v3426, %v3419
    %v4113 = vpack.c.b16 %v3434, %v3427
    %v4114 = vpack.c.b16 %v3435, %v3428
    %v4115 = vpack.c.b16 %v3436, %v3429
    %v4116 = vpack.c.b16 %v3437, %v3430
    %v4117 = vpack.c.b16 %v3438, %v3431
    %v4118 = vpack.c.b16 %v3439, %v3432
    %v4119 = vpack.c.b16 %v3440, %v3433
    %v4120 = vpack.c.b16 %v3448, %v3441
    %v4121 = vpack.c.b16 %v3449, %v3442
    %v4122 = vpack.c.b16 %v3450, %v3443
    %v4123 = vpack.c.b16 %v3451, %v3444
    %v4124 = vpack.c.b16 %v3452, %v3445
    %v4125 = vpack.c.b16 %v3453, %v3446
    %v4126 = vpack.c.b16 %v3454, %v3447
    %v4127 = vpack.c.b16 %v3462, %v3455
    %v4128 = vpack.c.b16 %v3463, %v3456
    %v4129 = vpack.c.b16 %v3464, %v3457
    %v4130 = vpack.c.b16 %v3465, %v3458
    %v4131 = vpack.c.b16 %v3466, %v3459
    %v4132 = vpack.c.b16 %v3467, %v3460
    %v4133 = vpack.c.b16 %v3468, %v3461
    %v4134 = vpack.c.b16 %v3476, %v3469
    %v4135 = vpack.c.b16 %v3477, %v3470
    %v4136 = vpack.c.b16 %v3478, %v3471
    %v4137 = vpack.c.b16 %v3479, %v3472
    %v4138 = vpack.c.b16 %v3480, %v3473
    %v4139 = vpack.c.b16 %v3481, %v3474
    %v4140 = vpack.c.b16 %v3482, %v3475
    %v4141 = vpack.c.b16 %v3490, %v3483
    %v4142 = vpack.c.b16 %v3491, %v3484
    %v4143 = vpack.c.b16 %v3492, %v3485
    %v4144 = vpack.c.b16 %v3493, %v3486
    %v4145 = vpack.c.b16 %v3494, %v3487
    %v4146 = vpack.c.b16 %v3495, %v3488
    %v4147 = vpack.c.b16 %v3496, %v3489
    %v4148 = vpack.c.b16 %v3504, %v3497
    %v4149 = vpack.c.b16 %v3505, %v3498
    %v4150 = vpack.c.b16 %v3506, %v3499
    %v4151 = vpack.c.b16 %v3507, %v3500
    %v4152 = vpack.c.b16 %v3508, %v3501
    %v4153 = vpack.c.b16 %v3509, %v3502
    %v4154 = vpack.c.b16 %v3510, %v3503
    %v4155 = vpack.c.b16 %v3518, %v3511
    %v4156 = vpack.c.b16 %v3519, %v3512
    %v4157 = vpack.c.b16 %v3520, %v3513
    %v4158 = vpack.c.b16 %v3521, %v3514
    %v4159 = vpack.c.b16 %v3522, %v3515
    %v4160 = vpack.c.b16 %v3523, %v3516
    %v4161 = vpack.c.b16 %v3524, %v3517
    %v4162 = vpack.c.b16 %v3532, %v3525
    %v4163 = vpack.c.b16 %v3533, %v3526
    %v4164 = vpack.c.b16 %v3534, %v3527
    %v4165 = vpack.c.b16 %v3535, %v3528
    %v4166 = vpack.c.b16 %v3536, %v3529
    %v4167 = vpack.c.b16 %v3537, %v3530
    %v4168 = vpack.c.b16 %v3538, %v3531
    %v4169 = vpack.c.b16 %v3546, %v3539
    %v4170 = vpack.c.b16 %v3547, %v3540
    %v4171 = vpack.c.b16 %v3548, %v3541
    %v4172 = vpack.c.b16 %v3549, %v3542
    %v4173 = vpack.c.b16 %v3550, %v3543
    %v4174 = vpack.c.b16 %v3551, %v3544
    %v4175 = vpack.c.b16 %v3552, %v3545
    %v4176 = vpack.c.b16 %v3560, %v3553
    %v4177 = vpack.c.b16 %v3561, %v3554
    %v4178 = vpack.c.b16 %v3562, %v3555
    %v4179 = vpack.c.b16 %v3563, %v3556
    %v4180 = vpack.c.b16 %v3564, %v3557
    %v4181 = vpack.c.b16 %v3565, %v3558
    %v4182 = vpack.c.b16 %v3566, %v3559
    %v4183 = vpack.c.b16 %v3574, %v3567
    %v4184 = vpack.c.b16 %v3575, %v3568
    %v4185 = vpack.c.b16 %v3576, %v3569
    %v4186 = vpack.c.b16 %v3577, %v3570
    %v4187 = vpack.c.b16 %v3578, %v3571
    %v4188 = vpack.c.b16 %v3579, %v3572
    %v4189 = vpack.c.b16 %v3580, %v3573
    %v4190 = vpack.c.b16 %v3588, %v3581
    %v4191 = vpack.c.b16 %v3589, %v3582
    %v4192 = vpack.c.b16 %v3590, %v3583
    %v4193 = vpack.c.b16 %v3591, %v3584
    %v4194 = vpack.c.b16 %v3592, %v3585
    %v4195 = vpack.c.b16 %v3593, %v3586
    %v4196 = vpack.c.b16 %v3594, %v3587
    %v4197 = vpack.c.b16 %v3602, %v3595
    %v4198 = vpack.c.b16 %v3603, %v3596
    %v4199 = vpack.c.b16 %v3604, %v3597
    %v4200 = vpack.c.b16 %v3605, %v3598
    %v4201 = vpack.c.b16 %v3606, %v3599
    %v4202 = vpack.c.b16 %v3607, %v3600
    %v4203 = vpack.c.b16 %v3608, %v3601
    %v4204 = vpack.c.b16 %v3616, %v3609
    %v4205 = vpack.c.b16 %v3617, %v3610
    %v4206 = vpack.c.b16 %v3618, %v3611
    %v4207 = vpack.c.b16 %v3619, %v3612
    %v4208 = vpack.c.b16 %v3620, %v3613
    %v4209 = vpack.c.b16 %v3621, %v3614
    %v4210 = vpack.c.b16 %v3622, %v3615
    %v4211 = vpack.c.b16 %v3630, %v3623
    %v4212 = vpack.c.b16 %v3631, %v3624
    %v4213 = vpack.c.b16 %v3632, %v3625
    %v4214 = vpack.c.b16 %v3633, %v3626
    %v4215 = vpack.c.b16 %v3634, %v3627
    %v4216 = vpack.c.b16 %v3635, %v3628
    %v4217 = vpack.c.b16 %v3636, %v3629
    %v4218 = vpack.c.b16 %v3644, %v3637
    %v4219 = vpack.c.b16 %v3645, %v3638
    %v4220 = vpack.c.b16 %v3646, %v3639
    %v4221 = vpack.c.b16 %v3647, %v3640
    %v4222 = vpack.c.b16 %v3648, %v3641
    %v4223 = vpack.c.b16 %v3649, %v3642
    %v4224 = vpack.c.b16 %v3650, %v3643
    %v4225 = vpack.c.b16 %v3658, %v3651
    %v4226 = vpack.c.b16 %v3659, %v3652
    %v4227 = vpack.c.b16 %v3660, %v3653
    %v4228 = vpack.c.b16 %v3661, %v3654
    %v4229 = vpack.c.b16 %v3662, %v3655
    %v4230 = vpack.c.b16 %v3663, %v3656
    %v4231 = vpack.c.b16 %v3664, %v3657
    %v4232 = vpack.c.b16 %v3672, %v3665
    %v4233 = vpack.c.b16 %v3673, %v3666
    %v4234 = vpack.c.b16 %v3674, %v3667
    %v4235 = vpack.c.b16 %v3675, %v3668
    %v4236 = vpack.c.b16 %v3676, %v3669
    %v4237 = vpack.c.b16 %v3677, %v3670
    %v4238 = vpack.c.b16 %v3678, %v3671
    %v4239 = vpack.c.b16 %v3686, %v3679
    %v4240 = vpack.c.b16 %v3687, %v3680
    %v4241 = vpack.c.b16 %v3688, %v3681
    %v4242 = vpack.c.b16 %v3689, %v3682
    %v4243 = vpack.c.b16 %v3690, %v3683
    %v4244 = vpack.c.b16 %v3691, %v3684
    %v4245 = vpack.c.b16 %v3692, %v3685
    %v4246 = vpack.c.b16 %v3700, %v3693
    %v4247 = vpack.c.b16 %v3701, %v3694
    %v4248 = vpack.c.b16 %v3702, %v3695
    %v4249 = vpack.c.b16 %v3703, %v3696
    %v4250 = vpack.c.b16 %v3704, %v3697
    %v4251 = vpack.c.b16 %v3705, %v3698
    %v4252 = vpack.c.b16 %v3706, %v3699
    %v4253 = vpack.c.b16 %v3714, %v3707
    %v4254 = vpack.c.b16 %v3715, %v3708
    %v4255 = vpack.c.b16 %v3716, %v3709
    %v4256 = vpack.c.b16 %v3717, %v3710
    %v4257 = vpack.c.b16 %v3718, %v3711
    %v4258 = vpack.c.b16 %v3719, %v3712
    %v4259 = vpack.c.b16 %v3720, %v3713
    %v4260 = vpack.c.b16 %v3728, %v3721
    %v4261 = vpack.c.b16 %v3729, %v3722
    %v4262 = vpack.c.b16 %v3730, %v3723
    %v4263 = vpack.c.b16 %v3731, %v3724
    %v4264 = vpack.c.b16 %v3732, %v3725
    %v4265 = vpack.c.b16 %v3733, %v3726
    %v4266 = vpack.c.b16 %v3734, %v3727
    %v4267 = vpack.c.b16 %v3742, %v3735
    %v4268 = vpack.c.b16 %v3743, %v3736
    %v4269 = vpack.c.b16 %v3744, %v3737
    %v4270 = vpack.c.b16 %v3745, %v3738
    %v4271 = vpack.c.b16 %v3746, %v3739
    %v4272 = vpack.c.b16 %v3747, %v3740
    %v4273 = vpack.c.b16 %v3748, %v3741
    %v4274 = vpack.c.b16 %v3756, %v3749
    %v4275 = vpack.c.b16 %v3757, %v3750
    %v4276 = vpack.c.b16 %v3758, %v3751
    %v4277 = vpack.c.b16 %v3759, %v3752
    %v4278 = vpack.c.b16 %v3760, %v3753
    %v4279 = vpack.c.b16 %v3761, %v3754
    %v4280 = vpack.c.b16 %v3762, %v3755
    %v4281 = vpack.c.b16 %v3770, %v3763
    %v4282 = vpack.c.b16 %v3771, %v3764
    %v4283 = vpack.c.b16 %v3772, %v3765
    %v4284 = vpack.c.b16 %v3773, %v3766
    %v4285 = vpack.c.b16 %v3774, %v3767
    %v4286 = vpack.c.b16 %v3775, %v3768
    %v4287 = vpack.c.b16 %v3776, %v3769
    %v4288 = vpack.c.b16 %v3784, %v3777
    %v4289 = vpack.c.b16 %v3785, %v3778
    %v4290 = vpack.c.b16 %v3786, %v3779
    %v4291 = vpack.c.b16 %v3787, %v3780
    %v4292 = vpack.c.b16 %v3788, %v3781
    %v4293 = vpack.c.b16 %v3789, %v3782
    %v4294 = vpack.c.b16 %v3790, %v3783
    %v4295 = vpack.c.b16 %v3798, %v3791
    %v4296 = vpack.c.b16 %v3799, %v3792
    %v4297 = vpack.c.b16 %v3800, %v3793
    %v4298 = vpack.c.b16 %v3801, %v3794
    %v4299 = vpack.c.b16 %v3802, %v3795
    %v4300 = vpack.c.b16 %v3803, %v3796
    %v4301 = vpack.c.b16 %v3804, %v3797
    %v4302 = vpack.c.b16 %v3812, %v3805
    %v4303 = vpack.c.b16 %v3813, %v3806
    %v4304 = vpack.c.b16 %v3814, %v3807
    %v4305 = vpack.c.b16 %v3815, %v3808
    %v4306 = vpack.c.b16 %v3816, %v3809
    %v4307 = vpack.c.b16 %v3817, %v3810
    %v4308 = vpack.c.b16 %v3818, %v3811
    %v4309 = vpack.c.b16 %v3826, %v3819
    %v4310 = vpack.c.b16 %v3827, %v3820
    %v4311 = vpack.c.b16 %v3828, %v3821
    %v4312 = vpack.c.b16 %v3829, %v3822
    %v4313 = vpack.c.b16 %v3830, %v3823
    %v4314 = vpack.c.b16 %v3831, %v3824
    %v4315 = vpack.c.b16 %v3832, %v3825
    %v4316 = vpack.c.b16 %v3840, %v3833
    %v4317 = vpack.c.b16 %v3841, %v3834
    %v4318 = vpack.c.b16 %v3842, %v3835
    %v4319 = vpack.c.b16 %v3843, %v3836
    %v4320 = vpack.c.b16 %v3844, %v3837
    %v4321 = vpack.c.b16 %v3845, %v3838
    %v4322 = vpack.c.b16 %v3846, %v3839
    %v4323 = vpack.c.b16 %v3854, %v3847
    %v4324 = vpack.c.b16 %v3855, %v3848
    %v4325 = vpack.c.b16 %v3856, %v3849
    %v4326 = vpack.c.b16 %v3857, %v3850
    %v4327 = vpack.c.b16 %v3858, %v3851
    %v4328 = vpack.c.b16 %v3859, %v3852
    %v4329 = vpack.c.b16 %v3860, %v3853
    %v4330 = vpack.c.b16 %v3868, %v3861
    %v4331 = vpack.c.b16 %v3869, %v3862
    %v4332 = vpack.c.b16 %v3870, %v3863
    %v4333 = vpack.c.b16 %v3871, %v3864
    %v4334 = vpack.c.b16 %v3872, %v3865
    %v4335 = vpack.c.b16 %v3873, %v3866
    %v4336 = vpack.c.b16 %v3874, %v3867
    %v4337 = vpack.c.b16 %v3882, %v3875
    %v4338 = vpack.c.b16 %v3883, %v3876
    %v4339 = vpack.c.b16 %v3884, %v3877
    %v4340 = vpack.c.b16 %v3885, %v3878
    %v4341 = vpack.c.b16 %v3886, %v3879
    %v4342 = vpack.c.b16 %v3887, %v3880
    %v4343 = vpack.c.b16 %v3888, %v3881
    %v4344 = vpack.c.b16 %v3896, %v3889
    %v4345 = vpack.c.b16 %v3897, %v3890
    %v4346 = vpack.c.b16 %v3898, %v3891
    %v4347 = vpack.c.b16 %v3899, %v3892
    %v4348 = vpack.c.b16 %v3900, %v3893
    %v4349 = vpack.c.b16 %v3901, %v3894
    %v4350 = vpack.c.b16 %v3902, %v3895
    %v4351 = vpack.c.b16 %v3910, %v3903
    %v4352 = vpack.c.b16 %v3911, %v3904
    %v4353 = vpack.c.b16 %v3912, %v3905
    %v4354 = vpack.c.b16 %v3913, %v3906
    %v4355 = vpack.c.b16 %v3914, %v3907
    %v4356 = vpack.c.b16 %v3915, %v3908
    %v4357 = vpack.c.b16 %v3916, %v3909
    %v4358 = vpack.c.b16 %v3924, %v3917
    %v4359 = vpack.c.b16 %v3925, %v3918
    %v4360 = vpack.c.b16 %v3926, %v3919
    %v4361 = vpack.c.b16 %v3927, %v3920
    %v4362 = vpack.c.b16 %v3928, %v3921
    %v4363 = vpack.c.b16 %v3929, %v3922
    %v4364 = vpack.c.b16 %v3930, %v3923
    %v4365 = vpack.c.b16 %v3938, %v3931
    %v4366 = vpack.c.b16 %v3939, %v3932
    %v4367 = vpack.c.b16 %v3940, %v3933
    %v4368 = vpack.c.b16 %v3941, %v3934
    %v4369 = vpack.c.b16 %v3942, %v3935
    %v4370 = vpack.c.b16 %v3943, %v3936
    %v4371 = vpack.c.b16 %v3944, %v3937
    %v4372 = vpack.c.b16 %v3952, %v3945
    %v4373 = vpack.c.b16 %v3953, %v3946
    %v4374 = vpack.c.b16 %v3954, %v3947
    %v4375 = vpack.c.b16 %v3955, %v3948
    %v4376 = vpack.c.b16 %v3956, %v3949
    %v4377 = vpack.c.b16 %v3957, %v3950
    %v4378 = vpack.c.b16 %v3958, %v3951
    %v4379 = vpack.c.b16 %v3966, %v3959
    %v4380 = vpack.c.b16 %v3967, %v3960
    %v4381 = vpack.c.b16 %v3968, %v3961
    %v4382 = vpack.c.b16 %v3969, %v3962
    %v4383 = vpack.c.b16 %v3970, %v3963
    %v4384 = vpack.c.b16 %v3971, %v3964
    %v4385 = vpack.c.b16 %v3972, %v3965
    %v4386 = vpack.c.b16 %v3980, %v3973
    %v4387 = vpack.c.b16 %v3981, %v3974
    %v4388 = vpack.c.b16 %v3982, %v3975
    %v4389 = vpack.c.b16 %v3983, %v3976
    %v4390 = vpack.c.b16 %v3984, %v3977
    %v4391 = vpack.c.b16 %v3985, %v3978
    %v4392 = vpack.c.b16 %v3986, %v3979
    %v4393 = vpack.c.b16 %v3994, %v3987
    %v4394 = vpack.c.b16 %v3995, %v3988
    %v4395 = vpack.c.b16 %v3996, %v3989
    %v4396 = vpack.c.b16 %v3997, %v3990
    %v4397 = vpack.c.b16 %v3998, %v3991
    %v4398 = vpack.c.b16 %v3999, %v3992
    %v4399 = vpack.c.b16 %v4000, %v3993
    %v4400 = vpack.c.b16 %v4008, %v4001
    %v4401 = vpack.c.b16 %v4009, %v4002
    %v4402 = vpack.c.b16 %v4010, %v4003
    %v4403 = vpack.c.b16 %v4011, %v4004
    %v4404 = vpack.c.b16 %v4012, %v4005
    %v4405 = vpack.c.b16 %v4013, %v4006
    %v4406 = vpack.c.b16 %v4014, %v4007
    %4799 = vmatprep.subr.bf16.mxu0 %v4016
    %4800 = vmatpush1.bf16.msra.mxu0 %v4015
    %4801 = vmatprep.subr.bf16.mxu0 %v4023
    %4802 = vmatpush1.bf16.msra.mxu0 %v4022
    %4803 = vmatprep.subr.bf16.mxu0 %v4030
    %4804 = vmatpush1.bf16.msra.mxu0 %v4029
    %4805 = vmatprep.subr.bf16.mxu0 %v4037
    %4806 = vmatpush1.bf16.msra.mxu0 %v4036
    %4807 = vmatprep.subr.bf16.mxu0 %v4044
    %4808 = vmatpush1.bf16.msra.mxu0 %v4043
    %4809 = vmatprep.subr.bf16.mxu0 %v4051
    %4810 = vmatpush1.bf16.msra.mxu0 %v4050
    %4811 = vmatprep.subr.bf16.mxu0 %v4058
    %4812 = vmatpush1.bf16.msra.mxu0 %v4057
    %4813 = vmatprep.subr.bf16.mxu0 %v4065
    %4814 = vmatpush1.bf16.msra.mxu0 %v4064
    %4815 = vmatprep.subr.bf16.mxu0 %v4072
    %4816 = vmatpush1.bf16.msra.mxu0 %v4071
    %4817 = vmatprep.subr.bf16.mxu0 %v4079
    %4818 = vmatpush1.bf16.msra.mxu0 %v4078
    %4819 = vmatprep.subr.bf16.mxu0 %v4086
    %4820 = vmatpush1.bf16.msra.mxu0 %v4085
    %4821 = vmatprep.subr.bf16.mxu0 %v4093
    %4822 = vmatpush1.bf16.msra.mxu0 %v4092
    %4823 = vmatprep.subr.bf16.mxu0 %v4100
    %4824 = vmatpush1.bf16.msra.mxu0 %v4099
    %4825 = vmatprep.subr.bf16.mxu0 %v4107
    %4826 = vmatpush1.bf16.msra.mxu0 %v4106
    %4827 = vmatprep.subr.bf16.mxu0 %v4114
    %4828 = vmatpush1.bf16.msra.mxu0 %v4113
    %4829 = vmatprep.subr.bf16.mxu0 %v4121
    %4830 = vmatpush1.bf16.msra.mxu0 %v4120
    %4831 = vmatprep.mubr.bf16.mxu0 %v2292
    %4832 = vmatmul.mubr.bf16.gmra.mrb[0].mxu0 %v2291
    %v4833 = vpop.f32.mrb[0].mxu0
    %v4834 = vadd.f32 %v2751, %v4833
    %v4835 = vpop.f32.mrb[0].mxu0
    %v4836 = vadd.f32 %v2755, %v4835
    %v4837 = vpop.f32.mrb[0].mxu0
    %v4838 = vpop.f32.mrb[0].mxu0
    %4839 = vdwg.mxu0
    %4840 = vmatprep.subr.bf16.mxu0 %v4128
    %4841 = vmatpush1.bf16.msra.mxu0 %v4127
    %4842 = vmatprep.subr.bf16.mxu0 %v4135
    %4843 = vmatpush1.bf16.msra.mxu0 %v4134
    %4844 = vmatprep.subr.bf16.mxu0 %v4142
    %4845 = vmatpush1.bf16.msra.mxu0 %v4141
    %4846 = vmatprep.subr.bf16.mxu0 %v4149
    %4847 = vmatpush1.bf16.msra.mxu0 %v4148
    %4848 = vmatprep.subr.bf16.mxu0 %v4156
    %4849 = vmatpush1.bf16.msra.mxu0 %v4155
    %4850 = vmatprep.subr.bf16.mxu0 %v4163
    %4851 = vmatpush1.bf16.msra.mxu0 %v4162
    %4852 = vmatprep.subr.bf16.mxu0 %v4170
    %4853 = vmatpush1.bf16.msra.mxu0 %v4169
    %4854 = vmatprep.subr.bf16.mxu0 %v4177
    %4855 = vmatpush1.bf16.msra.mxu0 %v4176
    %4856 = vmatprep.subr.bf16.mxu0 %v4184
    %4857 = vmatpush1.bf16.msra.mxu0 %v4183
    %4858 = vmatprep.subr.bf16.mxu0 %v4191
    %4859 = vmatpush1.bf16.msra.mxu0 %v4190
    %4860 = vmatprep.subr.bf16.mxu0 %v4198
    %4861 = vmatpush1.bf16.msra.mxu0 %v4197
    %4862 = vmatprep.subr.bf16.mxu0 %v4205
    %4863 = vmatpush1.bf16.msra.mxu0 %v4204
    %4864 = vmatprep.subr.bf16.mxu0 %v4212
    %4865 = vmatpush1.bf16.msra.mxu0 %v4211
    %4866 = vmatprep.subr.bf16.mxu0 %v4219
    %4867 = vmatpush1.bf16.msra.mxu0 %v4218
    %4868 = vmatprep.subr.bf16.mxu0 %v4226
    %4869 = vmatpush1.bf16.msra.mxu0 %v4225
    %4870 = vmatprep.subr.bf16.mxu0 %v4233
    %4871 = vmatpush1.bf16.msra.mxu0 %v4232
    %4872 = vmatprep.mubr.bf16.mxu0 %v2294
    %4873 = vmatmul.mubr.bf16.gmra.mrb[0].mxu0 %v2293
    %v4874 = vpop.f32.mrb[0].mxu0
    %v4875 = vadd.f32 %v4834, %v4874
    %v4876 = vpop.f32.mrb[0].mxu0
    %v4877 = vadd.f32 %v4836, %v4876
    %v4878 = vpop.f32.mrb[0].mxu0
    %v4879 = vpop.f32.mrb[0].mxu0
    %4880 = vdwg.mxu0
    %4881 = vmatprep.subr.bf16.mxu0 %v4240
    %4882 = vmatpush1.bf16.msra.mxu0 %v4239
    %4883 = vmatprep.subr.bf16.mxu0 %v4247
    %4884 = vmatpush1.bf16.msra.mxu0 %v4246
    %4885 = vmatprep.subr.bf16.mxu0 %v4254
    %4886 = vmatpush1.bf16.msra.mxu0 %v4253
    %4887 = vmatprep.subr.bf16.mxu0 %v4261
    %4888 = vmatpush1.bf16.msra.mxu0 %v4260
    %4889 = vmatprep.subr.bf16.mxu0 %v4268
    %4890 = vmatpush1.bf16.msra.mxu0 %v4267
    %4891 = vmatprep.subr.bf16.mxu0 %v4275
    %4892 = vmatpush1.bf16.msra.mxu0 %v4274
    %4893 = vmatprep.subr.bf16.mxu0 %v4282
    %4894 = vmatpush1.bf16.msra.mxu0 %v4281
    %4895 = vmatprep.subr.bf16.mxu0 %v4289
    %4896 = vmatpush1.bf16.msra.mxu0 %v4288
    %4897 = vmatprep.subr.bf16.mxu0 %v4296
    %4898 = vmatpush1.bf16.msra.mxu0 %v4295
    %4899 = vmatprep.subr.bf16.mxu0 %v4303
    %4900 = vmatpush1.bf16.msra.mxu0 %v4302
    %4901 = vmatprep.subr.bf16.mxu0 %v4310
    %4902 = vmatpush1.bf16.msra.mxu0 %v4309
    %4903 = vmatprep.subr.bf16.mxu0 %v4317
    %4904 = vmatpush1.bf16.msra.mxu0 %v4316
    %4905 = vmatprep.subr.bf16.mxu0 %v4324
    %4906 = vmatpush1.bf16.msra.mxu0 %v4323
    %4907 = vmatprep.subr.bf16.mxu0 %v4331
    %4908 = vmatpush1.bf16.msra.mxu0 %v4330
    %4909 = vmatprep.subr.bf16.mxu0 %v4338
    %4910 = vmatpush1.bf16.msra.mxu0 %v4337
    %4911 = vmatprep.subr.bf16.mxu0 %v4345
    %4912 = vmatpush1.bf16.msra.mxu0 %v4344
    %4913 = vmatprep.mubr.bf16.mxu0 %v2296
    %4914 = vmatmul.mubr.bf16.gmra.mrb[0].mxu0 %v2295
    %v4915 = vpop.f32.mrb[0].mxu0
    %v4916 = vadd.f32 %v4875, %v4915
    %v4917 = vpop.f32.mrb[0].mxu0
    %v4918 = vadd.f32 %v4877, %v4917
    %v4919 = vpop.f32.mrb[0].mxu0
    %v4920 = vpop.f32.mrb[0].mxu0
    %4921 = vdwg.mxu0
    %4922 = vmatprep.subr.bf16.mxu0 %v4352
    %4923 = vmatpush1.bf16.msra.mxu0 %v4351
    %4924 = vmatprep.subr.bf16.mxu0 %v4359
    %4925 = vmatpush1.bf16.msra.mxu0 %v4358
    %4926 = vmatprep.subr.bf16.mxu0 %v4366
    %4927 = vmatpush1.bf16.msra.mxu0 %v4365
    %4928 = vmatprep.subr.bf16.mxu0 %v4373
    %4929 = vmatpush1.bf16.msra.mxu0 %v4372
    %4930 = vmatprep.subr.bf16.mxu0 %v4380
    %4931 = vmatpush1.bf16.msra.mxu0 %v4379
    %4932 = vmatprep.subr.bf16.mxu0 %v4387
    %4933 = vmatpush1.bf16.msra.mxu0 %v4386
    %4934 = vmatprep.subr.bf16.mxu0 %v4394
    %4935 = vmatpush1.bf16.msra.mxu0 %v4393
    %4936 = vmatprep.subr.bf16.mxu0 %v4401
    %4937 = vmatpush1.bf16.msra.mxu0 %v4400
    %4938 = vmatprep.subr.bf16.mxu0 0
    %4939 = vmatpush1.bf16.msra.mxu0 0
    %4940 = vmatprep.subr.bf16.mxu0 0
    %4941 = vmatpush1.bf16.msra.mxu0 0
    %4942 = vmatprep.subr.bf16.mxu0 0
    %4943 = vmatpush1.bf16.msra.mxu0 0
    %4944 = vmatprep.subr.bf16.mxu0 0
    %4945 = vmatpush1.bf16.msra.mxu0 0
    %4946 = vmatprep.subr.bf16.mxu0 0
    %4947 = vmatpush1.bf16.msra.mxu0 0
    %4948 = vmatprep.subr.bf16.mxu0 0
    %4949 = vmatpush1.bf16.msra.mxu0 0
    %4950 = vmatprep.subr.bf16.mxu0 0
    %4951 = vmatpush1.bf16.msra.mxu0 0
    %4952 = vmatprep.subr.bf16.mxu0 0
    %4953 = vmatpush1.bf16.msra.mxu0 0
    %4954 = vmatprep.mubr.bf16.mxu0 0
    %4955 = vmatmul.mubr.bf16.gmra.mrb[0].mxu0 %v2297
    %v4956 = vpop.f32.mrb[0].mxu0
    %v4957 = vadd.f32 %v4916, %v4956
    %v4958 = vpop.f32.mrb[0].mxu0
    %v4959 = vadd.f32 %v4918, %v4958
    %v4960 = vpop.f32.mrb[0].mxu0
    %v4961 = vpop.f32.mrb[0].mxu0
    %4962 = vdwg.mxu0
    %4963 = vmatprep.subr.bf16.mxu0 %v4018
    %4964 = vmatpush1.bf16.msra.mxu0 %v4017
    %4965 = vmatprep.subr.bf16.mxu0 %v4025
    %4966 = vmatpush1.bf16.msra.mxu0 %v4024
    %4967 = vmatprep.subr.bf16.mxu0 %v4032
    %4968 = vmatpush1.bf16.msra.mxu0 %v4031
    %4969 = vmatprep.subr.bf16.mxu0 %v4039
    %4970 = vmatpush1.bf16.msra.mxu0 %v4038
    %4971 = vmatprep.subr.bf16.mxu0 %v4046
    %4972 = vmatpush1.bf16.msra.mxu0 %v4045
    %4973 = vmatprep.subr.bf16.mxu0 %v4053
    %4974 = vmatpush1.bf16.msra.mxu0 %v4052
    %4975 = vmatprep.subr.bf16.mxu0 %v4060
    %4976 = vmatpush1.bf16.msra.mxu0 %v4059
    %4977 = vmatprep.subr.bf16.mxu0 %v4067
    %4978 = vmatpush1.bf16.msra.mxu0 %v4066
    %4979 = vmatprep.subr.bf16.mxu0 %v4074
    %4980 = vmatpush1.bf16.msra.mxu0 %v4073
    %4981 = vmatprep.subr.bf16.mxu0 %v4081
    %4982 = vmatpush1.bf16.msra.mxu0 %v4080
    %4983 = vmatprep.subr.bf16.mxu0 %v4088
    %4984 = vmatpush1.bf16.msra.mxu0 %v4087
    %4985 = vmatprep.subr.bf16.mxu0 %v4095
    %4986 = vmatpush1.bf16.msra.mxu0 %v4094
    %4987 = vmatprep.subr.bf16.mxu0 %v4102
    %4988 = vmatpush1.bf16.msra.mxu0 %v4101
    %4989 = vmatprep.subr.bf16.mxu0 %v4109
    %4990 = vmatpush1.bf16.msra.mxu0 %v4108
    %4991 = vmatprep.subr.bf16.mxu0 %v4116
    %4992 = vmatpush1.bf16.msra.mxu0 %v4115
    %4993 = vmatprep.subr.bf16.mxu0 %v4123
    %4994 = vmatpush1.bf16.msra.mxu0 %v4122
    %4995 = vmatprep.mubr.bf16.mxu0 %v2292
    %4996 = vmatmul.mubr.bf16.gmra.mrb[0].mxu0 %v2291
    %v4997 = vpop.f32.mrb[0].mxu0
    %v4998 = vadd.f32 %v2759, %v4997
    %v4999 = vpop.f32.mrb[0].mxu0
    %v5000 = vadd.f32 %v2763, %v4999
    %v5001 = vpop.f32.mrb[0].mxu0
    %v5002 = vpop.f32.mrb[0].mxu0
    %5003 = vdwg.mxu0
    %5004 = vmatprep.subr.bf16.mxu0 %v4130
    %5005 = vmatpush1.bf16.msra.mxu0 %v4129
    %5006 = vmatprep.subr.bf16.mxu0 %v4137
    %5007 = vmatpush1.bf16.msra.mxu0 %v4136
    %5008 = vmatprep.subr.bf16.mxu0 %v4144
    %5009 = vmatpush1.bf16.msra.mxu0 %v4143
    %5010 = vmatprep.subr.bf16.mxu0 %v4151
    %5011 = vmatpush1.bf16.msra.mxu0 %v4150
    %5012 = vmatprep.subr.bf16.mxu0 %v4158
    %5013 = vmatpush1.bf16.msra.mxu0 %v4157
    %5014 = vmatprep.subr.bf16.mxu0 %v4165
    %5015 = vmatpush1.bf16.msra.mxu0 %v4164
    %5016 = vmatprep.subr.bf16.mxu0 %v4172
    %5017 = vmatpush1.bf16.msra.mxu0 %v4171
    %5018 = vmatprep.subr.bf16.mxu0 %v4179
    %5019 = vmatpush1.bf16.msra.mxu0 %v4178
    %5020 = vmatprep.subr.bf16.mxu0 %v4186
    %5021 = vmatpush1.bf16.msra.mxu0 %v4185
    %5022 = vmatprep.subr.bf16.mxu0 %v4193
    %5023 = vmatpush1.bf16.msra.mxu0 %v4192
    %5024 = vmatprep.subr.bf16.mxu0 %v4200
    %5025 = vmatpush1.bf16.msra.mxu0 %v4199
    %5026 = vmatprep.subr.bf16.mxu0 %v4207
    %5027 = vmatpush1.bf16.msra.mxu0 %v4206
    %5028 = vmatprep.subr.bf16.mxu0 %v4214
    %5029 = vmatpush1.bf16.msra.mxu0 %v4213
    %5030 = vmatprep.subr.bf16.mxu0 %v4221
    %5031 = vmatpush1.bf16.msra.mxu0 %v4220
    %5032 = vmatprep.subr.bf16.mxu0 %v4228
    %5033 = vmatpush1.bf16.msra.mxu0 %v4227
    %5034 = vmatprep.subr.bf16.mxu0 %v4235
    %5035 = vmatpush1.bf16.msra.mxu0 %v4234
    %5036 = vmatprep.mubr.bf16.mxu0 %v2294
    %5037 = vmatmul.mubr.bf16.gmra.mrb[0].mxu0 %v2293
    %v5038 = vpop.f32.mrb[0].mxu0
    %v5039 = vadd.f32 %v4998, %v5038
    %v5040 = vpop.f32.mrb[0].mxu0
    %v5041 = vadd.f32 %v5000, %v5040
    %v5042 = vpop.f32.mrb[0].mxu0
    %v5043 = vpop.f32.mrb[0].mxu0
    %5044 = vdwg.mxu0
    %5045 = vmatprep.subr.bf16.mxu0 %v4242
    %5046 = vmatpush1.bf16.msra.mxu0 %v4241
    %5047 = vmatprep.subr.bf16.mxu0 %v4249
    %5048 = vmatpush1.bf16.msra.mxu0 %v4248
    %5049 = vmatprep.subr.bf16.mxu0 %v4256
    %5050 = vmatpush1.bf16.msra.mxu0 %v4255
    %5051 = vmatprep.subr.bf16.mxu0 %v4263
    %5052 = vmatpush1.bf16.msra.mxu0 %v4262
    %5053 = vmatprep.subr.bf16.mxu0 %v4270
    %5054 = vmatpush1.bf16.msra.mxu0 %v4269
    %5055 = vmatprep.subr.bf16.mxu0 %v4277
    %5056 = vmatpush1.bf16.msra.mxu0 %v4276
    %5057 = vmatprep.subr.bf16.mxu0 %v4284
    %5058 = vmatpush1.bf16.msra.mxu0 %v4283
    %5059 = vmatprep.subr.bf16.mxu0 %v4291
    %5060 = vmatpush1.bf16.msra.mxu0 %v4290
    %5061 = vmatprep.subr.bf16.mxu0 %v4298
    %5062 = vmatpush1.bf16.msra.mxu0 %v4297
    %5063 = vmatprep.subr.bf16.mxu0 %v4305
    %5064 = vmatpush1.bf16.msra.mxu0 %v4304
    %5065 = vmatprep.subr.bf16.mxu0 %v4312
    %5066 = vmatpush1.bf16.msra.mxu0 %v4311
    %5067 = vmatprep.subr.bf16.mxu0 %v4319
    %5068 = vmatpush1.bf16.msra.mxu0 %v4318
    %5069 = vmatprep.subr.bf16.mxu0 %v4326
    %5070 = vmatpush1.bf16.msra.mxu0 %v4325
    %5071 = vmatprep.subr.bf16.mxu0 %v4333
    %5072 = vmatpush1.bf16.msra.mxu0 %v4332
    %5073 = vmatprep.subr.bf16.mxu0 %v4340
    %5074 = vmatpush1.bf16.msra.mxu0 %v4339
    %5075 = vmatprep.subr.bf16.mxu0 %v4347
    %5076 = vmatpush1.bf16.msra.mxu0 %v4346
    %5077 = vmatprep.mubr.bf16.mxu0 %v2296
    %5078 = vmatmul.mubr.bf16.gmra.mrb[0].mxu0 %v2295
    %v5079 = vpop.f32.mrb[0].mxu0
    %v5080 = vadd.f32 %v5039, %v5079
    %v5081 = vpop.f32.mrb[0].mxu0
    %v5082 = vadd.f32 %v5041, %v5081
    %v5083 = vpop.f32.mrb[0].mxu0
    %v5084 = vpop.f32.mrb[0].mxu0
    %5085 = vdwg.mxu0
    %5086 = vmatprep.subr.bf16.mxu0 %v4354
    %5087 = vmatpush1.bf16.msra.mxu0 %v4353
    %5088 = vmatprep.subr.bf16.mxu0 %v4361
    %5089 = vmatpush1.bf16.msra.mxu0 %v4360
    %5090 = vmatprep.subr.bf16.mxu0 %v4368
    %5091 = vmatpush1.bf16.msra.mxu0 %v4367
    %5092 = vmatprep.subr.bf16.mxu0 %v4375
    %5093 = vmatpush1.bf16.msra.mxu0 %v4374
    %5094 = vmatprep.subr.bf16.mxu0 %v4382
    %5095 = vmatpush1.bf16.msra.mxu0 %v4381
    %5096 = vmatprep.subr.bf16.mxu0 %v4389
    %5097 = vmatpush1.bf16.msra.mxu0 %v4388
    %5098 = vmatprep.subr.bf16.mxu0 %v4396
    %5099 = vmatpush1.bf16.msra.mxu0 %v4395
    %5100 = vmatprep.subr.bf16.mxu0 %v4403
    %5101 = vmatpush1.bf16.msra.mxu0 %v4402
    %5102 = vmatprep.subr.bf16.mxu0 0
    %5103 = vmatpush1.bf16.msra.mxu0 0
    %5104 = vmatprep.subr.bf16.mxu0 0
    %5105 = vmatpush1.bf16.msra.mxu0 0
    %5106 = vmatprep.subr.bf16.mxu0 0
    %5107 = vmatpush1.bf16.msra.mxu0 0
    %5108 = vmatprep.subr.bf16.mxu0 0
    %5109 = vmatpush1.bf16.msra.mxu0 0
    %5110 = vmatprep.subr.bf16.mxu0 0
    %5111 = vmatpush1.bf16.msra.mxu0 0
    %5112 = vmatprep.subr.bf16.mxu0 0
    %5113 = vmatpush1.bf16.msra.mxu0 0
    %5114 = vmatprep.subr.bf16.mxu0 0
    %5115 = vmatpush1.bf16.msra.mxu0 0
    %5116 = vmatprep.subr.bf16.mxu0 0
    %5117 = vmatpush1.bf16.msra.mxu0 0
    %5118 = vmatprep.mubr.bf16.mxu0 0
    %5119 = vmatmul.mubr.bf16.gmra.mrb[0].mxu0 %v2297
    %v5120 = vpop.f32.mrb[0].mxu0
    %v5121 = vadd.f32 %v5080, %v5120
    %v5122 = vpop.f32.mrb[0].mxu0
    %v5123 = vadd.f32 %v5082, %v5122
    %v5124 = vpop.f32.mrb[0].mxu0
    %v5125 = vpop.f32.mrb[0].mxu0
    %5126 = vdwg.mxu0
    %5127 = vmatprep.subr.bf16.mxu0 %v4020
    %5128 = vmatpush1.bf16.msra.mxu0 %v4019
    %5129 = vmatprep.subr.bf16.mxu0 %v4027
    %5130 = vmatpush1.bf16.msra.mxu0 %v4026
    %5131 = vmatprep.subr.bf16.mxu0 %v4034
    %5132 = vmatpush1.bf16.msra.mxu0 %v4033
    %5133 = vmatprep.subr.bf16.mxu0 %v4041
    %5134 = vmatpush1.bf16.msra.mxu0 %v4040
    %5135 = vmatprep.subr.bf16.mxu0 %v4048
    %5136 = vmatpush1.bf16.msra.mxu0 %v4047
    %5137 = vmatprep.subr.bf16.mxu0 %v4055
    %5138 = vmatpush1.bf16.msra.mxu0 %v4054
    %5139 = vmatprep.subr.bf16.mxu0 %v4062
    %5140 = vmatpush1.bf16.msra.mxu0 %v4061
    %5141 = vmatprep.subr.bf16.mxu0 %v4069
    %5142 = vmatpush1.bf16.msra.mxu0 %v4068
    %5143 = vmatprep.subr.bf16.mxu0 %v4076
    %5144 = vmatpush1.bf16.msra.mxu0 %v4075
    %5145 = vmatprep.subr.bf16.mxu0 %v4083
    %5146 = vmatpush1.bf16.msra.mxu0 %v4082
    %5147 = vmatprep.subr.bf16.mxu0 %v4090
    %5148 = vmatpush1.bf16.msra.mxu0 %v4089
    %5149 = vmatprep.subr.bf16.mxu0 %v4097
    %5150 = vmatpush1.bf16.msra.mxu0 %v4096
    %5151 = vmatprep.subr.bf16.mxu0 %v4104
    %5152 = vmatpush1.bf16.msra.mxu0 %v4103
    %5153 = vmatprep.subr.bf16.mxu0 %v4111
    %5154 = vmatpush1.bf16.msra.mxu0 %v4110
    %5155 = vmatprep.subr.bf16.mxu0 %v4118
    %5156 = vmatpush1.bf16.msra.mxu0 %v4117
    %5157 = vmatprep.subr.bf16.mxu0 %v4125
    %5158 = vmatpush1.bf16.msra.mxu0 %v4124
    %5159 = vmatprep.mubr.bf16.mxu0 %v2292
    %5160 = vmatmul.mubr.bf16.gmra.mrb[0].mxu0 %v2291
    %v5161 = vpop.f32.mrb[0].mxu0
    %v5162 = vadd.f32 %v2767, %v5161
    %v5163 = vpop.f32.mrb[0].mxu0
    %v5164 = vadd.f32 %v2771, %v5163
    %v5165 = vpop.f32.mrb[0].mxu0
    %v5166 = vpop.f32.mrb[0].mxu0
    %5167 = vdwg.mxu0
    %5168 = vmatprep.subr.bf16.mxu0 %v4132
    %5169 = vmatpush1.bf16.msra.mxu0 %v4131
    %5170 = vmatprep.subr.bf16.mxu0 %v4139
    %5171 = vmatpush1.bf16.msra.mxu0 %v4138
    %5172 = vmatprep.subr.bf16.mxu0 %v4146
    %5173 = vmatpush1.bf16.msra.mxu0 %v4145
    %5174 = vmatprep.subr.bf16.mxu0 %v4153
    %5175 = vmatpush1.bf16.msra.mxu0 %v4152
    %5176 = vmatprep.subr.bf16.mxu0 %v4160
    %5177 = vmatpush1.bf16.msra.mxu0 %v4159
    %5178 = vmatprep.subr.bf16.mxu0 %v4167
    %5179 = vmatpush1.bf16.msra.mxu0 %v4166
    %5180 = vmatprep.subr.bf16.mxu0 %v4174
    %5181 = vmatpush1.bf16.msra.mxu0 %v4173
    %5182 = vmatprep.subr.bf16.mxu0 %v4181
    %5183 = vmatpush1.bf16.msra.mxu0 %v4180
    %5184 = vmatprep.subr.bf16.mxu0 %v4188
    %5185 = vmatpush1.bf16.msra.mxu0 %v4187
    %5186 = vmatprep.subr.bf16.mxu0 %v4195
    %5187 = vmatpush1.bf16.msra.mxu0 %v4194
    %5188 = vmatprep.subr.bf16.mxu0 %v4202
    %5189 = vmatpush1.bf16.msra.mxu0 %v4201
    %5190 = vmatprep.subr.bf16.mxu0 %v4209
    %5191 = vmatpush1.bf16.msra.mxu0 %v4208
    %5192 = vmatprep.subr.bf16.mxu0 %v4216
    %5193 = vmatpush1.bf16.msra.mxu0 %v4215
    %5194 = vmatprep.subr.bf16.mxu0 %v4223
    %5195 = vmatpush1.bf16.msra.mxu0 %v4222
    %5196 = vmatprep.subr.bf16.mxu0 %v4230
    %5197 = vmatpush1.bf16.msra.mxu0 %v4229
    %5198 = vmatprep.subr.bf16.mxu0 %v4237
    %5199 = vmatpush1.bf16.msra.mxu0 %v4236
    %5200 = vmatprep.mubr.bf16.mxu0 %v2294
    %5201 = vmatmul.mubr.bf16.gmra.mrb[0].mxu0 %v2293
    %v5202 = vpop.f32.mrb[0].mxu0
    %v5203 = vadd.f32 %v5162, %v5202
    %v5204 = vpop.f32.mrb[0].mxu0
    %v5205 = vadd.f32 %v5164, %v5204
    %v5206 = vpop.f32.mrb[0].mxu0
    %v5207 = vpop.f32.mrb[0].mxu0
    %5208 = vdwg.mxu0
    %5209 = vmatprep.subr.bf16.mxu0 %v4244
    %5210 = vmatpush1.bf16.msra.mxu0 %v4243
    %5211 = vmatprep.subr.bf16.mxu0 %v4251
    %5212 = vmatpush1.bf16.msra.mxu0 %v4250
    %5213 = vmatprep.subr.bf16.mxu0 %v4258
    %5214 = vmatpush1.bf16.msra.mxu0 %v4257
    %5215 = vmatprep.subr.bf16.mxu0 %v4265
    %5216 = vmatpush1.bf16.msra.mxu0 %v4264
    %5217 = vmatprep.subr.bf16.mxu0 %v4272
    %5218 = vmatpush1.bf16.msra.mxu0 %v4271
    %5219 = vmatprep.subr.bf16.mxu0 %v4279
    %5220 = vmatpush1.bf16.msra.mxu0 %v4278
    %5221 = vmatprep.subr.bf16.mxu0 %v4286
    %5222 = vmatpush1.bf16.msra.mxu0 %v4285
    %5223 = vmatprep.subr.bf16.mxu0 %v4293
    %5224 = vmatpush1.bf16.msra.mxu0 %v4292
    %5225 = vmatprep.subr.bf16.mxu0 %v4300
    %5226 = vmatpush1.bf16.msra.mxu0 %v4299
    %5227 = vmatprep.subr.bf16.mxu0 %v4307
    %5228 = vmatpush1.bf16.msra.mxu0 %v4306
    %5229 = vmatprep.subr.bf16.mxu0 %v4314
    %5230 = vmatpush1.bf16.msra.mxu0 %v4313
    %5231 = vmatprep.subr.bf16.mxu0 %v4321
    %5232 = vmatpush1.bf16.msra.mxu0 %v4320
    %5233 = vmatprep.subr.bf16.mxu0 %v4328
    %5234 = vmatpush1.bf16.msra.mxu0 %v4327
    %5235 = vmatprep.subr.bf16.mxu0 %v4335
    %5236 = vmatpush1.bf16.msra.mxu0 %v4334
    %5237 = vmatprep.subr.bf16.mxu0 %v4342
    %5238 = vmatpush1.bf16.msra.mxu0 %v4341
    %5239 = vmatprep.subr.bf16.mxu0 %v4349
    %5240 = vmatpush1.bf16.msra.mxu0 %v4348
    %5241 = vmatprep.mubr.bf16.mxu0 %v2296
    %5242 = vmatmul.mubr.bf16.gmra.mrb[0].mxu0 %v2295
    %v5243 = vpop.f32.mrb[0].mxu0
    %v5244 = vadd.f32 %v5203, %v5243
    %v5245 = vpop.f32.mrb[0].mxu0
    %v5246 = vadd.f32 %v5205, %v5245
    %v5247 = vpop.f32.mrb[0].mxu0
    %v5248 = vpop.f32.mrb[0].mxu0
    %5249 = vdwg.mxu0
    %5250 = vmatprep.subr.bf16.mxu0 %v4356
    %5251 = vmatpush1.bf16.msra.mxu0 %v4355
    %5252 = vmatprep.subr.bf16.mxu0 %v4363
    %5253 = vmatpush1.bf16.msra.mxu0 %v4362
    %5254 = vmatprep.subr.bf16.mxu0 %v4370
    %5255 = vmatpush1.bf16.msra.mxu0 %v4369
    %5256 = vmatprep.subr.bf16.mxu0 %v4377
    %5257 = vmatpush1.bf16.msra.mxu0 %v4376
    %5258 = vmatprep.subr.bf16.mxu0 %v4384
    %5259 = vmatpush1.bf16.msra.mxu0 %v4383
    %5260 = vmatprep.subr.bf16.mxu0 %v4391
    %5261 = vmatpush1.bf16.msra.mxu0 %v4390
    %5262 = vmatprep.subr.bf16.mxu0 %v4398
    %5263 = vmatpush1.bf16.msra.mxu0 %v4397
    %5264 = vmatprep.subr.bf16.mxu0 %v4405
    %5265 = vmatpush1.bf16.msra.mxu0 %v4404
    %5266 = vmatprep.subr.bf16.mxu0 0
    %5267 = vmatpush1.bf16.msra.mxu0 0
    %5268 = vmatprep.subr.bf16.mxu0 0
    %5269 = vmatpush1.bf16.msra.mxu0 0
    %5270 = vmatprep.subr.bf16.mxu0 0
    %5271 = vmatpush1.bf16.msra.mxu0 0
    %5272 = vmatprep.subr.bf16.mxu0 0
    %5273 = vmatpush1.bf16.msra.mxu0 0
    %5274 = vmatprep.subr.bf16.mxu0 0
    %5275 = vmatpush1.bf16.msra.mxu0 0
    %5276 = vmatprep.subr.bf16.mxu0 0
    %5277 = vmatpush1.bf16.msra.mxu0 0
    %5278 = vmatprep.subr.bf16.mxu0 0
    %5279 = vmatpush1.bf16.msra.mxu0 0
    %5280 = vmatprep.subr.bf16.mxu0 0
    %5281 = vmatpush1.bf16.msra.mxu0 0
    %5282 = vmatprep.mubr.bf16.mxu0 0
    %5283 = vmatmul.mubr.bf16.gmra.mrb[0].mxu0 %v2297
    %v5284 = vpop.f32.mrb[0].mxu0
    %v5285 = vadd.f32 %v5244, %v5284
    %v5286 = vpop.f32.mrb[0].mxu0
    %v5287 = vadd.f32 %v5246, %v5286
    %v5288 = vpop.f32.mrb[0].mxu0
    %v5289 = vpop.f32.mrb[0].mxu0
    %5290 = vdwg.mxu0
    %5291 = vmatprep.subr.bf16.mxu0 0
    %5292 = vmatpush1.bf16.msra.mxu0 %v4021
    %5293 = vmatprep.subr.bf16.mxu0 0
    %5294 = vmatpush1.bf16.msra.mxu0 %v4028
    %5295 = vmatprep.subr.bf16.mxu0 0
    %5296 = vmatpush1.bf16.msra.mxu0 %v4035
    %5297 = vmatprep.subr.bf16.mxu0 0
    %5298 = vmatpush1.bf16.msra.mxu0 %v4042
    %5299 = vmatprep.subr.bf16.mxu0 0
    %5300 = vmatpush1.bf16.msra.mxu0 %v4049
    %5301 = vmatprep.subr.bf16.mxu0 0
    %5302 = vmatpush1.bf16.msra.mxu0 %v4056
    %5303 = vmatprep.subr.bf16.mxu0 0
    %5304 = vmatpush1.bf16.msra.mxu0 %v4063
    %5305 = vmatprep.subr.bf16.mxu0 0
    %5306 = vmatpush1.bf16.msra.mxu0 %v4070
    %5307 = vmatprep.subr.bf16.mxu0 0
    %5308 = vmatpush1.bf16.msra.mxu0 %v4077
    %5309 = vmatprep.subr.bf16.mxu0 0
    %5310 = vmatpush1.bf16.msra.mxu0 %v4084
    %5311 = vmatprep.subr.bf16.mxu0 0
    %5312 = vmatpush1.bf16.msra.mxu0 %v4091
    %5313 = vmatprep.subr.bf16.mxu0 0
    %5314 = vmatpush1.bf16.msra.mxu0 %v4098
    %5315 = vmatprep.subr.bf16.mxu0 0
    %5316 = vmatpush1.bf16.msra.mxu0 %v4105
    %5317 = vmatprep.subr.bf16.mxu0 0
    %5318 = vmatpush1.bf16.msra.mxu0 %v4112
    %5319 = vmatprep.subr.bf16.mxu0 0
    %5320 = vmatpush1.bf16.msra.mxu0 %v4119
    %5321 = vmatprep.subr.bf16.mxu0 0
    %5322 = vmatpush1.bf16.msra.mxu0 %v4126
    %5323 = vmatprep.mubr.bf16.mxu0 %v2292
    %5324 = vmatmul.mubr.bf16.gmra.mrb[0].mxu0 %v2291
    %v5325 = vpop.f32.mrb[0].mxu0
    %v5326 = vadd.f32 %v2775, %v5325
    %v5327 = vpop.f32.mrb[0].mxu0
    %v5328 = vpop.f32.mrb[0].mxu0
    %v5329 = vpop.f32.mrb[0].mxu0
    %5330 = vdwg.mxu0
    %5331 = vmatprep.subr.bf16.mxu0 0
    %5332 = vmatpush1.bf16.msra.mxu0 %v4133
    %5333 = vmatprep.subr.bf16.mxu0 0
    %5334 = vmatpush1.bf16.msra.mxu0 %v4140
    %5335 = vmatprep.subr.bf16.mxu0 0
    %5336 = vmatpush1.bf16.msra.mxu0 %v4147
    %5337 = vmatprep.subr.bf16.mxu0 0
    %5338 = vmatpush1.bf16.msra.mxu0 %v4154
    %5339 = vmatprep.subr.bf16.mxu0 0
    %5340 = vmatpush1.bf16.msra.mxu0 %v4161
    %5341 = vmatprep.subr.bf16.mxu0 0
    %5342 = vmatpush1.bf16.msra.mxu0 %v4168
    %5343 = vmatprep.subr.bf16.mxu0 0
    %5344 = vmatpush1.bf16.msra.mxu0 %v4175
    %5345 = vmatprep.subr.bf16.mxu0 0
    %5346 = vmatpush1.bf16.msra.mxu0 %v4182
    %5347 = vmatprep.subr.bf16.mxu0 0
    %5348 = vmatpush1.bf16.msra.mxu0 %v4189
    %5349 = vmatprep.subr.bf16.mxu0 0
    %5350 = vmatpush1.bf16.msra.mxu0 %v4196
    %5351 = vmatprep.subr.bf16.mxu0 0
    %5352 = vmatpush1.bf16.msra.mxu0 %v4203
    %5353 = vmatprep.subr.bf16.mxu0 0
    %5354 = vmatpush1.bf16.msra.mxu0 %v4210
    %5355 = vmatprep.subr.bf16.mxu0 0
    %5356 = vmatpush1.bf16.msra.mxu0 %v4217
    %5357 = vmatprep.subr.bf16.mxu0 0
    %5358 = vmatpush1.bf16.msra.mxu0 %v4224
    %5359 = vmatprep.subr.bf16.mxu0 0
    %5360 = vmatpush1.bf16.msra.mxu0 %v4231
    %5361 = vmatprep.subr.bf16.mxu0 0
    %5362 = vmatpush1.bf16.msra.mxu0 %v4238
    %5363 = vmatprep.mubr.bf16.mxu0 %v2294
    %5364 = vmatmul.mubr.bf16.gmra.mrb[0].mxu0 %v2293
    %v5365 = vpop.f32.mrb[0].mxu0
    %v5366 = vadd.f32 %v5326, %v5365
    %v5367 = vpop.f32.mrb[0].mxu0
    %v5368 = vpop.f32.mrb[0].mxu0
    %v5369 = vpop.f32.mrb[0].mxu0
    %5370 = vdwg.mxu0
    %5371 = vmatprep.subr.bf16.mxu0 0
    %5372 = vmatpush1.bf16.msra.mxu0 %v4245
    %5373 = vmatprep.subr.bf16.mxu0 0
    %5374 = vmatpush1.bf16.msra.mxu0 %v4252
    %5375 = vmatprep.subr.bf16.mxu0 0
    %5376 = vmatpush1.bf16.msra.mxu0 %v4259
    %5377 = vmatprep.subr.bf16.mxu0 0
    %5378 = vmatpush1.bf16.msra.mxu0 %v4266
    %5379 = vmatprep.subr.bf16.mxu0 0
    %5380 = vmatpush1.bf16.msra.mxu0 %v4273
    %5381 = vmatprep.subr.bf16.mxu0 0
    %5382 = vmatpush1.bf16.msra.mxu0 %v4280
    %5383 = vmatprep.subr.bf16.mxu0 0
    %5384 = vmatpush1.bf16.msra.mxu0 %v4287
    %5385 = vmatprep.subr.bf16.mxu0 0
    %5386 = vmatpush1.bf16.msra.mxu0 %v4294
    %5387 = vmatprep.subr.bf16.mxu0 0
    %5388 = vmatpush1.bf16.msra.mxu0 %v4301
    %5389 = vmatprep.subr.bf16.mxu0 0
    %5390 = vmatpush1.bf16.msra.mxu0 %v4308
    %5391 = vmatprep.subr.bf16.mxu0 0
    %5392 = vmatpush1.bf16.msra.mxu0 %v4315
    %5393 = vmatprep.subr.bf16.mxu0 0
    %5394 = vmatpush1.bf16.msra.mxu0 %v4322
    %5395 = vmatprep.subr.bf16.mxu0 0
    %5396 = vmatpush1.bf16.msra.mxu0 %v4329
    %5397 = vmatprep.subr.bf16.mxu0 0
    %5398 = vmatpush1.bf16.msra.mxu0 %v4336
    %5399 = vmatprep.subr.bf16.mxu0 0
    %5400 = vmatpush1.bf16.msra.mxu0 %v4343
    %5401 = vmatprep.subr.bf16.mxu0 0
    %5402 = vmatpush1.bf16.msra.mxu0 %v4350
    %5403 = vmatprep.mubr.bf16.mxu0 %v2296
    %5404 = vmatmul.mubr.bf16.gmra.mrb[0].mxu0 %v2295
    %v5405 = vpop.f32.mrb[0].mxu0
    %v5406 = vadd.f32 %v5366, %v5405
    %v5407 = vpop.f32.mrb[0].mxu0
    %v5408 = vpop.f32.mrb[0].mxu0
    %v5409 = vpop.f32.mrb[0].mxu0
    %5410 = vdwg.mxu0
    %5411 = vmatprep.subr.bf16.mxu0 0
    %5412 = vmatpush1.bf16.msra.mxu0 %v4357
    %5413 = vmatprep.subr.bf16.mxu0 0
    %5414 = vmatpush1.bf16.msra.mxu0 %v4364
    %5415 = vmatprep.subr.bf16.mxu0 0
    %5416 = vmatpush1.bf16.msra.mxu0 %v4371
    %5417 = vmatprep.subr.bf16.mxu0 0
    %5418 = vmatpush1.bf16.msra.mxu0 %v4378
    %5419 = vmatprep.subr.bf16.mxu0 0
    %5420 = vmatpush1.bf16.msra.mxu0 %v4385
    %5421 = vmatprep.subr.bf16.mxu0 0
    %5422 = vmatpush1.bf16.msra.mxu0 %v4392
    %5423 = vmatprep.subr.bf16.mxu0 0
    %5424 = vmatpush1.bf16.msra.mxu0 %v4399
    %5425 = vmatprep.subr.bf16.mxu0 0
    %5426 = vmatpush1.bf16.msra.mxu0 %v4406
    %5427 = vmatprep.subr.bf16.mxu0 0
    %5428 = vmatpush1.bf16.msra.mxu0 0
    %5429 = vmatprep.subr.bf16.mxu0 0
    %5430 = vmatpush1.bf16.msra.mxu0 0
    %5431 = vmatprep.subr.bf16.mxu0 0
    %5432 = vmatpush1.bf16.msra.mxu0 0
    %5433 = vmatprep.subr.bf16.mxu0 0
    %5434 = vmatpush1.bf16.msra.mxu0 0
    %5435 = vmatprep.subr.bf16.mxu0 0
    %5436 = vmatpush1.bf16.msra.mxu0 0
    %5437 = vmatprep.subr.bf16.mxu0 0
    %5438 = vmatpush1.bf16.msra.mxu0 0
    %5439 = vmatprep.subr.bf16.mxu0 0
    %5440 = vmatpush1.bf16.msra.mxu0 0
    %5441 = vmatprep.subr.bf16.mxu0 0
    %5442 = vmatpush1.bf16.msra.mxu0 0
    %5443 = vmatprep.mubr.bf16.mxu0 0
    %5444 = vmatmul.mubr.bf16.gmra.mrb[0].mxu0 %v2297
    %v5445 = vpop.f32.mrb[0].mxu0
    %v5446 = vadd.f32 %v5406, %v5445
    %v5447 = vpop.f32.mrb[0].mxu0
    %v5448 = vpop.f32.mrb[0].mxu0
    %v5449 = vpop.f32.mrb[0].mxu0
    %5450 = vdwg.mxu0
    %v5451 = vsub.f32 0.0, %v4957
    %v5452 = vsub.f32 0.0, %v4959
    %v5453 = vsub.f32 0.0, %v5121
    %v5454 = vsub.f32 0.0, %v5123
    %v5455 = vsub.f32 0.0, %v5285
    %v5456 = vsub.f32 0.0, %v5287
    %v5457 = vsub.f32 0.0, %v5446
    %v5458 = vmul.f32 %v5451, 1.442695
    %v5459 = vpow.pop %v5458
    %v5460 = vmul.f32 %v5452, 1.442695
    %v5461 = vpow.pop %v5460
    %v5462 = vmul.f32 %v5453, 1.442695
    %v5463 = vpow.pop %v5462
    %v5464 = vmul.f32 %v5454, 1.442695
    %v5465 = vpow.pop %v5464
    %v5466 = vmul.f32 %v5455, 1.442695
    %v5467 = vpow.pop %v5466
    %v5468 = vmul.f32 %v5456, 1.442695
    %v5469 = vpow.pop %v5468
    %v5470 = vmul.f32 %v5457, 1.442695
    %v5471 = vpow.pop %v5470
    %v5472 = vadd.f32 %v5459, 1.0
    %v5473 = vadd.f32 %v5461, 1.0
    %v5474 = vadd.f32 %v5463, 1.0
    %v5475 = vadd.f32 %v5465, 1.0
    %v5476 = vadd.f32 %v5467, 1.0
    %v5477 = vadd.f32 %v5469, 1.0
    %v5478 = vadd.f32 %v5471, 1.0
    %v5479 = vrcp.pop %v5472
    %v5480 = vrcp.pop %v5473
    %v5481 = vrcp.pop %v5474
    %v5482 = vrcp.pop %v5475
    %v5483 = vrcp.pop %v5476
    %v5484 = vrcp.pop %v5477
    %v5485 = vrcp.pop %v5478
    %5486 = vst [vmem:[#allocation17] sm:$0xff] %v5479
    %5487 = vst [vmem:[#allocation17 + $0x8] sm:$0xff] %v5480
    %5488 = vst [vmem:[#allocation17 + $0x10] sm:$0xff] %v5481
    %5489 = vst [vmem:[#allocation17 + $0x18] sm:$0xff] %v5482
    %5490 = vst [vmem:[#allocation17 + $0x20] sm:$0xff] %v5483
    %5491 = vst [vmem:[#allocation17 + $0x28] sm:$0xff] %v5484
    %5492 = vst [vmem:[#allocation17 + $0x30] sm:$0xff] %v5485
    // Predicated region
    $region74: #{tpu_custom_call.1} parent=1 // pred_check
      _
    $region75: #{tpu_custom_call.1} parent=1 // pred_check_branch
      %5494 = sbr.rel (0) target = $region77
    $region76: #{tpu_custom_call.1} parent=1 // pred_region
      %s5496 = ssub.s32 896, 896
      %5497 = vsyncadd [#allocation4], %s5496
      %s5499 = sshll.u32 [#allocation17], 4
      %s5500 = int_to_ptr.vmem [resolvable:$true] %s5499
      %5502 = dma.vmem_to_hbm [thread:$0]  %s5500, 896, %s9, [#allocation4]
    $region77: #{tpu_custom_call.1} parent=1 // pred_fallthru
      _
    // Predicated region
    $region78: #{tpu_custom_call.1} parent=1 // pred_check
      _
    $region79: #{tpu_custom_call.1} parent=1 // pred_check_branch
      %5504 = sbr.rel (0) target = $region81
    $region80: #{tpu_custom_call.1} parent=1 // pred_region
      %5505 = dma.done [#allocation4], 896
    $region81: #{tpu_custom_call.1} parent=1 // pred_fallthru
      _
    %5506 = vsyncpa [#allocation3], 1
    %5507 = vsyncpa [#allocation6], 1
    %5508 = vsyncpa [#allocation9], 1
    %5509 = vsyncpa [#allocation12], 1
    %5510 = vsyncpa [#allocation15], 1
    %5511 = vsyncpa [#allocation4], 1

</llo_original>
